<compile_context>
chip_gen: v7x
topology: tpu7x:2x2x1
jax: 0.10.0
libtpu: 0.0.40
codegen_flags: <defaults>
</compile_context>

<pallas_src>
import functools
import math

import jax
import jax.numpy as jnp
from jax import lax
from jax.experimental import pallas as pl
from jax.experimental.pallas import tpu as pltpu


def _round_up(x: int, mult: int) -> int:
    return (x + mult - 1) // mult * mult


def _make_circle_loss_kernel(m: float, gamma: float, tm: int, tn: int,
                             n_valid: int, needs_pad: bool):
    m = float(m)
    gamma = float(gamma)
    n_slabs = tm // 8
    neg_inf = float("-inf")

    def kernel(featn_ref, featt_ref, labc_ref, labr_ref,
               mp_out, sp_out, mn_out, sn_out,
               mp_ref, sp_ref, mn_ref, sn_ref):
        i = pl.program_id(0)      # row block ("parallel")
        j = pl.program_id(1)      # column block ("arbitrary", innermost)

        # ---- reset the per-row-block online-LSE state at the first column ----
        @pl.when(j == 0)
        def _init():
            ninf = jnp.full((8, tn), neg_inf, jnp.float32)
            zero = jnp.zeros((8, tn), jnp.float32)
            mp_ref[...] = ninf
            mn_ref[...] = ninf
            sp_ref[...] = zero
            sn_ref[...] = zero

        # ---- skip tiles entirely at/below the diagonal (all triu-masked) ----
        has_work = (j * tn + (tn - 1)) > (i * tm)
        if needs_pad:
            has_work = jnp.logical_and(has_work, (i * tm) < n_valid)
            has_work = jnp.logical_and(has_work, (j * tn) < n_valid)

        @pl.when(has_work)
        def _compute():
            # (TM, TN) similarity tile on the MXU: natural (TM,D) @ (D,TN).
            sim = lax.dot_general(
                featn_ref[...], featt_ref[...],
                dimension_numbers=(((1,), (0,)), ((), ())),
                preferred_element_type=jnp.float32)

            labc = labc_ref[...]            # (TM, 1) int32
            labr = labr_ref[...]            # (1, TN) int32

            # Per-slab (8, TN) index helpers; generated once per grid step.
            c_iota = lax.broadcasted_iota(jnp.int32, (8, tn), 1)
            s_iota = lax.broadcasted_iota(jnp.int32, (8, tn), 0)
            diff = c_iota - s_iota          # col - (row within slab)
            base = i * tm - j * tn
            if needs_pad:
                col_ok = (c_iota + j * tn) < n_valid

            mp_old = mp_ref[...]
            mn_old = mn_ref[...]
            m_p = mp_old
            m_n = mn_old

            # Pass 1 over 8-row slabs: logits + masks, fold per-position maxes
            # with pure elementwise max (VPU only, no cross-lane reductions).
            logit_l, eq_l, msk_l = [], [], []
            for k in range(n_slabs):
                r0 = k * 8
                s_k = sim[r0:r0 + 8, :]                        # (8, TN) f32
                eq_k = labc[r0:r0 + 8, :] == labr              # (8, TN) bool
                msk_k = diff > (base + r0)                     # triu(diagonal=1)
                if needs_pad:
                    row_ok = (s_iota + (i * tm + r0)) < n_valid
                    msk_k = jnp.logical_and(msk_k,
                                            jnp.logical_and(row_ok, col_ok))
                ap = jnp.maximum((1.0 + m) - s_k, 0.0)
                an = jnp.maximum(s_k + m, 0.0)
                logit_p = (-gamma) * ap * (s_k - (1.0 - m))
                logit_n = gamma * an * (s_k - m)
                # pos/neg streams are disjoint -> select once, exp once (pass 2)
                logit_k = jnp.where(eq_k, logit_p, logit_n)
                m_p = jnp.maximum(
                    m_p, jnp.where(jnp.logical_and(msk_k, eq_k),
                                   logit_k, neg_inf))
                m_n = jnp.maximum(
                    m_n, jnp.where(jnp.logical_and(msk_k, jnp.logical_not(eq_k)),
                                   logit_k, neg_inf))
                logit_l.append(logit_k)
                eq_l.append(eq_k)
                msk_l.append(msk_k)

            # Finite fallback so empty streams never produce -inf - -inf NaN.
            mp_safe = jnp.where(m_p > neg_inf, m_p, 0.0)
            mn_safe = jnp.where(m_n > neg_inf, m_n, 0.0)

            # Rescale the running sums onto the new maxes (empty positions: 0).
            acc_p = sp_ref[...] * jnp.exp(mp_old - mp_safe)
            acc_n = sn_ref[...] * jnp.exp(mn_old - mn_safe)

            # Pass 2: ONE exp per tile element, routed to both masked sums.
            for k in range(n_slabs):
                shift_k = jnp.where(eq_l[k], mp_safe, mn_safe)
                e_k = jnp.where(msk_l[k],
                                jnp.exp(logit_l[k] - shift_k), 0.0)
                e_p = jnp.where(eq_l[k], e_k, 0.0)
                acc_p = acc_p + e_p
                acc_n = acc_n + (e_k - e_p)

            sp_ref[...] = acc_p
            sn_ref[...] = acc_n
            mp_ref[...] = m_p
            mn_ref[...] = m_n

        # ---- emit this row block's partial (max, sum) state after last column ----
        @pl.when(j == pl.num_programs(1) - 1)
        def _emit():
            mp_out[...] = mp_ref[...]
            sp_out[...] = sp_ref[...]
            mn_out[...] = mn_ref[...]
            sn_out[...] = sn_ref[...]

    return kernel


@functools.partial(
    jax.jit,
    static_argnames=("m", "gamma", "block_rows", "block_cols", "use_bf16_matmul"))
def circle_loss_pallas(feat: jax.Array, label: jax.Array, m: float, gamma: float,
                       *, block_rows: int = 128, block_cols: int | None = None,
                       use_bf16_matmul: bool = False) -> jax.Array:
    """feat: (N, D), label: (N,) int — returns the scalar CircleLoss."""
    n, d = feat.shape
    tm = int(block_rows)                       # sweep 256 on v6e/v5e (128 MiB VMEM)
    assert tm % 8 == 0
    n_pad = _round_up(n, math.lcm(tm, 128))
    if block_cols is None:
        tn = 128
        for cand in (512, 256):
            if n_pad % cand == 0:
                tn = cand
                break
    else:
        tn = int(block_cols)
        assert tn % 128 == 0 and n_pad % tn == 0
    needs_pad = (n_pad != n)

    # Normalization happens here (fused by XLA); the kernel only consumes it.
    feat = feat.astype(jnp.float32)
    featn = feat / (jnp.linalg.norm(feat, axis=-1, keepdims=True) + 1e-12)
    if needs_pad:
        featn = jnp.pad(featn, ((0, n_pad - n), (0, 0)))
    matmul_dtype = jnp.bfloat16 if use_bf16_matmul else jnp.float32
    featn_t = featn.T.astype(matmul_dtype)     # (D, N): lane dim = N (dense)
    featn = featn.astype(matmul_dtype)         # (N, D)

    label = label.astype(jnp.int32).reshape(n)
    if needs_pad:
        label = jnp.pad(label, (0, n_pad - n), constant_values=-1)
    label_col = label.reshape(n_pad, 1)
    label_row = label.reshape(1, n_pad)

    r_blocks = n_pad // tm
    c_blocks = n_pad // tn
    grid = (r_blocks, c_blocks)

    kernel = _make_circle_loss_kernel(m, gamma, tm, tn, n, needs_pad)

    # Generation-aware VMEM budget: live (TM,TN) temporaries + double-buffered
    # (lane/sublane padded) input blocks + accumulator state, capped well below
    # v7x's 64 MiB/TensorCore.
    itemsize = 2 if use_bf16_matmul else 4
    est = 12 * tm * tn * 4                                   # live tile temporaries
    est += 2 * tm * _round_up(d, 128) * itemsize             # LHS block (x2 buffers)
    est += 2 * _round_up(d, 8) * tn * itemsize               # RHS block (x2 buffers)
    est += (4 + 8) * 8 * tn * 4                              # scratch + out blocks
    est += 2 * 1024 * 1024                                   # compiler headroom
    try:
        vmem_cap = int(pltpu.get_tpu_info().vmem_capacity_bytes)
    except Exception:
        vmem_cap = 64 * 1024 * 1024
    vmem_limit = int(min(max(est, 24 * 1024 * 1024),
                         (3 * vmem_cap) // 4, 48 * 1024 * 1024))

    acc_spec = pl.BlockSpec((8, tn), lambda i, j: (i, 0))
    out_shape = tuple(jax.ShapeDtypeStruct((r_blocks * 8, tn), jnp.float32)
                      for _ in range(4))

    mp, sp, mn, sn = pl.pallas_call(
        kernel,
        out_shape=out_shape,
        grid=grid,
        in_specs=[
            pl.BlockSpec((tm, d), lambda i, j: (i, 0)),   # normalized feats (rows)
            pl.BlockSpec((d, tn), lambda i, j: (0, j)),   # normalized feats^T (cols)
            pl.BlockSpec((tm, 1), lambda i, j: (i, 0)),   # labels, column vector
            pl.BlockSpec((1, tn), lambda i, j: (0, j)),   # labels, row vector
        ],
        out_specs=(acc_spec, acc_spec, acc_spec, acc_spec),
        scratch_shapes=[pltpu.VMEM((8, tn), jnp.float32) for _ in range(4)],
        compiler_params=pltpu.CompilerParams(
            dimension_semantics=("parallel", "arbitrary"),
            vmem_limit_bytes=vmem_limit,
        ),
    )(featn, featn_t, label_col, label_row)

    # Combine per-row-block partial (max, sum) pairs into the two logsumexps
    # (done here so the row-block axis can run in parallel on both v7x cores),
    # then softplus.  Empty streams give lse = -inf -> softplus(-inf) = 0.
    def _lse(m_parts, s_parts):
        gm = jnp.max(m_parts)
        gm_safe = jnp.where(gm > -jnp.inf, gm, 0.0)
        total = jnp.sum(s_parts * jnp.exp(m_parts - gm_safe))
        return jnp.where(total > 0.0, gm_safe + jnp.log(total), -jnp.inf)

    z = _lse(mn, sn) + _lse(mp, sp)
    return jnp.maximum(z, 0.0) + jnp.log1p(jnp.exp(-jnp.abs(z)))


def circle_loss_ref(feat, label, m, gamma):
    """Pure-JAX reference for sanity checking."""
    feat = feat.astype(jnp.float32)
    feat = feat / (jnp.linalg.norm(feat, axis=-1, keepdims=True) + 1e-12)
    sim = jnp.matmul(feat, feat.T, precision=lax.Precision.HIGHEST)
    eq = label[:, None] == label[None, :]
    n = feat.shape[0]
    triu = jnp.triu(jnp.ones((n, n), dtype=bool), k=1)
    pos = eq & triu
    neg = (~eq) & triu
    ap = jnp.maximum(-sim + 1.0 + m, 0.0)
    an = jnp.maximum(sim + m, 0.0)
    logit_p = jnp.where(pos, -ap * (sim - (1.0 - m)) * gamma, -jnp.inf)
    logit_n = jnp.where(neg, an * (sim - m) * gamma, -jnp.inf)
    z = jax.scipy.special.logsumexp(logit_n) + jax.scipy.special.logsumexp(logit_p)
    return jnp.maximum(z, 0.0) + jnp.log1p(jnp.exp(-jnp.abs(z)))


if __name__ == "__main__":
    m_, gamma_ = 0.25, 64.0
    key = jax.random.PRNGKey(0)
    k1, k2, k3, k4, k5, k6 = jax.random.split(key, 6)

    # Case 1: divisible N, single column block (N=256, D=32).
    feat1 = jax.random.normal(k1, (256, 32), dtype=jnp.float32)
    lab1 = jax.random.randint(k2, (256,), 0, 8, dtype=jnp.int32)
    out1 = jax.block_until_ready(circle_loss_pallas(feat1, lab1, m_, gamma_))
    ref1 = jax.block_until_ready(circle_loss_ref(feat1, lab1, m_, gamma_))
    assert jnp.allclose(out1, ref1, rtol=1e-3, atol=1e-3), (out1, ref1)

    # Case 2: multiple column blocks + lower-triangular tile skipping (N=384, D=48).
    feat2 = jax.random.normal(k3, (384, 48), dtype=jnp.float32)
    lab2 = jax.random.randint(k4, (384,), 0, 16, dtype=jnp.int32)
    out2 = jax.block_until_ready(circle_loss_pallas(feat2, lab2, m_, gamma_))
    ref2 = jax.block_until_ready(circle_loss_ref(feat2, lab2, m_, gamma_))
    assert jnp.allclose(out2, ref2, rtol=1e-3, atol=1e-3), (out2, ref2)

    # Case 3: N not divisible by the tile sizes -> padded rows + validity mask.
    feat3 = jax.random.normal(k5, (200, 32), dtype=jnp.float32)
    lab3 = jax.random.randint(k6, (200,), 0, 8, dtype=jnp.int32)
    out3 = jax.block_until_ready(circle_loss_pallas(feat3, lab3, m_, gamma_))
    ref3 = jax.block_until_ready(circle_loss_ref(feat3, lab3, m_, gamma_))
    assert jnp.allclose(out3, ref3, rtol=1e-3, atol=1e-3), (out3, ref3)

    # Case 4: all labels unique -> empty positive stream (loss must be 0, finite).
    feat4 = feat3[:64]
    lab4 = jnp.arange(64, dtype=jnp.int32)
    out4 = jax.block_until_ready(circle_loss_pallas(feat4, lab4, m_, gamma_))
    ref4 = jax.block_until_ready(circle_loss_ref(feat4, lab4, m_, gamma_))
    assert bool(jnp.isfinite(out4)), out4
    assert jnp.allclose(out4, ref4, rtol=1e-3, atol=1e-3), (out4, ref4)

    # Case 5: opt-in bf16 feature storage for the MXU (looser tolerance: gamma
    # amplifies the bf16 sim error inside exp).
    out5 = jax.block_until_ready(
        circle_loss_pallas(feat1, lab1, m_, gamma_, use_bf16_matmul=True))
    assert jnp.allclose(out5, ref1, rtol=5e-2, atol=5e-1), (out5, ref1)

    print("KERNEL_OK")
</pallas_src>

<mosaic_0001>
module attributes {stable_mosaic.version = 11 : i64} {
  func.func @kernel(%arg0: i32, %arg1: i32, %arg2: memref<128x32xf32, #tpu.memory_space<vmem>>, %arg3: memref<32x256xf32, #tpu.memory_space<vmem>>, %arg4: memref<128x1xi32, #tpu.memory_space<vmem>>, %arg5: memref<1x256xi32, #tpu.memory_space<vmem>>, %arg6: memref<8x256xf32, #tpu.memory_space<vmem>>, %arg7: memref<8x256xf32, #tpu.memory_space<vmem>>, %arg8: memref<8x256xf32, #tpu.memory_space<vmem>>, %arg9: memref<8x256xf32, #tpu.memory_space<vmem>>, %arg10: memref<8x256xf32, #tpu.memory_space<vmem>>, %arg11: memref<8x256xf32, #tpu.memory_space<vmem>>, %arg12: memref<8x256xf32, #tpu.memory_space<vmem>>, %arg13: memref<8x256xf32, #tpu.memory_space<vmem>>) attributes {dimension_semantics = [#tpu.dimension_semantics<parallel>, #tpu.dimension_semantics<arbitrary>], iteration_bounds = array<i64: 2, 1>, scalar_prefetch = 0 : i64, scratch_operands = 4 : i64, tpu.core_type = #tpu.core_type<tc>, window_params = [{transform_indices = @transform_0, window_bounds = array<i64: 128, 32>}, {transform_indices = @transform_1, window_bounds = array<i64: 32, 256>}, {transform_indices = @transform_2, window_bounds = array<i64: 128, 1>}, {transform_indices = @transform_3, window_bounds = array<i64: 1, 256>}, {transform_indices = @transform_4, window_bounds = array<i64: 8, 256>}, {transform_indices = @transform_5, window_bounds = array<i64: 8, 256>}, {transform_indices = @transform_6, window_bounds = array<i64: 8, 256>}, {transform_indices = @transform_7, window_bounds = array<i64: 8, 256>}]} {
    %c0_i32 = arith.constant 0 : i32
    %0 = arith.cmpi eq, %arg1, %c0_i32 : i32
    %1 = arith.extui %0 : i1 to i32
    %c0_i32_0 = arith.constant 0 : i32
    %2 = arith.cmpi ne, %1, %c0_i32_0 : i32
    scf.if %2 {
      %cst = arith.constant 0xFF800000 : f32
      %12 = vector.broadcast %cst : f32 to vector<8x256xf32>
      %cst_4 = arith.constant 0.000000e+00 : f32
      %13 = vector.broadcast %cst_4 : f32 to vector<8x256xf32>
      %c0 = arith.constant 0 : index
      %c0_5 = arith.constant 0 : index
      %14 = vector.load %arg10[%c0, %c0_5] : memref<8x256xf32, #tpu.memory_space<vmem>>, vector<8x256xf32>
      tpu.vector_store %arg10[%c0, %c0_5], %12 {strides = array<i32>} : memref<8x256xf32, #tpu.memory_space<vmem>>, vector<8x256xf32>,
      %c0_6 = arith.constant 0 : index
      %c0_7 = arith.constant 0 : index
      %15 = vector.load %arg12[%c0_6, %c0_7] : memref<8x256xf32, #tpu.memory_space<vmem>>, vector<8x256xf32>
      tpu.vector_store %arg12[%c0_6, %c0_7], %12 {strides = array<i32>} : memref<8x256xf32, #tpu.memory_space<vmem>>, vector<8x256xf32>,
      %c0_8 = arith.constant 0 : index
      %c0_9 = arith.constant 0 : index
      %16 = vector.load %arg11[%c0_8, %c0_9] : memref<8x256xf32, #tpu.memory_space<vmem>>, vector<8x256xf32>
      tpu.vector_store %arg11[%c0_8, %c0_9], %13 {strides = array<i32>} : memref<8x256xf32, #tpu.memory_space<vmem>>, vector<8x256xf32>,
      %c0_10 = arith.constant 0 : index
      %c0_11 = arith.constant 0 : index
      %17 = vector.load %arg13[%c0_10, %c0_11] : memref<8x256xf32, #tpu.memory_space<vmem>>, vector<8x256xf32>
      tpu.vector_store %arg13[%c0_10, %c0_11], %13 {strides = array<i32>} : memref<8x256xf32, #tpu.memory_space<vmem>>, vector<8x256xf32>,
    } else {
    }
    %c256_i32 = arith.constant 256 : i32
    %3 = arith.muli %arg1, %c256_i32 : i32
    %c255_i32 = arith.constant 255 : i32
    %4 = arith.addi %3, %c255_i32 : i32
    %c128_i32 = arith.constant 128 : i32
    %5 = arith.muli %arg0, %c128_i32 : i32
    %6 = arith.cmpi sgt, %4, %5 : i32
    %7 = arith.extui %6 : i1 to i32
    %c0_i32_1 = arith.constant 0 : i32
    %8 = arith.cmpi ne, %7, %c0_i32_1 : i32
    scf.if %8 {
      %c0 = arith.constant 0 : index
      %c0_4 = arith.constant 0 : index
      %12 = vector.load %arg2[%c0, %c0_4] : memref<128x32xf32, #tpu.memory_space<vmem>>, vector<128x32xf32>
      %c0_5 = arith.constant 0 : index
      %c0_6 = arith.constant 0 : index
      %13 = vector.load %arg3[%c0_5, %c0_6] : memref<32x256xf32, #tpu.memory_space<vmem>>, vector<32x256xf32>
      %cst = arith.constant dense<0.000000e+00> : vector<128x256xf32>
      %14 = tpu.matmul %12, %13, %cst {dimension_numbers = #tpu.dot_dimension_numbers<[1], [0], [0], [1], [0, 0, 1, 1], [], []>} : vector<128x32xf32>, vector<32x256xf32>, vector<128x256xf32> -> vector<128x256xf32>
      %c0_7 = arith.constant 0 : index
      %c0_8 = arith.constant 0 : index
      %15 = vector.load %arg4[%c0_7, %c0_8] : memref<128x1xi32, #tpu.memory_space<vmem>>, vector<128x1xi32>
      %c0_9 = arith.constant 0 : index
      %c0_10 = arith.constant 0 : index
      %16 = vector.load %arg5[%c0_9, %c0_10] : memref<1x256xi32, #tpu.memory_space<vmem>>, vector<1x256xi32>
      %17 = tpu.iota {dimensions = array<i32: 1>} : vector<8x256xi32>
      %18 = tpu.iota {dimensions = array<i32: 0>} : vector<8x256xi32>
      %19 = arith.subi %17, %18 : vector<8x256xi32>
      %c128_i32_11 = arith.constant 128 : i32
      %20 = arith.muli %arg0, %c128_i32_11 : i32
      %c256_i32_12 = arith.constant 256 : i32
      %21 = arith.muli %arg1, %c256_i32_12 : i32
      %22 = arith.subi %20, %21 : i32
      %c0_13 = arith.constant 0 : index
      %c0_14 = arith.constant 0 : index
      %23 = vector.load %arg10[%c0_13, %c0_14] : memref<8x256xf32, #tpu.memory_space<vmem>>, vector<8x256xf32>
      %c0_15 = arith.constant 0 : index
      %c0_16 = arith.constant 0 : index
      %24 = vector.load %arg12[%c0_15, %c0_16] : memref<8x256xf32, #tpu.memory_space<vmem>>, vector<8x256xf32>
      %25 = vector.extract_strided_slice %14 {offsets = [0, 0], sizes = [8, 256], strides = [1, 1]} : vector<128x256xf32> to vector<8x256xf32>
      %26 = vector.extract_strided_slice %15 {offsets = [0, 0], sizes = [8, 1], strides = [1, 1]} : vector<128x1xi32> to vector<8x1xi32>
      %27 = vector.broadcast %26 : vector<8x1xi32> to vector<8x256xi32>
      %28 = vector.broadcast %16 : vector<1x256xi32> to vector<8x256xi32>
      %29 = arith.cmpi eq, %27, %28 : vector<8x256xi32>
      %c0_i32_17 = arith.constant 0 : i32
      %30 = arith.addi %22, %c0_i32_17 : i32
      %31 = vector.broadcast %30 : i32 to vector<8x256xi32>
      %32 = arith.cmpi sgt, %19, %31 : vector<8x256xi32>
      %cst_18 = arith.constant 1.250000e+00 : f32
      %33 = vector.broadcast %cst_18 : f32 to vector<8x256xf32>
      %34 = arith.subf %33, %25 : vector<8x256xf32>
      %cst_19 = arith.constant 0.000000e+00 : f32
      %35 = vector.broadcast %cst_19 : f32 to vector<8x256xf32>
      %36 = arith.maximumf %34, %35 : vector<8x256xf32>
      %cst_20 = arith.constant 2.500000e-01 : f32
      %37 = vector.broadcast %cst_20 : f32 to vector<8x256xf32>
      %38 = arith.addf %25, %37 : vector<8x256xf32>
      %cst_21 = arith.constant 0.000000e+00 : f32
      %39 = vector.broadcast %cst_21 : f32 to vector<8x256xf32>
      %40 = arith.maximumf %38, %39 : vector<8x256xf32>
      %cst_22 = arith.constant -6.400000e+01 : f32
      %41 = vector.broadcast %cst_22 : f32 to vector<8x256xf32>
      %42 = arith.mulf %41, %36 : vector<8x256xf32>
      %cst_23 = arith.constant 7.500000e-01 : f32
      %43 = vector.broadcast %cst_23 : f32 to vector<8x256xf32>
      %44 = arith.subf %25, %43 : vector<8x256xf32>
      %45 = arith.mulf %42, %44 : vector<8x256xf32>
      %cst_24 = arith.constant 6.400000e+01 : f32
      %46 = vector.broadcast %cst_24 : f32 to vector<8x256xf32>
      %47 = arith.mulf %46, %40 : vector<8x256xf32>
      %cst_25 = arith.constant 2.500000e-01 : f32
      %48 = vector.broadcast %cst_25 : f32 to vector<8x256xf32>
      %49 = arith.subf %25, %48 : vector<8x256xf32>
      %50 = arith.mulf %47, %49 : vector<8x256xf32>
      %51 = arith.select %29, %45, %50 : vector<8x256xi1>, vector<8x256xf32>
      %52 = arith.andi %32, %29 : vector<8x256xi1>
      %cst_26 = arith.constant 0xFF800000 : f32
      %53 = vector.broadcast %cst_26 : f32 to vector<8x256xf32>
      %54 = arith.select %52, %51, %53 : vector<8x256xi1>, vector<8x256xf32>
      %55 = arith.maximumf %23, %54 : vector<8x256xf32>
      %cst_27 = arith.constant dense<true> : vector<8x256xi1>
      %56 = arith.xori %29, %cst_27 : vector<8x256xi1>
      %57 = arith.andi %32, %56 : vector<8x256xi1>
      %cst_28 = arith.constant 0xFF800000 : f32
      %58 = vector.broadcast %cst_28 : f32 to vector<8x256xf32>
      %59 = arith.select %57, %51, %58 : vector<8x256xi1>, vector<8x256xf32>
      %60 = arith.maximumf %24, %59 : vector<8x256xf32>
      %61 = vector.extract_strided_slice %14 {offsets = [8, 0], sizes = [8, 256], strides = [1, 1]} : vector<128x256xf32> to vector<8x256xf32>
      %62 = vector.extract_strided_slice %15 {offsets = [8, 0], sizes = [8, 1], strides = [1, 1]} : vector<128x1xi32> to vector<8x1xi32>
      %63 = vector.broadcast %62 : vector<8x1xi32> to vector<8x256xi32>
      %64 = vector.broadcast %16 : vector<1x256xi32> to vector<8x256xi32>
      %65 = arith.cmpi eq, %63, %64 : vector<8x256xi32>
      %c8_i32 = arith.constant 8 : i32
      %66 = arith.addi %22, %c8_i32 : i32
      %67 = vector.broadcast %66 : i32 to vector<8x256xi32>
      %68 = arith.cmpi sgt, %19, %67 : vector<8x256xi32>
      %cst_29 = arith.constant 1.250000e+00 : f32
      %69 = vector.broadcast %cst_29 : f32 to vector<8x256xf32>
      %70 = arith.subf %69, %61 : vector<8x256xf32>
      %cst_30 = arith.constant 0.000000e+00 : f32
      %71 = vector.broadcast %cst_30 : f32 to vector<8x256xf32>
      %72 = arith.maximumf %70, %71 : vector<8x256xf32>
      %cst_31 = arith.constant 2.500000e-01 : f32
      %73 = vector.broadcast %cst_31 : f32 to vector<8x256xf32>
      %74 = arith.addf %61, %73 : vector<8x256xf32>
      %cst_32 = arith.constant 0.000000e+00 : f32
      %75 = vector.broadcast %cst_32 : f32 to vector<8x256xf32>
      %76 = arith.maximumf %74, %75 : vector<8x256xf32>
      %cst_33 = arith.constant -6.400000e+01 : f32
      %77 = vector.broadcast %cst_33 : f32 to vector<8x256xf32>
      %78 = arith.mulf %77, %72 : vector<8x256xf32>
      %cst_34 = arith.constant 7.500000e-01 : f32
      %79 = vector.broadcast %cst_34 : f32 to vector<8x256xf32>
      %80 = arith.subf %61, %79 : vector<8x256xf32>
      %81 = arith.mulf %78, %80 : vector<8x256xf32>
      %cst_35 = arith.constant 6.400000e+01 : f32
      %82 = vector.broadcast %cst_35 : f32 to vector<8x256xf32>
      %83 = arith.mulf %82, %76 : vector<8x256xf32>
      %cst_36 = arith.constant 2.500000e-01 : f32
      %84 = vector.broadcast %cst_36 : f32 to vector<8x256xf32>
      %85 = arith.subf %61, %84 : vector<8x256xf32>
      %86 = arith.mulf %83, %85 : vector<8x256xf32>
      %87 = arith.select %65, %81, %86 : vector<8x256xi1>, vector<8x256xf32>
      %88 = arith.andi %68, %65 : vector<8x256xi1>
      %cst_37 = arith.constant 0xFF800000 : f32
      %89 = vector.broadcast %cst_37 : f32 to vector<8x256xf32>
      %90 = arith.select %88, %87, %89 : vector<8x256xi1>, vector<8x256xf32>
      %91 = arith.maximumf %55, %90 : vector<8x256xf32>
      %cst_38 = arith.constant dense<true> : vector<8x256xi1>
      %92 = arith.xori %65, %cst_38 : vector<8x256xi1>
      %93 = arith.andi %68, %92 : vector<8x256xi1>
      %cst_39 = arith.constant 0xFF800000 : f32
      %94 = vector.broadcast %cst_39 : f32 to vector<8x256xf32>
      %95 = arith.select %93, %87, %94 : vector<8x256xi1>, vector<8x256xf32>
      %96 = arith.maximumf %60, %95 : vector<8x256xf32>
      %97 = vector.extract_strided_slice %14 {offsets = [16, 0], sizes = [8, 256], strides = [1, 1]} : vector<128x256xf32> to vector<8x256xf32>
      %98 = vector.extract_strided_slice %15 {offsets = [16, 0], sizes = [8, 1], strides = [1, 1]} : vector<128x1xi32> to vector<8x1xi32>
      %99 = vector.broadcast %98 : vector<8x1xi32> to vector<8x256xi32>
      %100 = vector.broadcast %16 : vector<1x256xi32> to vector<8x256xi32>
      %101 = arith.cmpi eq, %99, %100 : vector<8x256xi32>
      %c16_i32 = arith.constant 16 : i32
      %102 = arith.addi %22, %c16_i32 : i32
      %103 = vector.broadcast %102 : i32 to vector<8x256xi32>
      %104 = arith.cmpi sgt, %19, %103 : vector<8x256xi32>
      %cst_40 = arith.constant 1.250000e+00 : f32
      %105 = vector.broadcast %cst_40 : f32 to vector<8x256xf32>
      %106 = arith.subf %105, %97 : vector<8x256xf32>
      %cst_41 = arith.constant 0.000000e+00 : f32
      %107 = vector.broadcast %cst_41 : f32 to vector<8x256xf32>
      %108 = arith.maximumf %106, %107 : vector<8x256xf32>
      %cst_42 = arith.constant 2.500000e-01 : f32
      %109 = vector.broadcast %cst_42 : f32 to vector<8x256xf32>
      %110 = arith.addf %97, %109 : vector<8x256xf32>
      %cst_43 = arith.constant 0.000000e+00 : f32
      %111 = vector.broadcast %cst_43 : f32 to vector<8x256xf32>
      %112 = arith.maximumf %110, %111 : vector<8x256xf32>
      %cst_44 = arith.constant -6.400000e+01 : f32
      %113 = vector.broadcast %cst_44 : f32 to vector<8x256xf32>
      %114 = arith.mulf %113, %108 : vector<8x256xf32>
      %cst_45 = arith.constant 7.500000e-01 : f32
      %115 = vector.broadcast %cst_45 : f32 to vector<8x256xf32>
      %116 = arith.subf %97, %115 : vector<8x256xf32>
      %117 = arith.mulf %114, %116 : vector<8x256xf32>
      %cst_46 = arith.constant 6.400000e+01 : f32
      %118 = vector.broadcast %cst_46 : f32 to vector<8x256xf32>
      %119 = arith.mulf %118, %112 : vector<8x256xf32>
      %cst_47 = arith.constant 2.500000e-01 : f32
      %120 = vector.broadcast %cst_47 : f32 to vector<8x256xf32>
      %121 = arith.subf %97, %120 : vector<8x256xf32>
      %122 = arith.mulf %119, %121 : vector<8x256xf32>
      %123 = arith.select %101, %117, %122 : vector<8x256xi1>, vector<8x256xf32>
      %124 = arith.andi %104, %101 : vector<8x256xi1>
      %cst_48 = arith.constant 0xFF800000 : f32
      %125 = vector.broadcast %cst_48 : f32 to vector<8x256xf32>
      %126 = arith.select %124, %123, %125 : vector<8x256xi1>, vector<8x256xf32>
      %127 = arith.maximumf %91, %126 : vector<8x256xf32>
      %cst_49 = arith.constant dense<true> : vector<8x256xi1>
      %128 = arith.xori %101, %cst_49 : vector<8x256xi1>
      %129 = arith.andi %104, %128 : vector<8x256xi1>
      %cst_50 = arith.constant 0xFF800000 : f32
      %130 = vector.broadcast %cst_50 : f32 to vector<8x256xf32>
      %131 = arith.select %129, %123, %130 : vector<8x256xi1>, vector<8x256xf32>
      %132 = arith.maximumf %96, %131 : vector<8x256xf32>
      %133 = vector.extract_strided_slice %14 {offsets = [24, 0], sizes = [8, 256], strides = [1, 1]} : vector<128x256xf32> to vector<8x256xf32>
      %134 = vector.extract_strided_slice %15 {offsets = [24, 0], sizes = [8, 1], strides = [1, 1]} : vector<128x1xi32> to vector<8x1xi32>
      %135 = vector.broadcast %134 : vector<8x1xi32> to vector<8x256xi32>
      %136 = vector.broadcast %16 : vector<1x256xi32> to vector<8x256xi32>
      %137 = arith.cmpi eq, %135, %136 : vector<8x256xi32>
      %c24_i32 = arith.constant 24 : i32
      %138 = arith.addi %22, %c24_i32 : i32
      %139 = vector.broadcast %138 : i32 to vector<8x256xi32>
      %140 = arith.cmpi sgt, %19, %139 : vector<8x256xi32>
      %cst_51 = arith.constant 1.250000e+00 : f32
      %141 = vector.broadcast %cst_51 : f32 to vector<8x256xf32>
      %142 = arith.subf %141, %133 : vector<8x256xf32>
      %cst_52 = arith.constant 0.000000e+00 : f32
      %143 = vector.broadcast %cst_52 : f32 to vector<8x256xf32>
      %144 = arith.maximumf %142, %143 : vector<8x256xf32>
      %cst_53 = arith.constant 2.500000e-01 : f32
      %145 = vector.broadcast %cst_53 : f32 to vector<8x256xf32>
      %146 = arith.addf %133, %145 : vector<8x256xf32>
      %cst_54 = arith.constant 0.000000e+00 : f32
      %147 = vector.broadcast %cst_54 : f32 to vector<8x256xf32>
      %148 = arith.maximumf %146, %147 : vector<8x256xf32>
      %cst_55 = arith.constant -6.400000e+01 : f32
      %149 = vector.broadcast %cst_55 : f32 to vector<8x256xf32>
      %150 = arith.mulf %149, %144 : vector<8x256xf32>
      %cst_56 = arith.constant 7.500000e-01 : f32
      %151 = vector.broadcast %cst_56 : f32 to vector<8x256xf32>
      %152 = arith.subf %133, %151 : vector<8x256xf32>
      %153 = arith.mulf %150, %152 : vector<8x256xf32>
      %cst_57 = arith.constant 6.400000e+01 : f32
      %154 = vector.broadcast %cst_57 : f32 to vector<8x256xf32>
      %155 = arith.mulf %154, %148 : vector<8x256xf32>
      %cst_58 = arith.constant 2.500000e-01 : f32
      %156 = vector.broadcast %cst_58 : f32 to vector<8x256xf32>
      %157 = arith.subf %133, %156 : vector<8x256xf32>
      %158 = arith.mulf %155, %157 : vector<8x256xf32>
      %159 = arith.select %137, %153, %158 : vector<8x256xi1>, vector<8x256xf32>
      %160 = arith.andi %140, %137 : vector<8x256xi1>
      %cst_59 = arith.constant 0xFF800000 : f32
      %161 = vector.broadcast %cst_59 : f32 to vector<8x256xf32>
      %162 = arith.select %160, %159, %161 : vector<8x256xi1>, vector<8x256xf32>
      %163 = arith.maximumf %127, %162 : vector<8x256xf32>
      %cst_60 = arith.constant dense<true> : vector<8x256xi1>
      %164 = arith.xori %137, %cst_60 : vector<8x256xi1>
      %165 = arith.andi %140, %164 : vector<8x256xi1>
      %cst_61 = arith.constant 0xFF800000 : f32
      %166 = vector.broadcast %cst_61 : f32 to vector<8x256xf32>
      %167 = arith.select %165, %159, %166 : vector<8x256xi1>, vector<8x256xf32>
      %168 = arith.maximumf %132, %167 : vector<8x256xf32>
      %169 = vector.extract_strided_slice %14 {offsets = [32, 0], sizes = [8, 256], strides = [1, 1]} : vector<128x256xf32> to vector<8x256xf32>
      %170 = vector.extract_strided_slice %15 {offsets = [32, 0], sizes = [8, 1], strides = [1, 1]} : vector<128x1xi32> to vector<8x1xi32>
      %171 = vector.broadcast %170 : vector<8x1xi32> to vector<8x256xi32>
      %172 = vector.broadcast %16 : vector<1x256xi32> to vector<8x256xi32>
      %173 = arith.cmpi eq, %171, %172 : vector<8x256xi32>
      %c32_i32 = arith.constant 32 : i32
      %174 = arith.addi %22, %c32_i32 : i32
      %175 = vector.broadcast %174 : i32 to vector<8x256xi32>
      %176 = arith.cmpi sgt, %19, %175 : vector<8x256xi32>
      %cst_62 = arith.constant 1.250000e+00 : f32
      %177 = vector.broadcast %cst_62 : f32 to vector<8x256xf32>
      %178 = arith.subf %177, %169 : vector<8x256xf32>
      %cst_63 = arith.constant 0.000000e+00 : f32
      %179 = vector.broadcast %cst_63 : f32 to vector<8x256xf32>
      %180 = arith.maximumf %178, %179 : vector<8x256xf32>
      %cst_64 = arith.constant 2.500000e-01 : f32
      %181 = vector.broadcast %cst_64 : f32 to vector<8x256xf32>
      %182 = arith.addf %169, %181 : vector<8x256xf32>
      %cst_65 = arith.constant 0.000000e+00 : f32
      %183 = vector.broadcast %cst_65 : f32 to vector<8x256xf32>
      %184 = arith.maximumf %182, %183 : vector<8x256xf32>
      %cst_66 = arith.constant -6.400000e+01 : f32
      %185 = vector.broadcast %cst_66 : f32 to vector<8x256xf32>
      %186 = arith.mulf %185, %180 : vector<8x256xf32>
      %cst_67 = arith.constant 7.500000e-01 : f32
      %187 = vector.broadcast %cst_67 : f32 to vector<8x256xf32>
      %188 = arith.subf %169, %187 : vector<8x256xf32>
      %189 = arith.mulf %186, %188 : vector<8x256xf32>
      %cst_68 = arith.constant 6.400000e+01 : f32
      %190 = vector.broadcast %cst_68 : f32 to vector<8x256xf32>
      %191 = arith.mulf %190, %184 : vector<8x256xf32>
      %cst_69 = arith.constant 2.500000e-01 : f32
      %192 = vector.broadcast %cst_69 : f32 to vector<8x256xf32>
      %193 = arith.subf %169, %192 : vector<8x256xf32>
      %194 = arith.mulf %191, %193 : vector<8x256xf32>
      %195 = arith.select %173, %189, %194 : vector<8x256xi1>, vector<8x256xf32>
      %196 = arith.andi %176, %173 : vector<8x256xi1>
      %cst_70 = arith.constant 0xFF800000 : f32
      %197 = vector.broadcast %cst_70 : f32 to vector<8x256xf32>
      %198 = arith.select %196, %195, %197 : vector<8x256xi1>, vector<8x256xf32>
      %199 = arith.maximumf %163, %198 : vector<8x256xf32>
      %cst_71 = arith.constant dense<true> : vector<8x256xi1>
      %200 = arith.xori %173, %cst_71 : vector<8x256xi1>
      %201 = arith.andi %176, %200 : vector<8x256xi1>
      %cst_72 = arith.constant 0xFF800000 : f32
      %202 = vector.broadcast %cst_72 : f32 to vector<8x256xf32>
      %203 = arith.select %201, %195, %202 : vector<8x256xi1>, vector<8x256xf32>
      %204 = arith.maximumf %168, %203 : vector<8x256xf32>
      %205 = vector.extract_strided_slice %14 {offsets = [40, 0], sizes = [8, 256], strides = [1, 1]} : vector<128x256xf32> to vector<8x256xf32>
      %206 = vector.extract_strided_slice %15 {offsets = [40, 0], sizes = [8, 1], strides = [1, 1]} : vector<128x1xi32> to vector<8x1xi32>
      %207 = vector.broadcast %206 : vector<8x1xi32> to vector<8x256xi32>
      %208 = vector.broadcast %16 : vector<1x256xi32> to vector<8x256xi32>
      %209 = arith.cmpi eq, %207, %208 : vector<8x256xi32>
      %c40_i32 = arith.constant 40 : i32
      %210 = arith.addi %22, %c40_i32 : i32
      %211 = vector.broadcast %210 : i32 to vector<8x256xi32>
      %212 = arith.cmpi sgt, %19, %211 : vector<8x256xi32>
      %cst_73 = arith.constant 1.250000e+00 : f32
      %213 = vector.broadcast %cst_73 : f32 to vector<8x256xf32>
      %214 = arith.subf %213, %205 : vector<8x256xf32>
      %cst_74 = arith.constant 0.000000e+00 : f32
      %215 = vector.broadcast %cst_74 : f32 to vector<8x256xf32>
      %216 = arith.maximumf %214, %215 : vector<8x256xf32>
      %cst_75 = arith.constant 2.500000e-01 : f32
      %217 = vector.broadcast %cst_75 : f32 to vector<8x256xf32>
      %218 = arith.addf %205, %217 : vector<8x256xf32>
      %cst_76 = arith.constant 0.000000e+00 : f32
      %219 = vector.broadcast %cst_76 : f32 to vector<8x256xf32>
      %220 = arith.maximumf %218, %219 : vector<8x256xf32>
      %cst_77 = arith.constant -6.400000e+01 : f32
      %221 = vector.broadcast %cst_77 : f32 to vector<8x256xf32>
      %222 = arith.mulf %221, %216 : vector<8x256xf32>
      %cst_78 = arith.constant 7.500000e-01 : f32
      %223 = vector.broadcast %cst_78 : f32 to vector<8x256xf32>
      %224 = arith.subf %205, %223 : vector<8x256xf32>
      %225 = arith.mulf %222, %224 : vector<8x256xf32>
      %cst_79 = arith.constant 6.400000e+01 : f32
      %226 = vector.broadcast %cst_79 : f32 to vector<8x256xf32>
      %227 = arith.mulf %226, %220 : vector<8x256xf32>
      %cst_80 = arith.constant 2.500000e-01 : f32
      %228 = vector.broadcast %cst_80 : f32 to vector<8x256xf32>
      %229 = arith.subf %205, %228 : vector<8x256xf32>
      %230 = arith.mulf %227, %229 : vector<8x256xf32>
      %231 = arith.select %209, %225, %230 : vector<8x256xi1>, vector<8x256xf32>
      %232 = arith.andi %212, %209 : vector<8x256xi1>
      %cst_81 = arith.constant 0xFF800000 : f32
      %233 = vector.broadcast %cst_81 : f32 to vector<8x256xf32>
      %234 = arith.select %232, %231, %233 : vector<8x256xi1>, vector<8x256xf32>
      %235 = arith.maximumf %199, %234 : vector<8x256xf32>
      %cst_82 = arith.constant dense<true> : vector<8x256xi1>
      %236 = arith.xori %209, %cst_82 : vector<8x256xi1>
      %237 = arith.andi %212, %236 : vector<8x256xi1>
      %cst_83 = arith.constant 0xFF800000 : f32
      %238 = vector.broadcast %cst_83 : f32 to vector<8x256xf32>
      %239 = arith.select %237, %231, %238 : vector<8x256xi1>, vector<8x256xf32>
      %240 = arith.maximumf %204, %239 : vector<8x256xf32>
      %241 = vector.extract_strided_slice %14 {offsets = [48, 0], sizes = [8, 256], strides = [1, 1]} : vector<128x256xf32> to vector<8x256xf32>
      %242 = vector.extract_strided_slice %15 {offsets = [48, 0], sizes = [8, 1], strides = [1, 1]} : vector<128x1xi32> to vector<8x1xi32>
      %243 = vector.broadcast %242 : vector<8x1xi32> to vector<8x256xi32>
      %244 = vector.broadcast %16 : vector<1x256xi32> to vector<8x256xi32>
      %245 = arith.cmpi eq, %243, %244 : vector<8x256xi32>
      %c48_i32 = arith.constant 48 : i32
      %246 = arith.addi %22, %c48_i32 : i32
      %247 = vector.broadcast %246 : i32 to vector<8x256xi32>
      %248 = arith.cmpi sgt, %19, %247 : vector<8x256xi32>
      %cst_84 = arith.constant 1.250000e+00 : f32
      %249 = vector.broadcast %cst_84 : f32 to vector<8x256xf32>
      %250 = arith.subf %249, %241 : vector<8x256xf32>
      %cst_85 = arith.constant 0.000000e+00 : f32
      %251 = vector.broadcast %cst_85 : f32 to vector<8x256xf32>
      %252 = arith.maximumf %250, %251 : vector<8x256xf32>
      %cst_86 = arith.constant 2.500000e-01 : f32
      %253 = vector.broadcast %cst_86 : f32 to vector<8x256xf32>
      %254 = arith.addf %241, %253 : vector<8x256xf32>
      %cst_87 = arith.constant 0.000000e+00 : f32
      %255 = vector.broadcast %cst_87 : f32 to vector<8x256xf32>
      %256 = arith.maximumf %254, %255 : vector<8x256xf32>
      %cst_88 = arith.constant -6.400000e+01 : f32
      %257 = vector.broadcast %cst_88 : f32 to vector<8x256xf32>
      %258 = arith.mulf %257, %252 : vector<8x256xf32>
      %cst_89 = arith.constant 7.500000e-01 : f32
      %259 = vector.broadcast %cst_89 : f32 to vector<8x256xf32>
      %260 = arith.subf %241, %259 : vector<8x256xf32>
      %261 = arith.mulf %258, %260 : vector<8x256xf32>
      %cst_90 = arith.constant 6.400000e+01 : f32
      %262 = vector.broadcast %cst_90 : f32 to vector<8x256xf32>
      %263 = arith.mulf %262, %256 : vector<8x256xf32>
      %cst_91 = arith.constant 2.500000e-01 : f32
      %264 = vector.broadcast %cst_91 : f32 to vector<8x256xf32>
      %265 = arith.subf %241, %264 : vector<8x256xf32>
      %266 = arith.mulf %263, %265 : vector<8x256xf32>
      %267 = arith.select %245, %261, %266 : vector<8x256xi1>, vector<8x256xf32>
      %268 = arith.andi %248, %245 : vector<8x256xi1>
      %cst_92 = arith.constant 0xFF800000 : f32
      %269 = vector.broadcast %cst_92 : f32 to vector<8x256xf32>
      %270 = arith.select %268, %267, %269 : vector<8x256xi1>, vector<8x256xf32>
      %271 = arith.maximumf %235, %270 : vector<8x256xf32>
      %cst_93 = arith.constant dense<true> : vector<8x256xi1>
      %272 = arith.xori %245, %cst_93 : vector<8x256xi1>
      %273 = arith.andi %248, %272 : vector<8x256xi1>
      %cst_94 = arith.constant 0xFF800000 : f32
      %274 = vector.broadcast %cst_94 : f32 to vector<8x256xf32>
      %275 = arith.select %273, %267, %274 : vector<8x256xi1>, vector<8x256xf32>
      %276 = arith.maximumf %240, %275 : vector<8x256xf32>
      %277 = vector.extract_strided_slice %14 {offsets = [56, 0], sizes = [8, 256], strides = [1, 1]} : vector<128x256xf32> to vector<8x256xf32>
      %278 = vector.extract_strided_slice %15 {offsets = [56, 0], sizes = [8, 1], strides = [1, 1]} : vector<128x1xi32> to vector<8x1xi32>
      %279 = vector.broadcast %278 : vector<8x1xi32> to vector<8x256xi32>
      %280 = vector.broadcast %16 : vector<1x256xi32> to vector<8x256xi32>
      %281 = arith.cmpi eq, %279, %280 : vector<8x256xi32>
      %c56_i32 = arith.constant 56 : i32
      %282 = arith.addi %22, %c56_i32 : i32
      %283 = vector.broadcast %282 : i32 to vector<8x256xi32>
      %284 = arith.cmpi sgt, %19, %283 : vector<8x256xi32>
      %cst_95 = arith.constant 1.250000e+00 : f32
      %285 = vector.broadcast %cst_95 : f32 to vector<8x256xf32>
      %286 = arith.subf %285, %277 : vector<8x256xf32>
      %cst_96 = arith.constant 0.000000e+00 : f32
      %287 = vector.broadcast %cst_96 : f32 to vector<8x256xf32>
      %288 = arith.maximumf %286, %287 : vector<8x256xf32>
      %cst_97 = arith.constant 2.500000e-01 : f32
      %289 = vector.broadcast %cst_97 : f32 to vector<8x256xf32>
      %290 = arith.addf %277, %289 : vector<8x256xf32>
      %cst_98 = arith.constant 0.000000e+00 : f32
      %291 = vector.broadcast %cst_98 : f32 to vector<8x256xf32>
      %292 = arith.maximumf %290, %291 : vector<8x256xf32>
      %cst_99 = arith.constant -6.400000e+01 : f32
      %293 = vector.broadcast %cst_99 : f32 to vector<8x256xf32>
      %294 = arith.mulf %293, %288 : vector<8x256xf32>
      %cst_100 = arith.constant 7.500000e-01 : f32
      %295 = vector.broadcast %cst_100 : f32 to vector<8x256xf32>
      %296 = arith.subf %277, %295 : vector<8x256xf32>
      %297 = arith.mulf %294, %296 : vector<8x256xf32>
      %cst_101 = arith.constant 6.400000e+01 : f32
      %298 = vector.broadcast %cst_101 : f32 to vector<8x256xf32>
      %299 = arith.mulf %298, %292 : vector<8x256xf32>
      %cst_102 = arith.constant 2.500000e-01 : f32
      %300 = vector.broadcast %cst_102 : f32 to vector<8x256xf32>
      %301 = arith.subf %277, %300 : vector<8x256xf32>
      %302 = arith.mulf %299, %301 : vector<8x256xf32>
      %303 = arith.select %281, %297, %302 : vector<8x256xi1>, vector<8x256xf32>
      %304 = arith.andi %284, %281 : vector<8x256xi1>
      %cst_103 = arith.constant 0xFF800000 : f32
      %305 = vector.broadcast %cst_103 : f32 to vector<8x256xf32>
      %306 = arith.select %304, %303, %305 : vector<8x256xi1>, vector<8x256xf32>
      %307 = arith.maximumf %271, %306 : vector<8x256xf32>
      %cst_104 = arith.constant dense<true> : vector<8x256xi1>
      %308 = arith.xori %281, %cst_104 : vector<8x256xi1>
      %309 = arith.andi %284, %308 : vector<8x256xi1>
      %cst_105 = arith.constant 0xFF800000 : f32
      %310 = vector.broadcast %cst_105 : f32 to vector<8x256xf32>
      %311 = arith.select %309, %303, %310 : vector<8x256xi1>, vector<8x256xf32>
      %312 = arith.maximumf %276, %311 : vector<8x256xf32>
      %313 = vector.extract_strided_slice %14 {offsets = [64, 0], sizes = [8, 256], strides = [1, 1]} : vector<128x256xf32> to vector<8x256xf32>
      %314 = vector.extract_strided_slice %15 {offsets = [64, 0], sizes = [8, 1], strides = [1, 1]} : vector<128x1xi32> to vector<8x1xi32>
      %315 = vector.broadcast %314 : vector<8x1xi32> to vector<8x256xi32>
      %316 = vector.broadcast %16 : vector<1x256xi32> to vector<8x256xi32>
      %317 = arith.cmpi eq, %315, %316 : vector<8x256xi32>
      %c64_i32 = arith.constant 64 : i32
      %318 = arith.addi %22, %c64_i32 : i32
      %319 = vector.broadcast %318 : i32 to vector<8x256xi32>
      %320 = arith.cmpi sgt, %19, %319 : vector<8x256xi32>
      %cst_106 = arith.constant 1.250000e+00 : f32
      %321 = vector.broadcast %cst_106 : f32 to vector<8x256xf32>
      %322 = arith.subf %321, %313 : vector<8x256xf32>
      %cst_107 = arith.constant 0.000000e+00 : f32
      %323 = vector.broadcast %cst_107 : f32 to vector<8x256xf32>
      %324 = arith.maximumf %322, %323 : vector<8x256xf32>
      %cst_108 = arith.constant 2.500000e-01 : f32
      %325 = vector.broadcast %cst_108 : f32 to vector<8x256xf32>
      %326 = arith.addf %313, %325 : vector<8x256xf32>
      %cst_109 = arith.constant 0.000000e+00 : f32
      %327 = vector.broadcast %cst_109 : f32 to vector<8x256xf32>
      %328 = arith.maximumf %326, %327 : vector<8x256xf32>
      %cst_110 = arith.constant -6.400000e+01 : f32
      %329 = vector.broadcast %cst_110 : f32 to vector<8x256xf32>
      %330 = arith.mulf %329, %324 : vector<8x256xf32>
      %cst_111 = arith.constant 7.500000e-01 : f32
      %331 = vector.broadcast %cst_111 : f32 to vector<8x256xf32>
      %332 = arith.subf %313, %331 : vector<8x256xf32>
      %333 = arith.mulf %330, %332 : vector<8x256xf32>
      %cst_112 = arith.constant 6.400000e+01 : f32
      %334 = vector.broadcast %cst_112 : f32 to vector<8x256xf32>
      %335 = arith.mulf %334, %328 : vector<8x256xf32>
      %cst_113 = arith.constant 2.500000e-01 : f32
      %336 = vector.broadcast %cst_113 : f32 to vector<8x256xf32>
      %337 = arith.subf %313, %336 : vector<8x256xf32>
      %338 = arith.mulf %335, %337 : vector<8x256xf32>
      %339 = arith.select %317, %333, %338 : vector<8x256xi1>, vector<8x256xf32>
      %340 = arith.andi %320, %317 : vector<8x256xi1>
      %cst_114 = arith.constant 0xFF800000 : f32
      %341 = vector.broadcast %cst_114 : f32 to vector<8x256xf32>
      %342 = arith.select %340, %339, %341 : vector<8x256xi1>, vector<8x256xf32>
      %343 = arith.maximumf %307, %342 : vector<8x256xf32>
      %cst_115 = arith.constant dense<true> : vector<8x256xi1>
      %344 = arith.xori %317, %cst_115 : vector<8x256xi1>
      %345 = arith.andi %320, %344 : vector<8x256xi1>
      %cst_116 = arith.constant 0xFF800000 : f32
      %346 = vector.broadcast %cst_116 : f32 to vector<8x256xf32>
      %347 = arith.select %345, %339, %346 : vector<8x256xi1>, vector<8x256xf32>
      %348 = arith.maximumf %312, %347 : vector<8x256xf32>
      %349 = vector.extract_strided_slice %14 {offsets = [72, 0], sizes = [8, 256], strides = [1, 1]} : vector<128x256xf32> to vector<8x256xf32>
      %350 = vector.extract_strided_slice %15 {offsets = [72, 0], sizes = [8, 1], strides = [1, 1]} : vector<128x1xi32> to vector<8x1xi32>
      %351 = vector.broadcast %350 : vector<8x1xi32> to vector<8x256xi32>
      %352 = vector.broadcast %16 : vector<1x256xi32> to vector<8x256xi32>
      %353 = arith.cmpi eq, %351, %352 : vector<8x256xi32>
      %c72_i32 = arith.constant 72 : i32
      %354 = arith.addi %22, %c72_i32 : i32
      %355 = vector.broadcast %354 : i32 to vector<8x256xi32>
      %356 = arith.cmpi sgt, %19, %355 : vector<8x256xi32>
      %cst_117 = arith.constant 1.250000e+00 : f32
      %357 = vector.broadcast %cst_117 : f32 to vector<8x256xf32>
      %358 = arith.subf %357, %349 : vector<8x256xf32>
      %cst_118 = arith.constant 0.000000e+00 : f32
      %359 = vector.broadcast %cst_118 : f32 to vector<8x256xf32>
      %360 = arith.maximumf %358, %359 : vector<8x256xf32>
      %cst_119 = arith.constant 2.500000e-01 : f32
      %361 = vector.broadcast %cst_119 : f32 to vector<8x256xf32>
      %362 = arith.addf %349, %361 : vector<8x256xf32>
      %cst_120 = arith.constant 0.000000e+00 : f32
      %363 = vector.broadcast %cst_120 : f32 to vector<8x256xf32>
      %364 = arith.maximumf %362, %363 : vector<8x256xf32>
      %cst_121 = arith.constant -6.400000e+01 : f32
      %365 = vector.broadcast %cst_121 : f32 to vector<8x256xf32>
      %366 = arith.mulf %365, %360 : vector<8x256xf32>
      %cst_122 = arith.constant 7.500000e-01 : f32
      %367 = vector.broadcast %cst_122 : f32 to vector<8x256xf32>
      %368 = arith.subf %349, %367 : vector<8x256xf32>
      %369 = arith.mulf %366, %368 : vector<8x256xf32>
      %cst_123 = arith.constant 6.400000e+01 : f32
      %370 = vector.broadcast %cst_123 : f32 to vector<8x256xf32>
      %371 = arith.mulf %370, %364 : vector<8x256xf32>
      %cst_124 = arith.constant 2.500000e-01 : f32
      %372 = vector.broadcast %cst_124 : f32 to vector<8x256xf32>
      %373 = arith.subf %349, %372 : vector<8x256xf32>
      %374 = arith.mulf %371, %373 : vector<8x256xf32>
      %375 = arith.select %353, %369, %374 : vector<8x256xi1>, vector<8x256xf32>
      %376 = arith.andi %356, %353 : vector<8x256xi1>
      %cst_125 = arith.constant 0xFF800000 : f32
      %377 = vector.broadcast %cst_125 : f32 to vector<8x256xf32>
      %378 = arith.select %376, %375, %377 : vector<8x256xi1>, vector<8x256xf32>
      %379 = arith.maximumf %343, %378 : vector<8x256xf32>
      %cst_126 = arith.constant dense<true> : vector<8x256xi1>
      %380 = arith.xori %353, %cst_126 : vector<8x256xi1>
      %381 = arith.andi %356, %380 : vector<8x256xi1>
      %cst_127 = arith.constant 0xFF800000 : f32
      %382 = vector.broadcast %cst_127 : f32 to vector<8x256xf32>
      %383 = arith.select %381, %375, %382 : vector<8x256xi1>, vector<8x256xf32>
      %384 = arith.maximumf %348, %383 : vector<8x256xf32>
      %385 = vector.extract_strided_slice %14 {offsets = [80, 0], sizes = [8, 256], strides = [1, 1]} : vector<128x256xf32> to vector<8x256xf32>
      %386 = vector.extract_strided_slice %15 {offsets = [80, 0], sizes = [8, 1], strides = [1, 1]} : vector<128x1xi32> to vector<8x1xi32>
      %387 = vector.broadcast %386 : vector<8x1xi32> to vector<8x256xi32>
      %388 = vector.broadcast %16 : vector<1x256xi32> to vector<8x256xi32>
      %389 = arith.cmpi eq, %387, %388 : vector<8x256xi32>
      %c80_i32 = arith.constant 80 : i32
      %390 = arith.addi %22, %c80_i32 : i32
      %391 = vector.broadcast %390 : i32 to vector<8x256xi32>
      %392 = arith.cmpi sgt, %19, %391 : vector<8x256xi32>
      %cst_128 = arith.constant 1.250000e+00 : f32
      %393 = vector.broadcast %cst_128 : f32 to vector<8x256xf32>
      %394 = arith.subf %393, %385 : vector<8x256xf32>
      %cst_129 = arith.constant 0.000000e+00 : f32
      %395 = vector.broadcast %cst_129 : f32 to vector<8x256xf32>
      %396 = arith.maximumf %394, %395 : vector<8x256xf32>
      %cst_130 = arith.constant 2.500000e-01 : f32
      %397 = vector.broadcast %cst_130 : f32 to vector<8x256xf32>
      %398 = arith.addf %385, %397 : vector<8x256xf32>
      %cst_131 = arith.constant 0.000000e+00 : f32
      %399 = vector.broadcast %cst_131 : f32 to vector<8x256xf32>
      %400 = arith.maximumf %398, %399 : vector<8x256xf32>
      %cst_132 = arith.constant -6.400000e+01 : f32
      %401 = vector.broadcast %cst_132 : f32 to vector<8x256xf32>
      %402 = arith.mulf %401, %396 : vector<8x256xf32>
      %cst_133 = arith.constant 7.500000e-01 : f32
      %403 = vector.broadcast %cst_133 : f32 to vector<8x256xf32>
      %404 = arith.subf %385, %403 : vector<8x256xf32>
      %405 = arith.mulf %402, %404 : vector<8x256xf32>
      %cst_134 = arith.constant 6.400000e+01 : f32
      %406 = vector.broadcast %cst_134 : f32 to vector<8x256xf32>
      %407 = arith.mulf %406, %400 : vector<8x256xf32>
      %cst_135 = arith.constant 2.500000e-01 : f32
      %408 = vector.broadcast %cst_135 : f32 to vector<8x256xf32>
      %409 = arith.subf %385, %408 : vector<8x256xf32>
      %410 = arith.mulf %407, %409 : vector<8x256xf32>
      %411 = arith.select %389, %405, %410 : vector<8x256xi1>, vector<8x256xf32>
      %412 = arith.andi %392, %389 : vector<8x256xi1>
      %cst_136 = arith.constant 0xFF800000 : f32
      %413 = vector.broadcast %cst_136 : f32 to vector<8x256xf32>
      %414 = arith.select %412, %411, %413 : vector<8x256xi1>, vector<8x256xf32>
      %415 = arith.maximumf %379, %414 : vector<8x256xf32>
      %cst_137 = arith.constant dense<true> : vector<8x256xi1>
      %416 = arith.xori %389, %cst_137 : vector<8x256xi1>
      %417 = arith.andi %392, %416 : vector<8x256xi1>
      %cst_138 = arith.constant 0xFF800000 : f32
      %418 = vector.broadcast %cst_138 : f32 to vector<8x256xf32>
      %419 = arith.select %417, %411, %418 : vector<8x256xi1>, vector<8x256xf32>
      %420 = arith.maximumf %384, %419 : vector<8x256xf32>
      %421 = vector.extract_strided_slice %14 {offsets = [88, 0], sizes = [8, 256], strides = [1, 1]} : vector<128x256xf32> to vector<8x256xf32>
      %422 = vector.extract_strided_slice %15 {offsets = [88, 0], sizes = [8, 1], strides = [1, 1]} : vector<128x1xi32> to vector<8x1xi32>
      %423 = vector.broadcast %422 : vector<8x1xi32> to vector<8x256xi32>
      %424 = vector.broadcast %16 : vector<1x256xi32> to vector<8x256xi32>
      %425 = arith.cmpi eq, %423, %424 : vector<8x256xi32>
      %c88_i32 = arith.constant 88 : i32
      %426 = arith.addi %22, %c88_i32 : i32
      %427 = vector.broadcast %426 : i32 to vector<8x256xi32>
      %428 = arith.cmpi sgt, %19, %427 : vector<8x256xi32>
      %cst_139 = arith.constant 1.250000e+00 : f32
      %429 = vector.broadcast %cst_139 : f32 to vector<8x256xf32>
      %430 = arith.subf %429, %421 : vector<8x256xf32>
      %cst_140 = arith.constant 0.000000e+00 : f32
      %431 = vector.broadcast %cst_140 : f32 to vector<8x256xf32>
      %432 = arith.maximumf %430, %431 : vector<8x256xf32>
      %cst_141 = arith.constant 2.500000e-01 : f32
      %433 = vector.broadcast %cst_141 : f32 to vector<8x256xf32>
      %434 = arith.addf %421, %433 : vector<8x256xf32>
      %cst_142 = arith.constant 0.000000e+00 : f32
      %435 = vector.broadcast %cst_142 : f32 to vector<8x256xf32>
      %436 = arith.maximumf %434, %435 : vector<8x256xf32>
      %cst_143 = arith.constant -6.400000e+01 : f32
      %437 = vector.broadcast %cst_143 : f32 to vector<8x256xf32>
      %438 = arith.mulf %437, %432 : vector<8x256xf32>
      %cst_144 = arith.constant 7.500000e-01 : f32
      %439 = vector.broadcast %cst_144 : f32 to vector<8x256xf32>
      %440 = arith.subf %421, %439 : vector<8x256xf32>
      %441 = arith.mulf %438, %440 : vector<8x256xf32>
      %cst_145 = arith.constant 6.400000e+01 : f32
      %442 = vector.broadcast %cst_145 : f32 to vector<8x256xf32>
      %443 = arith.mulf %442, %436 : vector<8x256xf32>
      %cst_146 = arith.constant 2.500000e-01 : f32
      %444 = vector.broadcast %cst_146 : f32 to vector<8x256xf32>
      %445 = arith.subf %421, %444 : vector<8x256xf32>
      %446 = arith.mulf %443, %445 : vector<8x256xf32>
      %447 = arith.select %425, %441, %446 : vector<8x256xi1>, vector<8x256xf32>
      %448 = arith.andi %428, %425 : vector<8x256xi1>
      %cst_147 = arith.constant 0xFF800000 : f32
      %449 = vector.broadcast %cst_147 : f32 to vector<8x256xf32>
      %450 = arith.select %448, %447, %449 : vector<8x256xi1>, vector<8x256xf32>
      %451 = arith.maximumf %415, %450 : vector<8x256xf32>
      %cst_148 = arith.constant dense<true> : vector<8x256xi1>
      %452 = arith.xori %425, %cst_148 : vector<8x256xi1>
      %453 = arith.andi %428, %452 : vector<8x256xi1>
      %cst_149 = arith.constant 0xFF800000 : f32
      %454 = vector.broadcast %cst_149 : f32 to vector<8x256xf32>
      %455 = arith.select %453, %447, %454 : vector<8x256xi1>, vector<8x256xf32>
      %456 = arith.maximumf %420, %455 : vector<8x256xf32>
      %457 = vector.extract_strided_slice %14 {offsets = [96, 0], sizes = [8, 256], strides = [1, 1]} : vector<128x256xf32> to vector<8x256xf32>
      %458 = vector.extract_strided_slice %15 {offsets = [96, 0], sizes = [8, 1], strides = [1, 1]} : vector<128x1xi32> to vector<8x1xi32>
      %459 = vector.broadcast %458 : vector<8x1xi32> to vector<8x256xi32>
      %460 = vector.broadcast %16 : vector<1x256xi32> to vector<8x256xi32>
      %461 = arith.cmpi eq, %459, %460 : vector<8x256xi32>
      %c96_i32 = arith.constant 96 : i32
      %462 = arith.addi %22, %c96_i32 : i32
      %463 = vector.broadcast %462 : i32 to vector<8x256xi32>
      %464 = arith.cmpi sgt, %19, %463 : vector<8x256xi32>
      %cst_150 = arith.constant 1.250000e+00 : f32
      %465 = vector.broadcast %cst_150 : f32 to vector<8x256xf32>
      %466 = arith.subf %465, %457 : vector<8x256xf32>
      %cst_151 = arith.constant 0.000000e+00 : f32
      %467 = vector.broadcast %cst_151 : f32 to vector<8x256xf32>
      %468 = arith.maximumf %466, %467 : vector<8x256xf32>
      %cst_152 = arith.constant 2.500000e-01 : f32
      %469 = vector.broadcast %cst_152 : f32 to vector<8x256xf32>
      %470 = arith.addf %457, %469 : vector<8x256xf32>
      %cst_153 = arith.constant 0.000000e+00 : f32
      %471 = vector.broadcast %cst_153 : f32 to vector<8x256xf32>
      %472 = arith.maximumf %470, %471 : vector<8x256xf32>
      %cst_154 = arith.constant -6.400000e+01 : f32
      %473 = vector.broadcast %cst_154 : f32 to vector<8x256xf32>
      %474 = arith.mulf %473, %468 : vector<8x256xf32>
      %cst_155 = arith.constant 7.500000e-01 : f32
      %475 = vector.broadcast %cst_155 : f32 to vector<8x256xf32>
      %476 = arith.subf %457, %475 : vector<8x256xf32>
      %477 = arith.mulf %474, %476 : vector<8x256xf32>
      %cst_156 = arith.constant 6.400000e+01 : f32
      %478 = vector.broadcast %cst_156 : f32 to vector<8x256xf32>
      %479 = arith.mulf %478, %472 : vector<8x256xf32>
      %cst_157 = arith.constant 2.500000e-01 : f32
      %480 = vector.broadcast %cst_157 : f32 to vector<8x256xf32>
      %481 = arith.subf %457, %480 : vector<8x256xf32>
      %482 = arith.mulf %479, %481 : vector<8x256xf32>
      %483 = arith.select %461, %477, %482 : vector<8x256xi1>, vector<8x256xf32>
      %484 = arith.andi %464, %461 : vector<8x256xi1>
      %cst_158 = arith.constant 0xFF800000 : f32
      %485 = vector.broadcast %cst_158 : f32 to vector<8x256xf32>
      %486 = arith.select %484, %483, %485 : vector<8x256xi1>, vector<8x256xf32>
      %487 = arith.maximumf %451, %486 : vector<8x256xf32>
      %cst_159 = arith.constant dense<true> : vector<8x256xi1>
      %488 = arith.xori %461, %cst_159 : vector<8x256xi1>
      %489 = arith.andi %464, %488 : vector<8x256xi1>
      %cst_160 = arith.constant 0xFF800000 : f32
      %490 = vector.broadcast %cst_160 : f32 to vector<8x256xf32>
      %491 = arith.select %489, %483, %490 : vector<8x256xi1>, vector<8x256xf32>
      %492 = arith.maximumf %456, %491 : vector<8x256xf32>
      %493 = vector.extract_strided_slice %14 {offsets = [104, 0], sizes = [8, 256], strides = [1, 1]} : vector<128x256xf32> to vector<8x256xf32>
      %494 = vector.extract_strided_slice %15 {offsets = [104, 0], sizes = [8, 1], strides = [1, 1]} : vector<128x1xi32> to vector<8x1xi32>
      %495 = vector.broadcast %494 : vector<8x1xi32> to vector<8x256xi32>
      %496 = vector.broadcast %16 : vector<1x256xi32> to vector<8x256xi32>
      %497 = arith.cmpi eq, %495, %496 : vector<8x256xi32>
      %c104_i32 = arith.constant 104 : i32
      %498 = arith.addi %22, %c104_i32 : i32
      %499 = vector.broadcast %498 : i32 to vector<8x256xi32>
      %500 = arith.cmpi sgt, %19, %499 : vector<8x256xi32>
      %cst_161 = arith.constant 1.250000e+00 : f32
      %501 = vector.broadcast %cst_161 : f32 to vector<8x256xf32>
      %502 = arith.subf %501, %493 : vector<8x256xf32>
      %cst_162 = arith.constant 0.000000e+00 : f32
      %503 = vector.broadcast %cst_162 : f32 to vector<8x256xf32>
      %504 = arith.maximumf %502, %503 : vector<8x256xf32>
      %cst_163 = arith.constant 2.500000e-01 : f32
      %505 = vector.broadcast %cst_163 : f32 to vector<8x256xf32>
      %506 = arith.addf %493, %505 : vector<8x256xf32>
      %cst_164 = arith.constant 0.000000e+00 : f32
      %507 = vector.broadcast %cst_164 : f32 to vector<8x256xf32>
      %508 = arith.maximumf %506, %507 : vector<8x256xf32>
      %cst_165 = arith.constant -6.400000e+01 : f32
      %509 = vector.broadcast %cst_165 : f32 to vector<8x256xf32>
      %510 = arith.mulf %509, %504 : vector<8x256xf32>
      %cst_166 = arith.constant 7.500000e-01 : f32
      %511 = vector.broadcast %cst_166 : f32 to vector<8x256xf32>
      %512 = arith.subf %493, %511 : vector<8x256xf32>
      %513 = arith.mulf %510, %512 : vector<8x256xf32>
      %cst_167 = arith.constant 6.400000e+01 : f32
      %514 = vector.broadcast %cst_167 : f32 to vector<8x256xf32>
      %515 = arith.mulf %514, %508 : vector<8x256xf32>
      %cst_168 = arith.constant 2.500000e-01 : f32
      %516 = vector.broadcast %cst_168 : f32 to vector<8x256xf32>
      %517 = arith.subf %493, %516 : vector<8x256xf32>
      %518 = arith.mulf %515, %517 : vector<8x256xf32>
      %519 = arith.select %497, %513, %518 : vector<8x256xi1>, vector<8x256xf32>
      %520 = arith.andi %500, %497 : vector<8x256xi1>
      %cst_169 = arith.constant 0xFF800000 : f32
      %521 = vector.broadcast %cst_169 : f32 to vector<8x256xf32>
      %522 = arith.select %520, %519, %521 : vector<8x256xi1>, vector<8x256xf32>
      %523 = arith.maximumf %487, %522 : vector<8x256xf32>
      %cst_170 = arith.constant dense<true> : vector<8x256xi1>
      %524 = arith.xori %497, %cst_170 : vector<8x256xi1>
      %525 = arith.andi %500, %524 : vector<8x256xi1>
      %cst_171 = arith.constant 0xFF800000 : f32
      %526 = vector.broadcast %cst_171 : f32 to vector<8x256xf32>
      %527 = arith.select %525, %519, %526 : vector<8x256xi1>, vector<8x256xf32>
      %528 = arith.maximumf %492, %527 : vector<8x256xf32>
      %529 = vector.extract_strided_slice %14 {offsets = [112, 0], sizes = [8, 256], strides = [1, 1]} : vector<128x256xf32> to vector<8x256xf32>
      %530 = vector.extract_strided_slice %15 {offsets = [112, 0], sizes = [8, 1], strides = [1, 1]} : vector<128x1xi32> to vector<8x1xi32>
      %531 = vector.broadcast %530 : vector<8x1xi32> to vector<8x256xi32>
      %532 = vector.broadcast %16 : vector<1x256xi32> to vector<8x256xi32>
      %533 = arith.cmpi eq, %531, %532 : vector<8x256xi32>
      %c112_i32 = arith.constant 112 : i32
      %534 = arith.addi %22, %c112_i32 : i32
      %535 = vector.broadcast %534 : i32 to vector<8x256xi32>
      %536 = arith.cmpi sgt, %19, %535 : vector<8x256xi32>
      %cst_172 = arith.constant 1.250000e+00 : f32
      %537 = vector.broadcast %cst_172 : f32 to vector<8x256xf32>
      %538 = arith.subf %537, %529 : vector<8x256xf32>
      %cst_173 = arith.constant 0.000000e+00 : f32
      %539 = vector.broadcast %cst_173 : f32 to vector<8x256xf32>
      %540 = arith.maximumf %538, %539 : vector<8x256xf32>
      %cst_174 = arith.constant 2.500000e-01 : f32
      %541 = vector.broadcast %cst_174 : f32 to vector<8x256xf32>
      %542 = arith.addf %529, %541 : vector<8x256xf32>
      %cst_175 = arith.constant 0.000000e+00 : f32
      %543 = vector.broadcast %cst_175 : f32 to vector<8x256xf32>
      %544 = arith.maximumf %542, %543 : vector<8x256xf32>
      %cst_176 = arith.constant -6.400000e+01 : f32
      %545 = vector.broadcast %cst_176 : f32 to vector<8x256xf32>
      %546 = arith.mulf %545, %540 : vector<8x256xf32>
      %cst_177 = arith.constant 7.500000e-01 : f32
      %547 = vector.broadcast %cst_177 : f32 to vector<8x256xf32>
      %548 = arith.subf %529, %547 : vector<8x256xf32>
      %549 = arith.mulf %546, %548 : vector<8x256xf32>
      %cst_178 = arith.constant 6.400000e+01 : f32
      %550 = vector.broadcast %cst_178 : f32 to vector<8x256xf32>
      %551 = arith.mulf %550, %544 : vector<8x256xf32>
      %cst_179 = arith.constant 2.500000e-01 : f32
      %552 = vector.broadcast %cst_179 : f32 to vector<8x256xf32>
      %553 = arith.subf %529, %552 : vector<8x256xf32>
      %554 = arith.mulf %551, %553 : vector<8x256xf32>
      %555 = arith.select %533, %549, %554 : vector<8x256xi1>, vector<8x256xf32>
      %556 = arith.andi %536, %533 : vector<8x256xi1>
      %cst_180 = arith.constant 0xFF800000 : f32
      %557 = vector.broadcast %cst_180 : f32 to vector<8x256xf32>
      %558 = arith.select %556, %555, %557 : vector<8x256xi1>, vector<8x256xf32>
      %559 = arith.maximumf %523, %558 : vector<8x256xf32>
      %cst_181 = arith.constant dense<true> : vector<8x256xi1>
      %560 = arith.xori %533, %cst_181 : vector<8x256xi1>
      %561 = arith.andi %536, %560 : vector<8x256xi1>
      %cst_182 = arith.constant 0xFF800000 : f32
      %562 = vector.broadcast %cst_182 : f32 to vector<8x256xf32>
      %563 = arith.select %561, %555, %562 : vector<8x256xi1>, vector<8x256xf32>
      %564 = arith.maximumf %528, %563 : vector<8x256xf32>
      %565 = vector.extract_strided_slice %14 {offsets = [120, 0], sizes = [8, 256], strides = [1, 1]} : vector<128x256xf32> to vector<8x256xf32>
      %566 = vector.extract_strided_slice %15 {offsets = [120, 0], sizes = [8, 1], strides = [1, 1]} : vector<128x1xi32> to vector<8x1xi32>
      %567 = vector.broadcast %566 : vector<8x1xi32> to vector<8x256xi32>
      %568 = vector.broadcast %16 : vector<1x256xi32> to vector<8x256xi32>
      %569 = arith.cmpi eq, %567, %568 : vector<8x256xi32>
      %c120_i32 = arith.constant 120 : i32
      %570 = arith.addi %22, %c120_i32 : i32
      %571 = vector.broadcast %570 : i32 to vector<8x256xi32>
      %572 = arith.cmpi sgt, %19, %571 : vector<8x256xi32>
      %cst_183 = arith.constant 1.250000e+00 : f32
      %573 = vector.broadcast %cst_183 : f32 to vector<8x256xf32>
      %574 = arith.subf %573, %565 : vector<8x256xf32>
      %cst_184 = arith.constant 0.000000e+00 : f32
      %575 = vector.broadcast %cst_184 : f32 to vector<8x256xf32>
      %576 = arith.maximumf %574, %575 : vector<8x256xf32>
      %cst_185 = arith.constant 2.500000e-01 : f32
      %577 = vector.broadcast %cst_185 : f32 to vector<8x256xf32>
      %578 = arith.addf %565, %577 : vector<8x256xf32>
      %cst_186 = arith.constant 0.000000e+00 : f32
      %579 = vector.broadcast %cst_186 : f32 to vector<8x256xf32>
      %580 = arith.maximumf %578, %579 : vector<8x256xf32>
      %cst_187 = arith.constant -6.400000e+01 : f32
      %581 = vector.broadcast %cst_187 : f32 to vector<8x256xf32>
      %582 = arith.mulf %581, %576 : vector<8x256xf32>
      %cst_188 = arith.constant 7.500000e-01 : f32
      %583 = vector.broadcast %cst_188 : f32 to vector<8x256xf32>
      %584 = arith.subf %565, %583 : vector<8x256xf32>
      %585 = arith.mulf %582, %584 : vector<8x256xf32>
      %cst_189 = arith.constant 6.400000e+01 : f32
      %586 = vector.broadcast %cst_189 : f32 to vector<8x256xf32>
      %587 = arith.mulf %586, %580 : vector<8x256xf32>
      %cst_190 = arith.constant 2.500000e-01 : f32
      %588 = vector.broadcast %cst_190 : f32 to vector<8x256xf32>
      %589 = arith.subf %565, %588 : vector<8x256xf32>
      %590 = arith.mulf %587, %589 : vector<8x256xf32>
      %591 = arith.select %569, %585, %590 : vector<8x256xi1>, vector<8x256xf32>
      %592 = arith.andi %572, %569 : vector<8x256xi1>
      %cst_191 = arith.constant 0xFF800000 : f32
      %593 = vector.broadcast %cst_191 : f32 to vector<8x256xf32>
      %594 = arith.select %592, %591, %593 : vector<8x256xi1>, vector<8x256xf32>
      %595 = arith.maximumf %559, %594 : vector<8x256xf32>
      %cst_192 = arith.constant dense<true> : vector<8x256xi1>
      %596 = arith.xori %569, %cst_192 : vector<8x256xi1>
      %597 = arith.andi %572, %596 : vector<8x256xi1>
      %cst_193 = arith.constant 0xFF800000 : f32
      %598 = vector.broadcast %cst_193 : f32 to vector<8x256xf32>
      %599 = arith.select %597, %591, %598 : vector<8x256xi1>, vector<8x256xf32>
      %600 = arith.maximumf %564, %599 : vector<8x256xf32>
      %cst_194 = arith.constant 0xFF800000 : f32
      %601 = vector.broadcast %cst_194 : f32 to vector<8x256xf32>
      %602 = arith.cmpf ogt, %595, %601 : vector<8x256xf32>
      %cst_195 = arith.constant 0.000000e+00 : f32
      %603 = vector.broadcast %cst_195 : f32 to vector<8x256xf32>
      %604 = arith.select %602, %595, %603 : vector<8x256xi1>, vector<8x256xf32>
      %cst_196 = arith.constant 0xFF800000 : f32
      %605 = vector.broadcast %cst_196 : f32 to vector<8x256xf32>
      %606 = arith.cmpf ogt, %600, %605 : vector<8x256xf32>
      %cst_197 = arith.constant 0.000000e+00 : f32
      %607 = vector.broadcast %cst_197 : f32 to vector<8x256xf32>
      %608 = arith.select %606, %600, %607 : vector<8x256xi1>, vector<8x256xf32>
      %c0_198 = arith.constant 0 : index
      %c0_199 = arith.constant 0 : index
      %609 = vector.load %arg11[%c0_198, %c0_199] : memref<8x256xf32, #tpu.memory_space<vmem>>, vector<8x256xf32>
      %610 = arith.subf %23, %604 : vector<8x256xf32>
      %611 = math.exp %610 : vector<8x256xf32>
      %612 = arith.mulf %609, %611 : vector<8x256xf32>
      %c0_200 = arith.constant 0 : index
      %c0_201 = arith.constant 0 : index
      %613 = vector.load %arg13[%c0_200, %c0_201] : memref<8x256xf32, #tpu.memory_space<vmem>>, vector<8x256xf32>
      %614 = arith.subf %24, %608 : vector<8x256xf32>
      %615 = math.exp %614 : vector<8x256xf32>
      %616 = arith.mulf %613, %615 : vector<8x256xf32>
      %617 = arith.select %29, %604, %608 : vector<8x256xi1>, vector<8x256xf32>
      %618 = arith.subf %51, %617 : vector<8x256xf32>
      %619 = math.exp %618 : vector<8x256xf32>
      %cst_202 = arith.constant 0.000000e+00 : f32
      %620 = vector.broadcast %cst_202 : f32 to vector<8x256xf32>
      %621 = arith.select %32, %619, %620 : vector<8x256xi1>, vector<8x256xf32>
      %cst_203 = arith.constant 0.000000e+00 : f32
      %622 = vector.broadcast %cst_203 : f32 to vector<8x256xf32>
      %623 = arith.select %29, %621, %622 : vector<8x256xi1>, vector<8x256xf32>
      %624 = arith.addf %612, %623 : vector<8x256xf32>
      %625 = arith.subf %621, %623 : vector<8x256xf32>
      %626 = arith.addf %616, %625 : vector<8x256xf32>
      %627 = arith.select %65, %604, %608 : vector<8x256xi1>, vector<8x256xf32>
      %628 = arith.subf %87, %627 : vector<8x256xf32>
      %629 = math.exp %628 : vector<8x256xf32>
      %cst_204 = arith.constant 0.000000e+00 : f32
      %630 = vector.broadcast %cst_204 : f32 to vector<8x256xf32>
      %631 = arith.select %68, %629, %630 : vector<8x256xi1>, vector<8x256xf32>
      %cst_205 = arith.constant 0.000000e+00 : f32
      %632 = vector.broadcast %cst_205 : f32 to vector<8x256xf32>
      %633 = arith.select %65, %631, %632 : vector<8x256xi1>, vector<8x256xf32>
      %634 = arith.addf %624, %633 : vector<8x256xf32>
      %635 = arith.subf %631, %633 : vector<8x256xf32>
      %636 = arith.addf %626, %635 : vector<8x256xf32>
      %637 = arith.select %101, %604, %608 : vector<8x256xi1>, vector<8x256xf32>
      %638 = arith.subf %123, %637 : vector<8x256xf32>
      %639 = math.exp %638 : vector<8x256xf32>
      %cst_206 = arith.constant 0.000000e+00 : f32
      %640 = vector.broadcast %cst_206 : f32 to vector<8x256xf32>
      %641 = arith.select %104, %639, %640 : vector<8x256xi1>, vector<8x256xf32>
      %cst_207 = arith.constant 0.000000e+00 : f32
      %642 = vector.broadcast %cst_207 : f32 to vector<8x256xf32>
      %643 = arith.select %101, %641, %642 : vector<8x256xi1>, vector<8x256xf32>
      %644 = arith.addf %634, %643 : vector<8x256xf32>
      %645 = arith.subf %641, %643 : vector<8x256xf32>
      %646 = arith.addf %636, %645 : vector<8x256xf32>
      %647 = arith.select %137, %604, %608 : vector<8x256xi1>, vector<8x256xf32>
      %648 = arith.subf %159, %647 : vector<8x256xf32>
      %649 = math.exp %648 : vector<8x256xf32>
      %cst_208 = arith.constant 0.000000e+00 : f32
      %650 = vector.broadcast %cst_208 : f32 to vector<8x256xf32>
      %651 = arith.select %140, %649, %650 : vector<8x256xi1>, vector<8x256xf32>
      %cst_209 = arith.constant 0.000000e+00 : f32
      %652 = vector.broadcast %cst_209 : f32 to vector<8x256xf32>
      %653 = arith.select %137, %651, %652 : vector<8x256xi1>, vector<8x256xf32>
      %654 = arith.addf %644, %653 : vector<8x256xf32>
      %655 = arith.subf %651, %653 : vector<8x256xf32>
      %656 = arith.addf %646, %655 : vector<8x256xf32>
      %657 = arith.select %173, %604, %608 : vector<8x256xi1>, vector<8x256xf32>
      %658 = arith.subf %195, %657 : vector<8x256xf32>
      %659 = math.exp %658 : vector<8x256xf32>
      %cst_210 = arith.constant 0.000000e+00 : f32
      %660 = vector.broadcast %cst_210 : f32 to vector<8x256xf32>
      %661 = arith.select %176, %659, %660 : vector<8x256xi1>, vector<8x256xf32>
      %cst_211 = arith.constant 0.000000e+00 : f32
      %662 = vector.broadcast %cst_211 : f32 to vector<8x256xf32>
      %663 = arith.select %173, %661, %662 : vector<8x256xi1>, vector<8x256xf32>
      %664 = arith.addf %654, %663 : vector<8x256xf32>
      %665 = arith.subf %661, %663 : vector<8x256xf32>
      %666 = arith.addf %656, %665 : vector<8x256xf32>
      %667 = arith.select %209, %604, %608 : vector<8x256xi1>, vector<8x256xf32>
      %668 = arith.subf %231, %667 : vector<8x256xf32>
      %669 = math.exp %668 : vector<8x256xf32>
      %cst_212 = arith.constant 0.000000e+00 : f32
      %670 = vector.broadcast %cst_212 : f32 to vector<8x256xf32>
      %671 = arith.select %212, %669, %670 : vector<8x256xi1>, vector<8x256xf32>
      %cst_213 = arith.constant 0.000000e+00 : f32
      %672 = vector.broadcast %cst_213 : f32 to vector<8x256xf32>
      %673 = arith.select %209, %671, %672 : vector<8x256xi1>, vector<8x256xf32>
      %674 = arith.addf %664, %673 : vector<8x256xf32>
      %675 = arith.subf %671, %673 : vector<8x256xf32>
      %676 = arith.addf %666, %675 : vector<8x256xf32>
      %677 = arith.select %245, %604, %608 : vector<8x256xi1>, vector<8x256xf32>
      %678 = arith.subf %267, %677 : vector<8x256xf32>
      %679 = math.exp %678 : vector<8x256xf32>
      %cst_214 = arith.constant 0.000000e+00 : f32
      %680 = vector.broadcast %cst_214 : f32 to vector<8x256xf32>
      %681 = arith.select %248, %679, %680 : vector<8x256xi1>, vector<8x256xf32>
      %cst_215 = arith.constant 0.000000e+00 : f32
      %682 = vector.broadcast %cst_215 : f32 to vector<8x256xf32>
      %683 = arith.select %245, %681, %682 : vector<8x256xi1>, vector<8x256xf32>
      %684 = arith.addf %674, %683 : vector<8x256xf32>
      %685 = arith.subf %681, %683 : vector<8x256xf32>
      %686 = arith.addf %676, %685 : vector<8x256xf32>
      %687 = arith.select %281, %604, %608 : vector<8x256xi1>, vector<8x256xf32>
      %688 = arith.subf %303, %687 : vector<8x256xf32>
      %689 = math.exp %688 : vector<8x256xf32>
      %cst_216 = arith.constant 0.000000e+00 : f32
      %690 = vector.broadcast %cst_216 : f32 to vector<8x256xf32>
      %691 = arith.select %284, %689, %690 : vector<8x256xi1>, vector<8x256xf32>
      %cst_217 = arith.constant 0.000000e+00 : f32
      %692 = vector.broadcast %cst_217 : f32 to vector<8x256xf32>
      %693 = arith.select %281, %691, %692 : vector<8x256xi1>, vector<8x256xf32>
      %694 = arith.addf %684, %693 : vector<8x256xf32>
      %695 = arith.subf %691, %693 : vector<8x256xf32>
      %696 = arith.addf %686, %695 : vector<8x256xf32>
      %697 = arith.select %317, %604, %608 : vector<8x256xi1>, vector<8x256xf32>
      %698 = arith.subf %339, %697 : vector<8x256xf32>
      %699 = math.exp %698 : vector<8x256xf32>
      %cst_218 = arith.constant 0.000000e+00 : f32
      %700 = vector.broadcast %cst_218 : f32 to vector<8x256xf32>
      %701 = arith.select %320, %699, %700 : vector<8x256xi1>, vector<8x256xf32>
      %cst_219 = arith.constant 0.000000e+00 : f32
      %702 = vector.broadcast %cst_219 : f32 to vector<8x256xf32>
      %703 = arith.select %317, %701, %702 : vector<8x256xi1>, vector<8x256xf32>
      %704 = arith.addf %694, %703 : vector<8x256xf32>
      %705 = arith.subf %701, %703 : vector<8x256xf32>
      %706 = arith.addf %696, %705 : vector<8x256xf32>
      %707 = arith.select %353, %604, %608 : vector<8x256xi1>, vector<8x256xf32>
      %708 = arith.subf %375, %707 : vector<8x256xf32>
      %709 = math.exp %708 : vector<8x256xf32>
      %cst_220 = arith.constant 0.000000e+00 : f32
      %710 = vector.broadcast %cst_220 : f32 to vector<8x256xf32>
      %711 = arith.select %356, %709, %710 : vector<8x256xi1>, vector<8x256xf32>
      %cst_221 = arith.constant 0.000000e+00 : f32
      %712 = vector.broadcast %cst_221 : f32 to vector<8x256xf32>
      %713 = arith.select %353, %711, %712 : vector<8x256xi1>, vector<8x256xf32>
      %714 = arith.addf %704, %713 : vector<8x256xf32>
      %715 = arith.subf %711, %713 : vector<8x256xf32>
      %716 = arith.addf %706, %715 : vector<8x256xf32>
      %717 = arith.select %389, %604, %608 : vector<8x256xi1>, vector<8x256xf32>
      %718 = arith.subf %411, %717 : vector<8x256xf32>
      %719 = math.exp %718 : vector<8x256xf32>
      %cst_222 = arith.constant 0.000000e+00 : f32
      %720 = vector.broadcast %cst_222 : f32 to vector<8x256xf32>
      %721 = arith.select %392, %719, %720 : vector<8x256xi1>, vector<8x256xf32>
      %cst_223 = arith.constant 0.000000e+00 : f32
      %722 = vector.broadcast %cst_223 : f32 to vector<8x256xf32>
      %723 = arith.select %389, %721, %722 : vector<8x256xi1>, vector<8x256xf32>
      %724 = arith.addf %714, %723 : vector<8x256xf32>
      %725 = arith.subf %721, %723 : vector<8x256xf32>
      %726 = arith.addf %716, %725 : vector<8x256xf32>
      %727 = arith.select %425, %604, %608 : vector<8x256xi1>, vector<8x256xf32>
      %728 = arith.subf %447, %727 : vector<8x256xf32>
      %729 = math.exp %728 : vector<8x256xf32>
      %cst_224 = arith.constant 0.000000e+00 : f32
      %730 = vector.broadcast %cst_224 : f32 to vector<8x256xf32>
      %731 = arith.select %428, %729, %730 : vector<8x256xi1>, vector<8x256xf32>
      %cst_225 = arith.constant 0.000000e+00 : f32
      %732 = vector.broadcast %cst_225 : f32 to vector<8x256xf32>
      %733 = arith.select %425, %731, %732 : vector<8x256xi1>, vector<8x256xf32>
      %734 = arith.addf %724, %733 : vector<8x256xf32>
      %735 = arith.subf %731, %733 : vector<8x256xf32>
      %736 = arith.addf %726, %735 : vector<8x256xf32>
      %737 = arith.select %461, %604, %608 : vector<8x256xi1>, vector<8x256xf32>
      %738 = arith.subf %483, %737 : vector<8x256xf32>
      %739 = math.exp %738 : vector<8x256xf32>
      %cst_226 = arith.constant 0.000000e+00 : f32
      %740 = vector.broadcast %cst_226 : f32 to vector<8x256xf32>
      %741 = arith.select %464, %739, %740 : vector<8x256xi1>, vector<8x256xf32>
      %cst_227 = arith.constant 0.000000e+00 : f32
      %742 = vector.broadcast %cst_227 : f32 to vector<8x256xf32>
      %743 = arith.select %461, %741, %742 : vector<8x256xi1>, vector<8x256xf32>
      %744 = arith.addf %734, %743 : vector<8x256xf32>
      %745 = arith.subf %741, %743 : vector<8x256xf32>
      %746 = arith.addf %736, %745 : vector<8x256xf32>
      %747 = arith.select %497, %604, %608 : vector<8x256xi1>, vector<8x256xf32>
      %748 = arith.subf %519, %747 : vector<8x256xf32>
      %749 = math.exp %748 : vector<8x256xf32>
      %cst_228 = arith.constant 0.000000e+00 : f32
      %750 = vector.broadcast %cst_228 : f32 to vector<8x256xf32>
      %751 = arith.select %500, %749, %750 : vector<8x256xi1>, vector<8x256xf32>
      %cst_229 = arith.constant 0.000000e+00 : f32
      %752 = vector.broadcast %cst_229 : f32 to vector<8x256xf32>
      %753 = arith.select %497, %751, %752 : vector<8x256xi1>, vector<8x256xf32>
      %754 = arith.addf %744, %753 : vector<8x256xf32>
      %755 = arith.subf %751, %753 : vector<8x256xf32>
      %756 = arith.addf %746, %755 : vector<8x256xf32>
      %757 = arith.select %533, %604, %608 : vector<8x256xi1>, vector<8x256xf32>
      %758 = arith.subf %555, %757 : vector<8x256xf32>
      %759 = math.exp %758 : vector<8x256xf32>
      %cst_230 = arith.constant 0.000000e+00 : f32
      %760 = vector.broadcast %cst_230 : f32 to vector<8x256xf32>
      %761 = arith.select %536, %759, %760 : vector<8x256xi1>, vector<8x256xf32>
      %cst_231 = arith.constant 0.000000e+00 : f32
      %762 = vector.broadcast %cst_231 : f32 to vector<8x256xf32>
      %763 = arith.select %533, %761, %762 : vector<8x256xi1>, vector<8x256xf32>
      %764 = arith.addf %754, %763 : vector<8x256xf32>
      %765 = arith.subf %761, %763 : vector<8x256xf32>
      %766 = arith.addf %756, %765 : vector<8x256xf32>
      %767 = arith.select %569, %604, %608 : vector<8x256xi1>, vector<8x256xf32>
      %768 = arith.subf %591, %767 : vector<8x256xf32>
      %769 = math.exp %768 : vector<8x256xf32>
      %cst_232 = arith.constant 0.000000e+00 : f32
      %770 = vector.broadcast %cst_232 : f32 to vector<8x256xf32>
      %771 = arith.select %572, %769, %770 : vector<8x256xi1>, vector<8x256xf32>
      %cst_233 = arith.constant 0.000000e+00 : f32
      %772 = vector.broadcast %cst_233 : f32 to vector<8x256xf32>
      %773 = arith.select %569, %771, %772 : vector<8x256xi1>, vector<8x256xf32>
      %774 = arith.addf %764, %773 : vector<8x256xf32>
      %775 = arith.subf %771, %773 : vector<8x256xf32>
      %776 = arith.addf %766, %775 : vector<8x256xf32>
      %c0_234 = arith.constant 0 : index
      %c0_235 = arith.constant 0 : index
      %777 = vector.load %arg11[%c0_234, %c0_235] : memref<8x256xf32, #tpu.memory_space<vmem>>, vector<8x256xf32>
      tpu.vector_store %arg11[%c0_234, %c0_235], %774 {strides = array<i32>} : memref<8x256xf32, #tpu.memory_space<vmem>>, vector<8x256xf32>,
      %c0_236 = arith.constant 0 : index
      %c0_237 = arith.constant 0 : index
      %778 = vector.load %arg13[%c0_236, %c0_237] : memref<8x256xf32, #tpu.memory_space<vmem>>, vector<8x256xf32>
      tpu.vector_store %arg13[%c0_236, %c0_237], %776 {strides = array<i32>} : memref<8x256xf32, #tpu.memory_space<vmem>>, vector<8x256xf32>,
      %c0_238 = arith.constant 0 : index
      %c0_239 = arith.constant 0 : index
      %779 = vector.load %arg10[%c0_238, %c0_239] : memref<8x256xf32, #tpu.memory_space<vmem>>, vector<8x256xf32>
      tpu.vector_store %arg10[%c0_238, %c0_239], %595 {strides = array<i32>} : memref<8x256xf32, #tpu.memory_space<vmem>>, vector<8x256xf32>,
      %c0_240 = arith.constant 0 : index
      %c0_241 = arith.constant 0 : index
      %780 = vector.load %arg12[%c0_240, %c0_241] : memref<8x256xf32, #tpu.memory_space<vmem>>, vector<8x256xf32>
      tpu.vector_store %arg12[%c0_240, %c0_241], %600 {strides = array<i32>} : memref<8x256xf32, #tpu.memory_space<vmem>>, vector<8x256xf32>,
    } else {
    }
    %c0_i32_2 = arith.constant 0 : i32
    %9 = arith.cmpi eq, %arg1, %c0_i32_2 : i32
    %10 = arith.extui %9 : i1 to i32
    %c0_i32_3 = arith.constant 0 : i32
    %11 = arith.cmpi ne, %10, %c0_i32_3 : i32
    scf.if %11 {
      %c0 = arith.constant 0 : index
      %c0_4 = arith.constant 0 : index
      %12 = vector.load %arg10[%c0, %c0_4] : memref<8x256xf32, #tpu.memory_space<vmem>>, vector<8x256xf32>
      %c0_5 = arith.constant 0 : index
      %c0_6 = arith.constant 0 : index
      %13 = vector.load %arg6[%c0_5, %c0_6] : memref<8x256xf32, #tpu.memory_space<vmem>>, vector<8x256xf32>
      tpu.vector_store %arg6[%c0_5, %c0_6], %12 {strides = array<i32>} : memref<8x256xf32, #tpu.memory_space<vmem>>, vector<8x256xf32>,
      %c0_7 = arith.constant 0 : index
      %c0_8 = arith.constant 0 : index
      %14 = vector.load %arg11[%c0_7, %c0_8] : memref<8x256xf32, #tpu.memory_space<vmem>>, vector<8x256xf32>
      %c0_9 = arith.constant 0 : index
      %c0_10 = arith.constant 0 : index
      %15 = vector.load %arg7[%c0_9, %c0_10] : memref<8x256xf32, #tpu.memory_space<vmem>>, vector<8x256xf32>
      tpu.vector_store %arg7[%c0_9, %c0_10], %14 {strides = array<i32>} : memref<8x256xf32, #tpu.memory_space<vmem>>, vector<8x256xf32>,
      %c0_11 = arith.constant 0 : index
      %c0_12 = arith.constant 0 : index
      %16 = vector.load %arg12[%c0_11, %c0_12] : memref<8x256xf32, #tpu.memory_space<vmem>>, vector<8x256xf32>
      %c0_13 = arith.constant 0 : index
      %c0_14 = arith.constant 0 : index
      %17 = vector.load %arg8[%c0_13, %c0_14] : memref<8x256xf32, #tpu.memory_space<vmem>>, vector<8x256xf32>
      tpu.vector_store %arg8[%c0_13, %c0_14], %16 {strides = array<i32>} : memref<8x256xf32, #tpu.memory_space<vmem>>, vector<8x256xf32>,
      %c0_15 = arith.constant 0 : index
      %c0_16 = arith.constant 0 : index
      %18 = vector.load %arg13[%c0_15, %c0_16] : memref<8x256xf32, #tpu.memory_space<vmem>>, vector<8x256xf32>
      %c0_17 = arith.constant 0 : index
      %c0_18 = arith.constant 0 : index
      %19 = vector.load %arg9[%c0_17, %c0_18] : memref<8x256xf32, #tpu.memory_space<vmem>>, vector<8x256xf32>
      tpu.vector_store %arg9[%c0_17, %c0_18], %18 {strides = array<i32>} : memref<8x256xf32, #tpu.memory_space<vmem>>, vector<8x256xf32>,
    } else {
    }
    return
  }
  func.func @transform_0(%arg0: i32, %arg1: i32) -> (i32, i32) {
    %c0_i32 = arith.constant 0 : i32
    %c0_i32_0 = arith.constant 0 : i32
    return %arg0, %c0_i32 : i32, i32
  }
  func.func @transform_1(%arg0: i32, %arg1: i32) -> (i32, i32) {
    %c0_i32 = arith.constant 0 : i32
    %c0_i32_0 = arith.constant 0 : i32
    return %c0_i32, %arg1 : i32, i32
  }
  func.func @transform_2(%arg0: i32, %arg1: i32) -> (i32, i32) {
    %c0_i32 = arith.constant 0 : i32
    %c0_i32_0 = arith.constant 0 : i32
    return %arg0, %c0_i32 : i32, i32
  }
  func.func @transform_3(%arg0: i32, %arg1: i32) -> (i32, i32) {
    %c0_i32 = arith.constant 0 : i32
    %c0_i32_0 = arith.constant 0 : i32
    return %c0_i32, %arg1 : i32, i32
  }
  func.func @transform_4(%arg0: i32, %arg1: i32) -> (i32, i32) {
    %c0_i32 = arith.constant 0 : i32
    %c0_i32_0 = arith.constant 0 : i32
    return %arg0, %c0_i32 : i32, i32
  }
  func.func @transform_5(%arg0: i32, %arg1: i32) -> (i32, i32) {
    %c0_i32 = arith.constant 0 : i32
    %c0_i32_0 = arith.constant 0 : i32
    return %arg0, %c0_i32 : i32, i32
  }
  func.func @transform_6(%arg0: i32, %arg1: i32) -> (i32, i32) {
    %c0_i32 = arith.constant 0 : i32
    %c0_i32_0 = arith.constant 0 : i32
    return %arg0, %c0_i32 : i32, i32
  }
  func.func @transform_7(%arg0: i32, %arg1: i32) -> (i32, i32) {
    %c0_i32 = arith.constant 0 : i32
    %c0_i32_0 = arith.constant 0 : i32
    return %arg0, %c0_i32 : i32, i32
  }
}

</mosaic_0001>

<llo_original>
// kernel: circle_loss_pallas.1
$region0: #{circle_loss_pallas.1}
  #allocation0 [shape = 'u32[]', space=smem, size = 0x4, offset = 0x4, fixed_abs, tag = 'smem constant byte address 0x4 - core index']
  #allocation1 [shape = 'u32[144,128]{1,0:T(1,128)}', space=vmem, size = 0x12000, scoped, tag = 'internal scratch']
  #allocation2 [shape = 'f32[8,256]{1,0:T(8,128)}', space=vmem, size = 0x2000, scoped, tag = 'scratch operand']
  #allocation3 [shape = 'f32[8,256]{1,0:T(8,128)}', space=vmem, size = 0x2000, scoped, tag = 'scratch operand']
  #allocation4 [shape = 'f32[8,256]{1,0:T(8,128)}', space=vmem, size = 0x2000, scoped, tag = 'scratch operand']
  #allocation5 [shape = 'f32[8,256]{1,0:T(8,128)}', space=vmem, size = 0x2000, scoped, tag = 'scratch operand']
  %s0 = inlined_call_operand.vmem [shape: f32[256,32], index: 0, kind: input, shape index: {}]
  %s1 = inlined_call_operand.vmem [shape: f32[32,256], index: 1, kind: input, shape index: {}]
  %s2 = inlined_call_operand.vmem [shape: s32[256,1], index: 2, kind: input, shape index: {}]
  %s3 = inlined_call_operand.vmem [shape: s32[1,256], index: 3, kind: input, shape index: {}]
  %s4 = inlined_call_operand.vmem [shape: f32[16,256], index: 4, kind: output, shape index: {0}]
  %s5 = inlined_call_operand.vmem [shape: f32[16,256], index: 5, kind: output, shape index: {1}]
  %s6 = inlined_call_operand.vmem [shape: f32[16,256], index: 6, kind: output, shape index: {2}]
  %s7 = inlined_call_operand.vmem [shape: f32[16,256], index: 7, kind: output, shape index: {3}]
  %8 = xla_tuple %s4, %s5, %s6, %s7
  %s9 = sld [smem:[#allocation0]]
  $region85: #{circle_loss_pallas.1} parent=0
    _
  %s11 = ssub.s32 1, %s9
  %s12 = scalar_select 0, %s11, %s9
  loop: start=0, step=1, limit=4
  $region2: #{circle_loss_pallas.1} parent=0 // loop_pre_header
    _
  $region3: #{circle_loss_pallas.1} parent=0 // loop_header
    %s14 = sphi 0, %s18
    %p15 = scmp.ge.s32.totalorder %s14, 4
    %s21 = sphi 0, %s33
    %s22 = sphi 0, %s29
    %s23 = sphi 0, %s21
    %s24 = sphi 0, %s22
    %s25 = sphi 0, %s23
    %s26 = sphi 0, %s24
    %s36 = sphi 0, %s38
    %s39 = sphi 0, %s36
    %s40 = sphi 0, %s39
    %s56 = sphi 0, %s40
    %s62 = sphi 0, %s64
    %s65 = sphi 0, %s62
    %s66 = sphi 0, %s65
    %s82 = sphi 0, %s66
    %s88 = sphi 0, %s90
    %s91 = sphi 0, %s88
    %s92 = sphi 0, %s91
    %s108 = sphi 0, %s92
    %s114 = sphi 0, %s116
    %s117 = sphi 0, %s114
    %s118 = sphi 0, %s117
    %s134 = sphi 0, %s118
    %s140 = sphi 0, %s142
    %s143 = sphi 0, %s140
    %s144 = sphi 0, %s143
    %s160 = sphi 0, %s144
    %s166 = sphi 0, %s168
    %s169 = sphi 0, %s166
    %s170 = sphi 0, %s169
    %s186 = sphi 0, %s170
    %s192 = sphi 0, %s194
    %s195 = sphi 0, %s192
    %s196 = sphi 0, %s195
    %s212 = sphi 0, %s196
    %s218 = sphi 0, %s220
    %s221 = sphi 0, %s218
    %s222 = sphi 0, %s221
    %s238 = sphi 0, %s222
  $region4: #{circle_loss_pallas.1} parent=0 // loop_header_branch
    %17 = sbr.rel (%p15) target = $region8
  $region5: #{circle_loss_pallas.1} parent=0 // loop_body
    %s19 = ssub.s32 %s14, 1
    %s20 = ssub.s32 %s14, 2
    %s27 = sadd.s32 1, %s22
    %p28 = scmp.ge.s32.totalorder %s27, 1
    %s29 = scalar_select %p28, 0, %s27
    %s30 = sadd.s32 1, %s21
    %s31 = scalar_select %p28, %s30, %s21
    %p32 = scmp.ge.s32.totalorder %s31, 2
    %s33 = scalar_select %p32, 0, %s31
    %s34 = ssub.s32 %s21, %s33
    %p35 = scmp.eq.s32.totalorder %s34, 0
    %s37 = sadd.s32 %s36, 1
    %s38 = scalar_select %p35, %s36, %s37
    %p41 = pneg %p35
    %p42 = scmp.eq.s32.totalorder %s14, 1
    %p43 = por %p41, %p42
    %p44 = scmp.ne.s32.totalorder %s36, %s39
    %p45 = scmp.eq.s32.totalorder %s14, 0
    %p46 = por %p44, %p45
    %p47 = scmp.ne.s32.totalorder %s36, %s39
    %p48 = scmp.eq.s32.totalorder %s19, 1
    %p49 = por %p47, %p48
    %p50 = scmp.ne.s32.totalorder %s39, %s40
    %p51 = scmp.eq.s32.totalorder %s19, 0
    %p52 = por %p50, %p51
    %p53 = scmp.ne.s32.totalorder %s39, %s40
    %p54 = scmp.eq.s32.totalorder %s20, 1
    %p55 = por %p53, %p54
    %p57 = scmp.ne.s32.totalorder %s40, %s56
    %p58 = scmp.eq.s32.totalorder %s20, 0
    %p59 = por %p57, %p58
    %s60 = ssub.s32 %s22, %s29
    %p61 = scmp.eq.s32.totalorder %s60, 0
    %s63 = sadd.s32 %s62, 1
    %s64 = scalar_select %p61, %s62, %s63
    %p67 = pneg %p61
    %p68 = scmp.eq.s32.totalorder %s14, 1
    %p69 = por %p67, %p68
    %p70 = scmp.ne.s32.totalorder %s62, %s65
    %p71 = scmp.eq.s32.totalorder %s14, 0
    %p72 = por %p70, %p71
    %p73 = scmp.ne.s32.totalorder %s62, %s65
    %p74 = scmp.eq.s32.totalorder %s19, 1
    %p75 = por %p73, %p74
    %p76 = scmp.ne.s32.totalorder %s65, %s66
    %p77 = scmp.eq.s32.totalorder %s19, 0
    %p78 = por %p76, %p77
    %p79 = scmp.ne.s32.totalorder %s65, %s66
    %p80 = scmp.eq.s32.totalorder %s20, 1
    %p81 = por %p79, %p80
    %p83 = scmp.ne.s32.totalorder %s66, %s82
    %p84 = scmp.eq.s32.totalorder %s20, 0
    %p85 = por %p83, %p84
    %s86 = ssub.s32 %s21, %s33
    %p87 = scmp.eq.s32.totalorder %s86, 0
    %s89 = sadd.s32 %s88, 1
    %s90 = scalar_select %p87, %s88, %s89
    %p93 = pneg %p87
    %p94 = scmp.eq.s32.totalorder %s14, 1
    %p95 = por %p93, %p94
    %p96 = scmp.ne.s32.totalorder %s88, %s91
    %p97 = scmp.eq.s32.totalorder %s14, 0
    %p98 = por %p96, %p97
    %p99 = scmp.ne.s32.totalorder %s88, %s91
    %p100 = scmp.eq.s32.totalorder %s19, 1
    %p101 = por %p99, %p100
    %p102 = scmp.ne.s32.totalorder %s91, %s92
    %p103 = scmp.eq.s32.totalorder %s19, 0
    %p104 = por %p102, %p103
    %p105 = scmp.ne.s32.totalorder %s91, %s92
    %p106 = scmp.eq.s32.totalorder %s20, 1
    %p107 = por %p105, %p106
    %p109 = scmp.ne.s32.totalorder %s92, %s108
    %p110 = scmp.eq.s32.totalorder %s20, 0
    %p111 = por %p109, %p110
    %s112 = ssub.s32 %s22, %s29
    %p113 = scmp.eq.s32.totalorder %s112, 0
    %s115 = sadd.s32 %s114, 1
    %s116 = scalar_select %p113, %s114, %s115
    %p119 = pneg %p113
    %p120 = scmp.eq.s32.totalorder %s14, 1
    %p121 = por %p119, %p120
    %p122 = scmp.ne.s32.totalorder %s114, %s117
    %p123 = scmp.eq.s32.totalorder %s14, 0
    %p124 = por %p122, %p123
    %p125 = scmp.ne.s32.totalorder %s114, %s117
    %p126 = scmp.eq.s32.totalorder %s19, 1
    %p127 = por %p125, %p126
    %p128 = scmp.ne.s32.totalorder %s117, %s118
    %p129 = scmp.eq.s32.totalorder %s19, 0
    %p130 = por %p128, %p129
    %p131 = scmp.ne.s32.totalorder %s117, %s118
    %p132 = scmp.eq.s32.totalorder %s20, 1
    %p133 = por %p131, %p132
    %p135 = scmp.ne.s32.totalorder %s118, %s134
    %p136 = scmp.eq.s32.totalorder %s20, 0
    %p137 = por %p135, %p136
    %s138 = ssub.s32 %s21, %s33
    %p139 = scmp.eq.s32.totalorder %s138, 0
    %s141 = sadd.s32 %s140, 1
    %s142 = scalar_select %p139, %s140, %s141
    %p145 = pneg %p139
    %p146 = scmp.eq.s32.totalorder %s14, 1
    %p147 = por %p145, %p146
    %p148 = scmp.ne.s32.totalorder %s140, %s143
    %p149 = scmp.eq.s32.totalorder %s14, 0
    %p150 = por %p148, %p149
    %p151 = scmp.ne.s32.totalorder %s140, %s143
    %p152 = scmp.eq.s32.totalorder %s19, 1
    %p153 = por %p151, %p152
    %p154 = scmp.ne.s32.totalorder %s143, %s144
    %p155 = scmp.eq.s32.totalorder %s19, 0
    %p156 = por %p154, %p155
    %p157 = scmp.ne.s32.totalorder %s143, %s144
    %p158 = scmp.eq.s32.totalorder %s20, 1
    %p159 = por %p157, %p158
    %p161 = scmp.ne.s32.totalorder %s144, %s160
    %p162 = scmp.eq.s32.totalorder %s20, 0
    %p163 = por %p161, %p162
    %s164 = ssub.s32 %s21, %s33
    %p165 = scmp.eq.s32.totalorder %s164, 0
    %s167 = sadd.s32 %s166, 1
    %s168 = scalar_select %p165, %s166, %s167
    %p171 = pneg %p165
    %p172 = scmp.eq.s32.totalorder %s14, 1
    %p173 = por %p171, %p172
    %p174 = scmp.ne.s32.totalorder %s166, %s169
    %p175 = scmp.eq.s32.totalorder %s14, 0
    %p176 = por %p174, %p175
    %p177 = scmp.ne.s32.totalorder %s166, %s169
    %p178 = scmp.eq.s32.totalorder %s19, 1
    %p179 = por %p177, %p178
    %p180 = scmp.ne.s32.totalorder %s169, %s170
    %p181 = scmp.eq.s32.totalorder %s19, 0
    %p182 = por %p180, %p181
    %p183 = scmp.ne.s32.totalorder %s169, %s170
    %p184 = scmp.eq.s32.totalorder %s20, 1
    %p185 = por %p183, %p184
    %p187 = scmp.ne.s32.totalorder %s170, %s186
    %p188 = scmp.eq.s32.totalorder %s20, 0
    %p189 = por %p187, %p188
    %s190 = ssub.s32 %s21, %s33
    %p191 = scmp.eq.s32.totalorder %s190, 0
    %s193 = sadd.s32 %s192, 1
    %s194 = scalar_select %p191, %s192, %s193
    %p197 = pneg %p191
    %p198 = scmp.eq.s32.totalorder %s14, 1
    %p199 = por %p197, %p198
    %p200 = scmp.ne.s32.totalorder %s192, %s195
    %p201 = scmp.eq.s32.totalorder %s14, 0
    %p202 = por %p200, %p201
    %p203 = scmp.ne.s32.totalorder %s192, %s195
    %p204 = scmp.eq.s32.totalorder %s19, 1
    %p205 = por %p203, %p204
    %p206 = scmp.ne.s32.totalorder %s195, %s196
    %p207 = scmp.eq.s32.totalorder %s19, 0
    %p208 = por %p206, %p207
    %p209 = scmp.ne.s32.totalorder %s195, %s196
    %p210 = scmp.eq.s32.totalorder %s20, 1
    %p211 = por %p209, %p210
    %p213 = scmp.ne.s32.totalorder %s196, %s212
    %p214 = scmp.eq.s32.totalorder %s20, 0
    %p215 = por %p213, %p214
    %s216 = ssub.s32 %s21, %s33
    %p217 = scmp.eq.s32.totalorder %s216, 0
    %s219 = sadd.s32 %s218, 1
    %s220 = scalar_select %p217, %s218, %s219
    %p223 = pneg %p217
    %p224 = scmp.eq.s32.totalorder %s14, 1
    %p225 = por %p223, %p224
    %p226 = scmp.ne.s32.totalorder %s218, %s221
    %p227 = scmp.eq.s32.totalorder %s14, 0
    %p228 = por %p226, %p227
    %p229 = scmp.ne.s32.totalorder %s218, %s221
    %p230 = scmp.eq.s32.totalorder %s19, 1
    %p231 = por %p229, %p230
    %p232 = scmp.ne.s32.totalorder %s221, %s222
    %p233 = scmp.eq.s32.totalorder %s19, 0
    %p234 = por %p232, %p233
    %p235 = scmp.ne.s32.totalorder %s221, %s222
    %p236 = scmp.eq.s32.totalorder %s20, 1
    %p237 = por %p235, %p236
    %p239 = scmp.ne.s32.totalorder %s222, %s238
    %p240 = scmp.eq.s32.totalorder %s20, 0
    %p241 = por %p239, %p240
    %p242 = scmp.le.s32.totalorder 1, %s14
    %p243 = scmp.lt.s32.totalorder %s14, 3
    %p244 = pnand %p242, %p243
    %p245 = pneg %p244
    // Predicated region
    $region9: #{circle_loss_pallas.1} parent=5 // pred_check
      _
    $region10: #{circle_loss_pallas.1} parent=5 // pred_check_branch
      %247 = sbr.rel (%p244) target = $region12
    $region11: #{circle_loss_pallas.1} parent=5 // pred_region
      %s248 = ssub.s32 %s14, 1
      // Predicated region
      $region13: #{circle_loss_pallas.1} parent=11 // pred_check
        %p249 = pneg %p78
      $region14: #{circle_loss_pallas.1} parent=11 // pred_check_branch
        %251 = sbr.rel (%p249) target = $region16
      $region15: #{circle_loss_pallas.1} parent=11 // pred_region
        %s252 = smul.u32 2, %s24
        %p253 = scmp.lt.s32.totalorder %s252, 1
        %s254 = scalar_select %p253, %s252, 1
        %s255 = smul.addr %s254, 8
        %s256 = scalar_lea.vmem %s1, %s255
        %s257 = smul.u32 2, %s24
      $region16: #{circle_loss_pallas.1} parent=11 // pred_fallthru
        _
      // Predicated region
      $region17: #{circle_loss_pallas.1} parent=11 // pred_check
        %p258 = pneg %p130
      $region18: #{circle_loss_pallas.1} parent=11 // pred_check_branch
        %260 = sbr.rel (%p258) target = $region20
      $region19: #{circle_loss_pallas.1} parent=11 // pred_region
        %s261 = smul.u32 2, %s24
        %p262 = scmp.lt.s32.totalorder %s261, 1
        %s263 = scalar_select %p262, %s261, 1
        %s264 = scalar_lea.vmem %s3, %s263
        %s265 = smul.u32 2, %s24
      $region20: #{circle_loss_pallas.1} parent=11 // pred_fallthru
        _
    $region12: #{circle_loss_pallas.1} parent=5 // pred_fallthru
      _
    %p266 = scmp.lt.s32.totalorder %s14, 2
    // Predicated region
    $region21: #{circle_loss_pallas.1} parent=5 // pred_check
      %p267 = pneg %p266
    $region22: #{circle_loss_pallas.1} parent=5 // pred_check_branch
      %269 = sbr.rel (%p267) target = $region24
    $region23: #{circle_loss_pallas.1} parent=5 // pred_region
      // Predicated region
      $region25: #{circle_loss_pallas.1} parent=23 // pred_check
        %p270 = pneg %p46
      $region26: #{circle_loss_pallas.1} parent=23 // pred_check_branch
        %272 = sbr.rel (%p270) target = $region28
      $region27: #{circle_loss_pallas.1} parent=23 // pred_region
        %s273 = smul.u32 16, %s21
        %p274 = scmp.lt.s32.totalorder %s273, 31
        %s275 = scalar_select %p274, %s273, 31
        %s276 = smul.addr %s275, 8
        %s277 = scalar_lea.vmem %s0, %s276
        %s278 = smul.u32 16, %s21
      $region28: #{circle_loss_pallas.1} parent=23 // pred_fallthru
        _
      // Predicated region
      $region29: #{circle_loss_pallas.1} parent=23 // pred_check
        %p279 = pneg %p98
      $region30: #{circle_loss_pallas.1} parent=23 // pred_check_branch
        %281 = sbr.rel (%p279) target = $region32
      $region31: #{circle_loss_pallas.1} parent=23 // pred_region
        %s282 = smul.u32 16, %s21
        %p283 = scmp.lt.s32.totalorder %s282, 31
        %s284 = scalar_select %p283, %s282, 31
        %s285 = smul.addr %s284, 8
        %s286 = scalar_lea.vmem %s2, %s285
        %s287 = smul.u32 16, %s21
      $region32: #{circle_loss_pallas.1} parent=23 // pred_fallthru
        _
    $region24: #{circle_loss_pallas.1} parent=5 // pred_fallthru
      _
    %p288 = scmp.le.s32.totalorder 1, %s14
    %p289 = scmp.lt.s32.totalorder %s14, 3
    %p290 = pnand %p288, %p289
    %p291 = pneg %p290
    // Predicated region
    $region33: #{circle_loss_pallas.1} parent=5 // pred_check
      _
    $region34: #{circle_loss_pallas.1} parent=5 // pred_check_branch
      %293 = sbr.rel (%p290) target = $region36
    $region35: #{circle_loss_pallas.1} parent=5 // pred_region
      %s294 = ssub.s32 %s14, 1
      %s295 = smul.u32 16, %s23
      %p296 = scmp.lt.s32.totalorder %s295, 31
      %s297 = scalar_select %p296, %s295, 31
      %s298 = smul.addr %s297, 8
      %s299 = scalar_lea.vmem %s0, %s298
      %p300 = pneg %p52
      %p301 = pneg %p49
      %s302 = smul.u32 2, %s24
      %p303 = scmp.lt.s32.totalorder %s302, 1
      %s304 = scalar_select %p303, %s302, 1
      %s305 = smul.addr %s304, 8
      %s306 = scalar_lea.vmem %s1, %s305
      %p307 = pneg %p78
      %p308 = pneg %p75
      %s309 = smul.u32 16, %s23
      %p310 = scmp.lt.s32.totalorder %s309, 31
      %s311 = scalar_select %p310, %s309, 31
      %s312 = smul.addr %s311, 8
      %s313 = scalar_lea.vmem %s2, %s312
      %p314 = pneg %p104
      %p315 = pneg %p101
      %s316 = smul.u32 2, %s24
      %p317 = scmp.lt.s32.totalorder %s316, 1
      %s318 = scalar_select %p317, %s316, 1
      %s319 = scalar_lea.vmem %s3, %s318
      %p320 = pneg %p130
      %p321 = pneg %p127
      %p322 = pneg %p156
      %p323 = pneg %p153
      %p324 = scmp.lt.s32.totalorder %s23, 1
      %s325 = scalar_select %p324, %s23, 1
      %s326 = smul.addr %s325, 2
      %s327 = smul.addr %s326, 8
      %s328 = scalar_lea.vmem %s4, %s327
      %p329 = pneg %p182
      %p330 = pneg %p179
      %p331 = scmp.lt.s32.totalorder %s23, 1
      %s332 = scalar_select %p331, %s23, 1
      %s333 = smul.addr %s332, 2
      %s334 = smul.addr %s333, 8
      %s335 = scalar_lea.vmem %s5, %s334
      %p336 = pneg %p208
      %p337 = pneg %p205
      %p338 = scmp.lt.s32.totalorder %s23, 1
      %s339 = scalar_select %p338, %s23, 1
      %s340 = smul.addr %s339, 2
      %s341 = smul.addr %s340, 8
      %s342 = scalar_lea.vmem %s6, %s341
      %p343 = pneg %p234
      %p344 = pneg %p231
      %p345 = scmp.lt.s32.totalorder %s23, 1
      %s346 = scalar_select %p345, %s23, 1
      %s347 = smul.addr %s346, 2
      %s348 = smul.addr %s347, 8
      %s349 = scalar_lea.vmem %s7, %s348
      %s350 = smul.u32 16, %s23
      %p351 = scmp.lt.s32.totalorder %s350, 31
      %s352 = scalar_select %p351, %s350, 31
      %s353 = smul.addr %s352, 8
      %s354 = scalar_lea.vmem %s0, %s353
      %s355 = smul.u32 16, %s23
      %s356 = smul.u32 2, %s24
      %p357 = scmp.lt.s32.totalorder %s356, 1
      %s358 = scalar_select %p357, %s356, 1
      %s359 = smul.addr %s358, 8
      %s360 = scalar_lea.vmem %s1, %s359
      %s361 = smul.u32 2, %s24
      %s362 = smul.u32 16, %s23
      %p363 = scmp.lt.s32.totalorder %s362, 31
      %s364 = scalar_select %p363, %s362, 31
      %s365 = smul.addr %s364, 8
      %s366 = scalar_lea.vmem %s2, %s365
      %s367 = smul.u32 16, %s23
      %s368 = smul.u32 2, %s24
      %p369 = scmp.lt.s32.totalorder %s368, 1
      %s370 = scalar_select %p369, %s368, 1
      %s371 = scalar_lea.vmem %s3, %s370
      %s372 = smul.u32 2, %s24
      %p373 = scmp.lt.s32.totalorder %s23, 1
      %s374 = scalar_select %p373, %s23, 1
      %s375 = smul.addr %s374, 2
      %s376 = smul.addr %s375, 8
      %s377 = scalar_lea.vmem %s4, %s376
      %p378 = scmp.lt.s32.totalorder %s23, 1
      %s379 = scalar_select %p378, %s23, 1
      %s380 = smul.addr %s379, 2
      %s381 = smul.addr %s380, 8
      %s382 = scalar_lea.vmem %s5, %s381
      %p383 = scmp.lt.s32.totalorder %s23, 1
      %s384 = scalar_select %p383, %s23, 1
      %s385 = smul.addr %s384, 2
      %s386 = smul.addr %s385, 8
      %s387 = scalar_lea.vmem %s6, %s386
      %p388 = scmp.lt.s32.totalorder %s23, 1
      %s389 = scalar_select %p388, %s23, 1
      %s390 = smul.addr %s389, 2
      %s391 = smul.addr %s390, 8
      %s392 = scalar_lea.vmem %s7, %s391
      %p393 = scmp.eq.s32.totalorder %s24, 0
      // Predicated region
      $region37: #{circle_loss_pallas.1} parent=35 // pred_check
        %p394 = pneg %p393
      $region38: #{circle_loss_pallas.1} parent=35 // pred_check_branch
        %396 = sbr.rel (%p394) target = $region40
      $region39: #{circle_loss_pallas.1} parent=35 // pred_region
        %397 = vst [vmem:[#allocation2] sm:$0xff] -inf
        %398 = vst [vmem:[#allocation2 + $0x8] sm:$0xff] -inf
        %399 = vst [vmem:[#allocation4] sm:$0xff] -inf
        %400 = vst [vmem:[#allocation4 + $0x8] sm:$0xff] -inf
        %401 = vst [vmem:[#allocation3] sm:$0xff] 0.0
        %402 = vst [vmem:[#allocation3 + $0x8] sm:$0xff] 0.0
        %403 = vst [vmem:[#allocation5] sm:$0xff] 0.0
        %404 = vst [vmem:[#allocation5 + $0x8] sm:$0xff] 0.0
      $region40: #{circle_loss_pallas.1} parent=35 // pred_fallthru
        _
      %s405 = smul.u32 %s24, 256
      %s406 = sadd.s32 %s405, 255
      %s407 = smul.u32 %s23, 128
      %p408 = scmp.gt.s32.totalorder %s406, %s407
      // Predicated region
      $region41: #{circle_loss_pallas.1} parent=35 // pred_check
        %p409 = pneg %p408
      $region42: #{circle_loss_pallas.1} parent=35 // pred_check_branch
        %411 = sbr.rel (%p409) target = $region44
      $region43: #{circle_loss_pallas.1} parent=35 // pred_region
        %v412 = vld [vmem:[%s354] sm:$0xff]
        %v413 = vld [vmem:[%s354 + $0x8] sm:$0xff]
        %v414 = vld [vmem:[%s354 + $0x10] sm:$0xff]
        %v415 = vld [vmem:[%s354 + $0x18] sm:$0xff]
        %v416 = vld [vmem:[%s354 + $0x20] sm:$0xff]
        %v417 = vld [vmem:[%s354 + $0x28] sm:$0xff]
        %v418 = vld [vmem:[%s354 + $0x30] sm:$0xff]
        %v419 = vld [vmem:[%s354 + $0x38] sm:$0xff]
        %v420 = vld [vmem:[%s354 + $0x40] sm:$0xff]
        %v421 = vld [vmem:[%s354 + $0x48] sm:$0xff]
        %v422 = vld [vmem:[%s354 + $0x50] sm:$0xff]
        %v423 = vld [vmem:[%s354 + $0x58] sm:$0xff]
        %v424 = vld [vmem:[%s354 + $0x60] sm:$0xff]
        %v425 = vld [vmem:[%s354 + $0x68] sm:$0xff]
        %v426 = vld [vmem:[%s354 + $0x70] sm:$0xff]
        %v427 = vld [vmem:[%s354 + $0x78] sm:$0xff]
        %v428 = vld [vmem:[%s360] sm:$0xff]
        %v429 = vld [vmem:[%s360 + $0x8] sm:$0xff]
        %v430 = vld [vmem:[%s360 + $0x10] sm:$0xff]
        %v431 = vld [vmem:[%s360 + $0x18] sm:$0xff]
        %v432 = vld [vmem:[%s360 + $0x20] sm:$0xff]
        %v433 = vld [vmem:[%s360 + $0x28] sm:$0xff]
        %v434 = vld [vmem:[%s360 + $0x30] sm:$0xff]
        %v435 = vld [vmem:[%s360 + $0x38] sm:$0xff]
        %vm436 = vcmask 261120
        %v438 = vsel %vm436, %v412, 0
        %v441 = vsel %vm436, %v413, 0
        %v444 = vsel %vm436, %v414, 0
        %v447 = vsel %vm436, %v415, 0
        %v450 = vsel %vm436, %v416, 0
        %v453 = vsel %vm436, %v417, 0
        %v456 = vsel %vm436, %v418, 0
        %v459 = vsel %vm436, %v419, 0
        %v462 = vsel %vm436, %v420, 0
        %v465 = vsel %vm436, %v421, 0
        %v468 = vsel %vm436, %v422, 0
        %v471 = vsel %vm436, %v423, 0
        %v474 = vsel %vm436, %v424, 0
        %v477 = vsel %vm436, %v425, 0
        %v480 = vsel %vm436, %v426, 0
        %v483 = vsel %vm436, %v427, 0
        %485 = vmatprep.subr.mxu0 %v429
        %486 = vmatpush1.msra.mxu0 %v428
        %487 = vmatprep.subr.mxu0 %v431
        %488 = vmatpush1.msra.mxu0 %v430
        %489 = vmatprep.subr.mxu0 %v433
        %490 = vmatpush1.msra.mxu0 %v432
        %491 = vmatprep.subr.mxu0 %v435
        %492 = vmatpush1.msra.mxu0 %v434
        %493 = vmatprep.subr.mxu0 0.0
        %494 = vmatpush1.msra.mxu0 0.0
        %495 = vmatprep.subr.mxu0 0.0
        %496 = vmatpush1.msra.mxu0 0.0
        %497 = vmatprep.subr.mxu0 0.0
        %498 = vmatpush1.msra.mxu0 0.0
        %499 = vmatprep.subr.mxu0 0.0
        %500 = vmatpush1.msra.mxu0 0.0
        %501 = vmatprep.subr.mxu0 0.0
        %502 = vmatpush1.msra.mxu0 0.0
        %503 = vmatprep.subr.mxu0 0.0
        %504 = vmatpush1.msra.mxu0 0.0
        %505 = vmatprep.subr.mxu0 0.0
        %506 = vmatpush1.msra.mxu0 0.0
        %507 = vmatprep.subr.mxu0 0.0
        %508 = vmatpush1.msra.mxu0 0.0
        %509 = vmatprep.subr.mxu0 0.0
        %510 = vmatpush1.msra.mxu0 0.0
        %511 = vmatprep.subr.mxu0 0.0
        %512 = vmatpush1.msra.mxu0 0.0
        %513 = vmatprep.subr.mxu0 0.0
        %514 = vmatpush1.msra.mxu0 0.0
        %515 = vmatprep.subr.mxu0 0.0
        %516 = vmatpush1.msra.mxu0 0.0
        %517 = vmatprep.subr.mxu0 0.0
        %518 = vmatpush1.msra.mxu0 0.0
        %519 = vmatprep.subr.mxu0 0.0
        %520 = vmatpush1.msra.mxu0 0.0
        %521 = vmatprep.subr.mxu0 0.0
        %522 = vmatpush1.msra.mxu0 0.0
        %523 = vmatprep.subr.mxu0 0.0
        %524 = vmatpush1.msra.mxu0 0.0
        %525 = vmatprep.subr.mxu0 0.0
        %526 = vmatpush1.msra.mxu0 0.0
        %527 = vmatprep.subr.mxu0 0.0
        %528 = vmatpush1.msra.mxu0 0.0
        %529 = vmatprep.subr.mxu0 0.0
        %530 = vmatpush1.msra.mxu0 0.0
        %531 = vmatprep.subr.mxu0 0.0
        %532 = vmatpush1.msra.mxu0 0.0
        %533 = vmatprep.subr.mxu0 0.0
        %534 = vmatpush1.msra.mxu0 0.0
        %535 = vmatprep.subr.mxu0 0.0
        %536 = vmatpush1.msra.mxu0 0.0
        %537 = vmatprep.subr.mxu0 0.0
        %538 = vmatpush1.msra.mxu0 0.0
        %539 = vmatprep.subr.mxu0 0.0
        %540 = vmatpush1.msra.mxu0 0.0
        %541 = vmatprep.subr.mxu0 0.0
        %542 = vmatpush1.msra.mxu0 0.0
        %543 = vmatprep.subr.mxu0 0.0
        %544 = vmatpush1.msra.mxu0 0.0
        %545 = vmatprep.subr.mxu0 0.0
        %546 = vmatpush1.msra.mxu0 0.0
        %547 = vmatprep.subr.mxu0 0.0
        %548 = vmatpush1.msra.mxu0 0.0
        %549 = vmatprep.mubr.f32.mxu0 0.0
        %550 = vmatmul.mubr.f32.gmra.mrb[0].mxu0 %v438
        %v551 = vpop.f32.mrb[0].mxu0
        %v552 = vadd.f32 0.0, %v551
        %v553 = vpop.f32.mrb[0].mxu0
        %v554 = vadd.f32 0.0, %v553
        %555 = vmatprep.mubr.f32.mxu0 0.0
        %556 = vmatmul.mubr.f32.gmra.mrb[0].mxu0 %v441
        %v557 = vpop.f32.mrb[0].mxu0
        %v558 = vadd.f32 0.0, %v557
        %v559 = vpop.f32.mrb[0].mxu0
        %v560 = vadd.f32 0.0, %v559
        %561 = vmatprep.mubr.f32.mxu0 0.0
        %562 = vmatmul.mubr.f32.gmra.mrb[0].mxu0 %v444
        %v563 = vpop.f32.mrb[0].mxu0
        %v564 = vadd.f32 0.0, %v563
        %v565 = vpop.f32.mrb[0].mxu0
        %v566 = vadd.f32 0.0, %v565
        %567 = vmatprep.mubr.f32.mxu0 0.0
        %568 = vmatmul.mubr.f32.gmra.mrb[0].mxu0 %v447
        %v569 = vpop.f32.mrb[0].mxu0
        %v570 = vadd.f32 0.0, %v569
        %v571 = vpop.f32.mrb[0].mxu0
        %v572 = vadd.f32 0.0, %v571
        %573 = vmatprep.mubr.f32.mxu0 0.0
        %574 = vmatmul.mubr.f32.gmra.mrb[0].mxu0 %v450
        %v575 = vpop.f32.mrb[0].mxu0
        %v576 = vadd.f32 0.0, %v575
        %v577 = vpop.f32.mrb[0].mxu0
        %v578 = vadd.f32 0.0, %v577
        %579 = vmatprep.mubr.f32.mxu0 0.0
        %580 = vmatmul.mubr.f32.gmra.mrb[0].mxu0 %v453
        %v581 = vpop.f32.mrb[0].mxu0
        %v582 = vadd.f32 0.0, %v581
        %v583 = vpop.f32.mrb[0].mxu0
        %v584 = vadd.f32 0.0, %v583
        %585 = vmatprep.mubr.f32.mxu0 0.0
        %586 = vmatmul.mubr.f32.gmra.mrb[0].mxu0 %v456
        %v587 = vpop.f32.mrb[0].mxu0
        %v588 = vadd.f32 0.0, %v587
        %v589 = vpop.f32.mrb[0].mxu0
        %v590 = vadd.f32 0.0, %v589
        %591 = vmatprep.mubr.f32.mxu0 0.0
        %592 = vmatmul.mubr.f32.gmra.mrb[0].mxu0 %v459
        %v593 = vpop.f32.mrb[0].mxu0
        %v594 = vadd.f32 0.0, %v593
        %v595 = vpop.f32.mrb[0].mxu0
        %v596 = vadd.f32 0.0, %v595
        %597 = vmatprep.mubr.f32.mxu0 0.0
        %598 = vmatmul.mubr.f32.gmra.mrb[0].mxu0 %v462
        %v599 = vpop.f32.mrb[0].mxu0
        %v600 = vadd.f32 0.0, %v599
        %v601 = vpop.f32.mrb[0].mxu0
        %v602 = vadd.f32 0.0, %v601
        %603 = vmatprep.mubr.f32.mxu0 0.0
        %604 = vmatmul.mubr.f32.gmra.mrb[0].mxu0 %v465
        %v605 = vpop.f32.mrb[0].mxu0
        %v606 = vadd.f32 0.0, %v605
        %v607 = vpop.f32.mrb[0].mxu0
        %v608 = vadd.f32 0.0, %v607
        %609 = vmatprep.mubr.f32.mxu0 0.0
        %610 = vmatmul.mubr.f32.gmra.mrb[0].mxu0 %v468
        %v611 = vpop.f32.mrb[0].mxu0
        %v612 = vadd.f32 0.0, %v611
        %v613 = vpop.f32.mrb[0].mxu0
        %v614 = vadd.f32 0.0, %v613
        %615 = vmatprep.mubr.f32.mxu0 0.0
        %616 = vmatmul.mubr.f32.gmra.mrb[0].mxu0 %v471
        %v617 = vpop.f32.mrb[0].mxu0
        %v618 = vadd.f32 0.0, %v617
        %v619 = vpop.f32.mrb[0].mxu0
        %v620 = vadd.f32 0.0, %v619
        %621 = vmatprep.mubr.f32.mxu0 0.0
        %622 = vmatmul.mubr.f32.gmra.mrb[0].mxu0 %v474
        %v623 = vpop.f32.mrb[0].mxu0
        %v624 = vadd.f32 0.0, %v623
        %v625 = vpop.f32.mrb[0].mxu0
        %v626 = vadd.f32 0.0, %v625
        %627 = vmatprep.mubr.f32.mxu0 0.0
        %628 = vmatmul.mubr.f32.gmra.mrb[0].mxu0 %v477
        %v629 = vpop.f32.mrb[0].mxu0
        %v630 = vadd.f32 0.0, %v629
        %v631 = vpop.f32.mrb[0].mxu0
        %v632 = vadd.f32 0.0, %v631
        %633 = vmatprep.mubr.f32.mxu0 0.0
        %634 = vmatmul.mubr.f32.gmra.mrb[0].mxu0 %v480
        %v635 = vpop.f32.mrb[0].mxu0
        %v636 = vadd.f32 0.0, %v635
        %v637 = vpop.f32.mrb[0].mxu0
        %v638 = vadd.f32 0.0, %v637
        %639 = vmatprep.mubr.f32.mxu0 0.0
        %640 = vmatmul.mubr.f32.gmra.mrb[0].mxu0 %v483
        %v641 = vpop.f32.mrb[0].mxu0
        %v642 = vadd.f32 0.0, %v641
        %v643 = vpop.f32.mrb[0].mxu0
        %v644 = vadd.f32 0.0, %v643
        %645 = vdwg.mxu0
        %v646 = vld [vmem:[%s366] sm:$0xff]
        %v647 = vld [vmem:[%s366 + $0x8] sm:$0xff]
        %v648 = vld [vmem:[%s366 + $0x10] sm:$0xff]
        %v649 = vld [vmem:[%s366 + $0x18] sm:$0xff]
        %v650 = vld [vmem:[%s366 + $0x20] sm:$0xff]
        %v651 = vld [vmem:[%s366 + $0x28] sm:$0xff]
        %v652 = vld [vmem:[%s366 + $0x30] sm:$0xff]
        %v653 = vld [vmem:[%s366 + $0x38] sm:$0xff]
        %v654 = vld [vmem:[%s366 + $0x40] sm:$0xff]
        %v655 = vld [vmem:[%s366 + $0x48] sm:$0xff]
        %v656 = vld [vmem:[%s366 + $0x50] sm:$0xff]
        %v657 = vld [vmem:[%s366 + $0x58] sm:$0xff]
        %v658 = vld [vmem:[%s366 + $0x60] sm:$0xff]
        %v659 = vld [vmem:[%s366 + $0x68] sm:$0xff]
        %v660 = vld [vmem:[%s366 + $0x70] sm:$0xff]
        %v661 = vld [vmem:[%s366 + $0x78] sm:$0xff]
        %v662 = vld [vmem:[%s371] sm:$0x3]
        %v663 = vlaneseq
        %v664 = vand.u32 %v663, 127
        %v665 = vadd.s32 %v664, 128
        %v666 = vlaneseq
        %v667 = vshrl.u32 %v666, 7
        %v668 = vsub.s32 %v664, %v667
        %v669 = vsub.s32 %v665, %v667
        %s670 = ssub.s32 %s407, %s405
        %v671 = vld [vmem:[#allocation2] sm:$0xff]
        %v672 = vld [vmem:[#allocation2 + $0x8] sm:$0xff]
        %v673 = vld [vmem:[#allocation4] sm:$0xff]
        %v674 = vld [vmem:[#allocation4 + $0x8] sm:$0xff]
        %675 = vset.pattern.permute.xlu0 0
        %676 = vperm.xlu0 %675, %v646
        %v677 = vpop.permute.xlu0 %676
        %v678 = vlaneseq
        %v679 = vshrl.u32 %v678, 7
        %v680 = vsub.s32 0, %v679
        %v681 = vrot.slane %v662, %v680
        %v682 = vlaneseq
        %v683 = vshrl.u32 %v682, 7
        %v684 = vsub.s32 1, %v683
        %v685 = vrot.slane %v662, %v684
        %vm686 = vcmp.eq.s32.totalorder %v677, %v681
        %vm687 = vcmp.eq.s32.totalorder %v677, %v685
        %v688 = vstv %s670
        %vm689 = vcmp.gt.s32.totalorder %v668, %v688
        %vm690 = vcmp.gt.s32.totalorder %v669, %v688
        %v691 = vsub.f32 1.25, %v552
        %v692 = vsub.f32 1.25, %v554
        %v693 = vmax.f32 %v691, 0.0
        %v694 = vmax.f32 %v692, 0.0
        %v695 = vadd.f32 %v552, 0.25
        %v696 = vadd.f32 %v554, 0.25
        %v697 = vmax.f32 %v695, 0.0
        %v698 = vmax.f32 %v696, 0.0
        %v699 = vmul.f32 %v693, -64.0
        %v700 = vmul.f32 %v694, -64.0
        %v701 = vsub.f32 %v552, 0.75
        %v702 = vsub.f32 %v554, 0.75
        %v703 = vmul.f32 %v699, %v701
        %v704 = vmul.f32 %v700, %v702
        %v705 = vmul.f32 %v697, 64.0
        %v706 = vmul.f32 %v698, 64.0
        %v707 = vsub.f32 %v552, 0.25
        %v708 = vsub.f32 %v554, 0.25
        %v709 = vmul.f32 %v705, %v707
        %v710 = vmul.f32 %v706, %v708
        %v711 = vsel %vm686, %v703, %v709
        %v712 = vsel %vm687, %v704, %v710
        %vm713 = vmand %vm689, %vm686
        %vm714 = vmand %vm690, %vm687
        %v715 = vsel %vm713, %v711, -inf
        %v716 = vsel %vm714, %v712, -inf
        %v717 = vmax.f32 %v671, %v715
        %v718 = vmax.f32 %v672, %v716
        %vm719 = vmxor %vm686, 1
        %vm720 = vmxor %vm687, 1
        %vm721 = vmand %vm689, %vm719
        %vm722 = vmand %vm690, %vm720
        %v723 = vsel %vm721, %v711, -inf
        %v724 = vsel %vm722, %v712, -inf
        %v725 = vmax.f32 %v673, %v723
        %v726 = vmax.f32 %v674, %v724
        %727 = vset.pattern.permute.xlu0 0
        %728 = vperm.xlu0 %727, %v647
        %v729 = vpop.permute.xlu0 %728
        %vm730 = vcmp.eq.s32.totalorder %v729, %v681
        %vm731 = vcmp.eq.s32.totalorder %v729, %v685
        %s732 = sadd.s32 %s670, 8
        %v733 = vstv %s732
        %vm734 = vcmp.gt.s32.totalorder %v668, %v733
        %vm735 = vcmp.gt.s32.totalorder %v669, %v733
        %v736 = vsub.f32 1.25, %v558
        %v737 = vsub.f32 1.25, %v560
        %v738 = vmax.f32 %v736, 0.0
        %v739 = vmax.f32 %v737, 0.0
        %v740 = vadd.f32 %v558, 0.25
        %v741 = vadd.f32 %v560, 0.25
        %v742 = vmax.f32 %v740, 0.0
        %v743 = vmax.f32 %v741, 0.0
        %v744 = vmul.f32 %v738, -64.0
        %v745 = vmul.f32 %v739, -64.0
        %v746 = vsub.f32 %v558, 0.75
        %v747 = vsub.f32 %v560, 0.75
        %v748 = vmul.f32 %v744, %v746
        %v749 = vmul.f32 %v745, %v747
        %v750 = vmul.f32 %v742, 64.0
        %v751 = vmul.f32 %v743, 64.0
        %v752 = vsub.f32 %v558, 0.25
        %v753 = vsub.f32 %v560, 0.25
        %v754 = vmul.f32 %v750, %v752
        %v755 = vmul.f32 %v751, %v753
        %v756 = vsel %vm730, %v748, %v754
        %v757 = vsel %vm731, %v749, %v755
        %vm758 = vmand %vm734, %vm730
        %vm759 = vmand %vm735, %vm731
        %v760 = vsel %vm758, %v756, -inf
        %v761 = vsel %vm759, %v757, -inf
        %v762 = vmax.f32 %v717, %v760
        %v763 = vmax.f32 %v718, %v761
        %vm764 = vmxor %vm730, 1
        %vm765 = vmxor %vm731, 1
        %vm766 = vmand %vm734, %vm764
        %vm767 = vmand %vm735, %vm765
        %v768 = vsel %vm766, %v756, -inf
        %v769 = vsel %vm767, %v757, -inf
        %v770 = vmax.f32 %v725, %v768
        %v771 = vmax.f32 %v726, %v769
        %772 = vset.pattern.permute.xlu0 0
        %773 = vperm.xlu0 %772, %v648
        %v774 = vpop.permute.xlu0 %773
        %vm775 = vcmp.eq.s32.totalorder %v774, %v681
        %vm776 = vcmp.eq.s32.totalorder %v774, %v685
        %s777 = sadd.s32 %s670, 16
        %v778 = vstv %s777
        %vm779 = vcmp.gt.s32.totalorder %v668, %v778
        %vm780 = vcmp.gt.s32.totalorder %v669, %v778
        %v781 = vsub.f32 1.25, %v564
        %v782 = vsub.f32 1.25, %v566
        %v783 = vmax.f32 %v781, 0.0
        %v784 = vmax.f32 %v782, 0.0
        %v785 = vadd.f32 %v564, 0.25
        %v786 = vadd.f32 %v566, 0.25
        %v787 = vmax.f32 %v785, 0.0
        %v788 = vmax.f32 %v786, 0.0
        %v789 = vmul.f32 %v783, -64.0
        %v790 = vmul.f32 %v784, -64.0
        %v791 = vsub.f32 %v564, 0.75
        %v792 = vsub.f32 %v566, 0.75
        %v793 = vmul.f32 %v789, %v791
        %v794 = vmul.f32 %v790, %v792
        %v795 = vmul.f32 %v787, 64.0
        %v796 = vmul.f32 %v788, 64.0
        %v797 = vsub.f32 %v564, 0.25
        %v798 = vsub.f32 %v566, 0.25
        %v799 = vmul.f32 %v795, %v797
        %v800 = vmul.f32 %v796, %v798
        %v801 = vsel %vm775, %v793, %v799
        %v802 = vsel %vm776, %v794, %v800
        %vm803 = vmand %vm779, %vm775
        %vm804 = vmand %vm780, %vm776
        %v805 = vsel %vm803, %v801, -inf
        %v806 = vsel %vm804, %v802, -inf
        %v807 = vmax.f32 %v762, %v805
        %v808 = vmax.f32 %v763, %v806
        %vm809 = vmxor %vm775, 1
        %vm810 = vmxor %vm776, 1
        %vm811 = vmand %vm779, %vm809
        %vm812 = vmand %vm780, %vm810
        %v813 = vsel %vm811, %v801, -inf
        %v814 = vsel %vm812, %v802, -inf
        %v815 = vmax.f32 %v770, %v813
        %v816 = vmax.f32 %v771, %v814
        %817 = vset.pattern.permute.xlu0 0
        %818 = vperm.xlu0 %817, %v649
        %v819 = vpop.permute.xlu0 %818
        %vm820 = vcmp.eq.s32.totalorder %v819, %v681
        %vm821 = vcmp.eq.s32.totalorder %v819, %v685
        %s822 = sadd.s32 %s670, 24
        %v823 = vstv %s822
        %vm824 = vcmp.gt.s32.totalorder %v668, %v823
        %vm825 = vcmp.gt.s32.totalorder %v669, %v823
        %v826 = vsub.f32 1.25, %v570
        %v827 = vsub.f32 1.25, %v572
        %v828 = vmax.f32 %v826, 0.0
        %v829 = vmax.f32 %v827, 0.0
        %v830 = vadd.f32 %v570, 0.25
        %v831 = vadd.f32 %v572, 0.25
        %v832 = vmax.f32 %v830, 0.0
        %v833 = vmax.f32 %v831, 0.0
        %v834 = vmul.f32 %v828, -64.0
        %v835 = vmul.f32 %v829, -64.0
        %v836 = vsub.f32 %v570, 0.75
        %v837 = vsub.f32 %v572, 0.75
        %v838 = vmul.f32 %v834, %v836
        %v839 = vmul.f32 %v835, %v837
        %v840 = vmul.f32 %v832, 64.0
        %v841 = vmul.f32 %v833, 64.0
        %v842 = vsub.f32 %v570, 0.25
        %v843 = vsub.f32 %v572, 0.25
        %v844 = vmul.f32 %v840, %v842
        %v845 = vmul.f32 %v841, %v843
        %v846 = vsel %vm820, %v838, %v844
        %v847 = vsel %vm821, %v839, %v845
        %vm848 = vmand %vm824, %vm820
        %vm849 = vmand %vm825, %vm821
        %v850 = vsel %vm848, %v846, -inf
        %v851 = vsel %vm849, %v847, -inf
        %v852 = vmax.f32 %v807, %v850
        %v853 = vmax.f32 %v808, %v851
        %vm854 = vmxor %vm820, 1
        %vm855 = vmxor %vm821, 1
        %vm856 = vmand %vm824, %vm854
        %vm857 = vmand %vm825, %vm855
        %v858 = vsel %vm856, %v846, -inf
        %v859 = vsel %vm857, %v847, -inf
        %v860 = vmax.f32 %v815, %v858
        %v861 = vmax.f32 %v816, %v859
        %862 = vset.pattern.permute.xlu0 0
        %863 = vperm.xlu0 %862, %v650
        %v864 = vpop.permute.xlu0 %863
        %vm865 = vcmp.eq.s32.totalorder %v864, %v681
        %vm866 = vcmp.eq.s32.totalorder %v864, %v685
        %s867 = sadd.s32 %s670, 32
        %v868 = vstv %s867
        %vm869 = vcmp.gt.s32.totalorder %v668, %v868
        %vm870 = vcmp.gt.s32.totalorder %v669, %v868
        %v871 = vsub.f32 1.25, %v576
        %v872 = vsub.f32 1.25, %v578
        %v873 = vmax.f32 %v871, 0.0
        %v874 = vmax.f32 %v872, 0.0
        %v875 = vadd.f32 %v576, 0.25
        %v876 = vadd.f32 %v578, 0.25
        %v877 = vmax.f32 %v875, 0.0
        %v878 = vmax.f32 %v876, 0.0
        %v879 = vmul.f32 %v873, -64.0
        %v880 = vmul.f32 %v874, -64.0
        %v881 = vsub.f32 %v576, 0.75
        %v882 = vsub.f32 %v578, 0.75
        %v883 = vmul.f32 %v879, %v881
        %v884 = vmul.f32 %v880, %v882
        %v885 = vmul.f32 %v877, 64.0
        %v886 = vmul.f32 %v878, 64.0
        %v887 = vsub.f32 %v576, 0.25
        %v888 = vsub.f32 %v578, 0.25
        %v889 = vmul.f32 %v885, %v887
        %v890 = vmul.f32 %v886, %v888
        %v891 = vsel %vm865, %v883, %v889
        %v892 = vsel %vm866, %v884, %v890
        %vm893 = vmand %vm869, %vm865
        %vm894 = vmand %vm870, %vm866
        %v895 = vsel %vm893, %v891, -inf
        %v896 = vsel %vm894, %v892, -inf
        %v897 = vmax.f32 %v852, %v895
        %v898 = vmax.f32 %v853, %v896
        %vm899 = vmxor %vm865, 1
        %vm900 = vmxor %vm866, 1
        %vm901 = vmand %vm869, %vm899
        %vm902 = vmand %vm870, %vm900
        %v903 = vsel %vm901, %v891, -inf
        %v904 = vsel %vm902, %v892, -inf
        %v905 = vmax.f32 %v860, %v903
        %v906 = vmax.f32 %v861, %v904
        %907 = vset.pattern.permute.xlu0 0
        %908 = vperm.xlu0 %907, %v651
        %v909 = vpop.permute.xlu0 %908
        %vm910 = vcmp.eq.s32.totalorder %v909, %v681
        %vm911 = vcmp.eq.s32.totalorder %v909, %v685
        %s912 = sadd.s32 %s670, 40
        %v913 = vstv %s912
        %vm914 = vcmp.gt.s32.totalorder %v668, %v913
        %vm915 = vcmp.gt.s32.totalorder %v669, %v913
        %v916 = vsub.f32 1.25, %v582
        %v917 = vsub.f32 1.25, %v584
        %v918 = vmax.f32 %v916, 0.0
        %v919 = vmax.f32 %v917, 0.0
        %v920 = vadd.f32 %v582, 0.25
        %v921 = vadd.f32 %v584, 0.25
        %v922 = vmax.f32 %v920, 0.0
        %v923 = vmax.f32 %v921, 0.0
        %v924 = vmul.f32 %v918, -64.0
        %v925 = vmul.f32 %v919, -64.0
        %v926 = vsub.f32 %v582, 0.75
        %v927 = vsub.f32 %v584, 0.75
        %v928 = vmul.f32 %v924, %v926
        %v929 = vmul.f32 %v925, %v927
        %v930 = vmul.f32 %v922, 64.0
        %v931 = vmul.f32 %v923, 64.0
        %v932 = vsub.f32 %v582, 0.25
        %v933 = vsub.f32 %v584, 0.25
        %v934 = vmul.f32 %v930, %v932
        %v935 = vmul.f32 %v931, %v933
        %v936 = vsel %vm910, %v928, %v934
        %v937 = vsel %vm911, %v929, %v935
        %vm938 = vmand %vm914, %vm910
        %vm939 = vmand %vm915, %vm911
        %v940 = vsel %vm938, %v936, -inf
        %v941 = vsel %vm939, %v937, -inf
        %v942 = vmax.f32 %v897, %v940
        %v943 = vmax.f32 %v898, %v941
        %vm944 = vmxor %vm910, 1
        %vm945 = vmxor %vm911, 1
        %vm946 = vmand %vm914, %vm944
        %vm947 = vmand %vm915, %vm945
        %v948 = vsel %vm946, %v936, -inf
        %v949 = vsel %vm947, %v937, -inf
        %v950 = vmax.f32 %v905, %v948
        %v951 = vmax.f32 %v906, %v949
        %952 = vset.pattern.permute.xlu0 0
        %953 = vperm.xlu0 %952, %v652
        %v954 = vpop.permute.xlu0 %953
        %vm955 = vcmp.eq.s32.totalorder %v954, %v681
        %vm956 = vcmp.eq.s32.totalorder %v954, %v685
        %s957 = sadd.s32 %s670, 48
        %v958 = vstv %s957
        %vm959 = vcmp.gt.s32.totalorder %v668, %v958
        %vm960 = vcmp.gt.s32.totalorder %v669, %v958
        %v961 = vsub.f32 1.25, %v588
        %v962 = vsub.f32 1.25, %v590
        %v963 = vmax.f32 %v961, 0.0
        %v964 = vmax.f32 %v962, 0.0
        %v965 = vadd.f32 %v588, 0.25
        %v966 = vadd.f32 %v590, 0.25
        %v967 = vmax.f32 %v965, 0.0
        %v968 = vmax.f32 %v966, 0.0
        %v969 = vmul.f32 %v963, -64.0
        %v970 = vmul.f32 %v964, -64.0
        %v971 = vsub.f32 %v588, 0.75
        %v972 = vsub.f32 %v590, 0.75
        %v973 = vmul.f32 %v969, %v971
        %v974 = vmul.f32 %v970, %v972
        %v975 = vmul.f32 %v967, 64.0
        %v976 = vmul.f32 %v968, 64.0
        %v977 = vsub.f32 %v588, 0.25
        %v978 = vsub.f32 %v590, 0.25
        %v979 = vmul.f32 %v975, %v977
        %v980 = vmul.f32 %v976, %v978
        %v981 = vsel %vm955, %v973, %v979
        %v982 = vsel %vm956, %v974, %v980
        %vm983 = vmand %vm959, %vm955
        %vm984 = vmand %vm960, %vm956
        %v985 = vsel %vm983, %v981, -inf
        %v986 = vsel %vm984, %v982, -inf
        %v987 = vmax.f32 %v942, %v985
        %v988 = vmax.f32 %v943, %v986
        %vm989 = vmxor %vm955, 1
        %vm990 = vmxor %vm956, 1
        %vm991 = vmand %vm959, %vm989
        %vm992 = vmand %vm960, %vm990
        %v993 = vsel %vm991, %v981, -inf
        %v994 = vsel %vm992, %v982, -inf
        %v995 = vmax.f32 %v950, %v993
        %v996 = vmax.f32 %v951, %v994
        %997 = vset.pattern.permute.xlu0 0
        %998 = vperm.xlu0 %997, %v653
        %v999 = vpop.permute.xlu0 %998
        %vm1000 = vcmp.eq.s32.totalorder %v999, %v681
        %vm1001 = vcmp.eq.s32.totalorder %v999, %v685
        %s1002 = sadd.s32 %s670, 56
        %v1003 = vstv %s1002
        %vm1004 = vcmp.gt.s32.totalorder %v668, %v1003
        %vm1005 = vcmp.gt.s32.totalorder %v669, %v1003
        %v1006 = vsub.f32 1.25, %v594
        %v1007 = vsub.f32 1.25, %v596
        %v1008 = vmax.f32 %v1006, 0.0
        %v1009 = vmax.f32 %v1007, 0.0
        %v1010 = vadd.f32 %v594, 0.25
        %v1011 = vadd.f32 %v596, 0.25
        %v1012 = vmax.f32 %v1010, 0.0
        %v1013 = vmax.f32 %v1011, 0.0
        %v1014 = vmul.f32 %v1008, -64.0
        %v1015 = vmul.f32 %v1009, -64.0
        %v1016 = vsub.f32 %v594, 0.75
        %v1017 = vsub.f32 %v596, 0.75
        %v1018 = vmul.f32 %v1014, %v1016
        %v1019 = vmul.f32 %v1015, %v1017
        %v1020 = vmul.f32 %v1012, 64.0
        %v1021 = vmul.f32 %v1013, 64.0
        %v1022 = vsub.f32 %v594, 0.25
        %v1023 = vsub.f32 %v596, 0.25
        %v1024 = vmul.f32 %v1020, %v1022
        %v1025 = vmul.f32 %v1021, %v1023
        %v1026 = vsel %vm1000, %v1018, %v1024
        %v1027 = vsel %vm1001, %v1019, %v1025
        %vm1028 = vmand %vm1004, %vm1000
        %vm1029 = vmand %vm1005, %vm1001
        %v1030 = vsel %vm1028, %v1026, -inf
        %v1031 = vsel %vm1029, %v1027, -inf
        %v1032 = vmax.f32 %v987, %v1030
        %v1033 = vmax.f32 %v988, %v1031
        %vm1034 = vmxor %vm1000, 1
        %vm1035 = vmxor %vm1001, 1
        %vm1036 = vmand %vm1004, %vm1034
        %vm1037 = vmand %vm1005, %vm1035
        %v1038 = vsel %vm1036, %v1026, -inf
        %v1039 = vsel %vm1037, %v1027, -inf
        %v1040 = vmax.f32 %v995, %v1038
        %v1041 = vmax.f32 %v996, %v1039
        %1042 = vset.pattern.permute.xlu0 0
        %1043 = vperm.xlu0 %1042, %v654
        %v1044 = vpop.permute.xlu0 %1043
        %vm1045 = vcmp.eq.s32.totalorder %v1044, %v681
        %vm1046 = vcmp.eq.s32.totalorder %v1044, %v685
        %s1047 = sadd.s32 %s670, 64
        %v1048 = vstv %s1047
        %vm1049 = vcmp.gt.s32.totalorder %v668, %v1048
        %vm1050 = vcmp.gt.s32.totalorder %v669, %v1048
        %v1051 = vsub.f32 1.25, %v600
        %v1052 = vsub.f32 1.25, %v602
        %v1053 = vmax.f32 %v1051, 0.0
        %v1054 = vmax.f32 %v1052, 0.0
        %v1055 = vadd.f32 %v600, 0.25
        %v1056 = vadd.f32 %v602, 0.25
        %v1057 = vmax.f32 %v1055, 0.0
        %v1058 = vmax.f32 %v1056, 0.0
        %v1059 = vmul.f32 %v1053, -64.0
        %v1060 = vmul.f32 %v1054, -64.0
        %v1061 = vsub.f32 %v600, 0.75
        %v1062 = vsub.f32 %v602, 0.75
        %v1063 = vmul.f32 %v1059, %v1061
        %v1064 = vmul.f32 %v1060, %v1062
        %v1065 = vmul.f32 %v1057, 64.0
        %v1066 = vmul.f32 %v1058, 64.0
        %v1067 = vsub.f32 %v600, 0.25
        %v1068 = vsub.f32 %v602, 0.25
        %v1069 = vmul.f32 %v1065, %v1067
        %v1070 = vmul.f32 %v1066, %v1068
        %v1071 = vsel %vm1045, %v1063, %v1069
        %v1072 = vsel %vm1046, %v1064, %v1070
        %vm1073 = vmand %vm1049, %vm1045
        %vm1074 = vmand %vm1050, %vm1046
        %v1075 = vsel %vm1073, %v1071, -inf
        %v1076 = vsel %vm1074, %v1072, -inf
        %v1077 = vmax.f32 %v1032, %v1075
        %v1078 = vmax.f32 %v1033, %v1076
        %vm1079 = vmxor %vm1045, 1
        %vm1080 = vmxor %vm1046, 1
        %vm1081 = vmand %vm1049, %vm1079
        %vm1082 = vmand %vm1050, %vm1080
        %v1083 = vsel %vm1081, %v1071, -inf
        %v1084 = vsel %vm1082, %v1072, -inf
        %v1085 = vmax.f32 %v1040, %v1083
        %v1086 = vmax.f32 %v1041, %v1084
        %1087 = vset.pattern.permute.xlu0 0
        %1088 = vperm.xlu0 %1087, %v655
        %v1089 = vpop.permute.xlu0 %1088
        %vm1090 = vcmp.eq.s32.totalorder %v1089, %v681
        %vm1091 = vcmp.eq.s32.totalorder %v1089, %v685
        %s1092 = sadd.s32 %s670, 72
        %v1093 = vstv %s1092
        %vm1094 = vcmp.gt.s32.totalorder %v668, %v1093
        %vm1095 = vcmp.gt.s32.totalorder %v669, %v1093
        %v1096 = vsub.f32 1.25, %v606
        %v1097 = vsub.f32 1.25, %v608
        %v1098 = vmax.f32 %v1096, 0.0
        %v1099 = vmax.f32 %v1097, 0.0
        %v1100 = vadd.f32 %v606, 0.25
        %v1101 = vadd.f32 %v608, 0.25
        %v1102 = vmax.f32 %v1100, 0.0
        %v1103 = vmax.f32 %v1101, 0.0
        %v1104 = vmul.f32 %v1098, -64.0
        %v1105 = vmul.f32 %v1099, -64.0
        %v1106 = vsub.f32 %v606, 0.75
        %v1107 = vsub.f32 %v608, 0.75
        %v1108 = vmul.f32 %v1104, %v1106
        %v1109 = vmul.f32 %v1105, %v1107
        %v1110 = vmul.f32 %v1102, 64.0
        %v1111 = vmul.f32 %v1103, 64.0
        %v1112 = vsub.f32 %v606, 0.25
        %v1113 = vsub.f32 %v608, 0.25
        %v1114 = vmul.f32 %v1110, %v1112
        %v1115 = vmul.f32 %v1111, %v1113
        %v1116 = vsel %vm1090, %v1108, %v1114
        %v1117 = vsel %vm1091, %v1109, %v1115
        %vm1118 = vmand %vm1094, %vm1090
        %vm1119 = vmand %vm1095, %vm1091
        %v1120 = vsel %vm1118, %v1116, -inf
        %v1121 = vsel %vm1119, %v1117, -inf
        %v1122 = vmax.f32 %v1077, %v1120
        %v1123 = vmax.f32 %v1078, %v1121
        %vm1124 = vmxor %vm1090, 1
        %vm1125 = vmxor %vm1091, 1
        %vm1126 = vmand %vm1094, %vm1124
        %vm1127 = vmand %vm1095, %vm1125
        %v1128 = vsel %vm1126, %v1116, -inf
        %v1129 = vsel %vm1127, %v1117, -inf
        %v1130 = vmax.f32 %v1085, %v1128
        %v1131 = vmax.f32 %v1086, %v1129
        %1132 = vset.pattern.permute.xlu0 0
        %1133 = vperm.xlu0 %1132, %v656
        %v1134 = vpop.permute.xlu0 %1133
        %vm1135 = vcmp.eq.s32.totalorder %v1134, %v681
        %vm1136 = vcmp.eq.s32.totalorder %v1134, %v685
        %s1137 = sadd.s32 %s670, 80
        %v1138 = vstv %s1137
        %vm1139 = vcmp.gt.s32.totalorder %v668, %v1138
        %vm1140 = vcmp.gt.s32.totalorder %v669, %v1138
        %v1141 = vsub.f32 1.25, %v612
        %v1142 = vsub.f32 1.25, %v614
        %v1143 = vmax.f32 %v1141, 0.0
        %v1144 = vmax.f32 %v1142, 0.0
        %v1145 = vadd.f32 %v612, 0.25
        %v1146 = vadd.f32 %v614, 0.25
        %v1147 = vmax.f32 %v1145, 0.0
        %v1148 = vmax.f32 %v1146, 0.0
        %v1149 = vmul.f32 %v1143, -64.0
        %v1150 = vmul.f32 %v1144, -64.0
        %v1151 = vsub.f32 %v612, 0.75
        %v1152 = vsub.f32 %v614, 0.75
        %v1153 = vmul.f32 %v1149, %v1151
        %v1154 = vmul.f32 %v1150, %v1152
        %v1155 = vmul.f32 %v1147, 64.0
        %v1156 = vmul.f32 %v1148, 64.0
        %v1157 = vsub.f32 %v612, 0.25
        %v1158 = vsub.f32 %v614, 0.25
        %v1159 = vmul.f32 %v1155, %v1157
        %v1160 = vmul.f32 %v1156, %v1158
        %v1161 = vsel %vm1135, %v1153, %v1159
        %v1162 = vsel %vm1136, %v1154, %v1160
        %vm1163 = vmand %vm1139, %vm1135
        %vm1164 = vmand %vm1140, %vm1136
        %v1165 = vsel %vm1163, %v1161, -inf
        %v1166 = vsel %vm1164, %v1162, -inf
        %v1167 = vmax.f32 %v1122, %v1165
        %v1168 = vmax.f32 %v1123, %v1166
        %vm1169 = vmxor %vm1135, 1
        %vm1170 = vmxor %vm1136, 1
        %vm1171 = vmand %vm1139, %vm1169
        %vm1172 = vmand %vm1140, %vm1170
        %v1173 = vsel %vm1171, %v1161, -inf
        %v1174 = vsel %vm1172, %v1162, -inf
        %v1175 = vmax.f32 %v1130, %v1173
        %v1176 = vmax.f32 %v1131, %v1174
        %1177 = vset.pattern.permute.xlu0 0
        %1178 = vperm.xlu0 %1177, %v657
        %v1179 = vpop.permute.xlu0 %1178
        %vm1180 = vcmp.eq.s32.totalorder %v1179, %v681
        %vm1181 = vcmp.eq.s32.totalorder %v1179, %v685
        %s1182 = sadd.s32 %s670, 88
        %v1183 = vstv %s1182
        %vm1184 = vcmp.gt.s32.totalorder %v668, %v1183
        %vm1185 = vcmp.gt.s32.totalorder %v669, %v1183
        %v1186 = vsub.f32 1.25, %v618
        %v1187 = vsub.f32 1.25, %v620
        %v1188 = vmax.f32 %v1186, 0.0
        %v1189 = vmax.f32 %v1187, 0.0
        %v1190 = vadd.f32 %v618, 0.25
        %v1191 = vadd.f32 %v620, 0.25
        %v1192 = vmax.f32 %v1190, 0.0
        %v1193 = vmax.f32 %v1191, 0.0
        %v1194 = vmul.f32 %v1188, -64.0
        %v1195 = vmul.f32 %v1189, -64.0
        %v1196 = vsub.f32 %v618, 0.75
        %v1197 = vsub.f32 %v620, 0.75
        %v1198 = vmul.f32 %v1194, %v1196
        %v1199 = vmul.f32 %v1195, %v1197
        %v1200 = vmul.f32 %v1192, 64.0
        %v1201 = vmul.f32 %v1193, 64.0
        %v1202 = vsub.f32 %v618, 0.25
        %v1203 = vsub.f32 %v620, 0.25
        %v1204 = vmul.f32 %v1200, %v1202
        %v1205 = vmul.f32 %v1201, %v1203
        %v1206 = vsel %vm1180, %v1198, %v1204
        %v1207 = vsel %vm1181, %v1199, %v1205
        %vm1208 = vmand %vm1184, %vm1180
        %vm1209 = vmand %vm1185, %vm1181
        %v1210 = vsel %vm1208, %v1206, -inf
        %v1211 = vsel %vm1209, %v1207, -inf
        %v1212 = vmax.f32 %v1167, %v1210
        %v1213 = vmax.f32 %v1168, %v1211
        %vm1214 = vmxor %vm1180, 1
        %vm1215 = vmxor %vm1181, 1
        %vm1216 = vmand %vm1184, %vm1214
        %vm1217 = vmand %vm1185, %vm1215
        %v1218 = vsel %vm1216, %v1206, -inf
        %v1219 = vsel %vm1217, %v1207, -inf
        %v1220 = vmax.f32 %v1175, %v1218
        %v1221 = vmax.f32 %v1176, %v1219
        %1222 = vset.pattern.permute.xlu0 0
        %1223 = vperm.xlu0 %1222, %v658
        %v1224 = vpop.permute.xlu0 %1223
        %vm1225 = vcmp.eq.s32.totalorder %v1224, %v681
        %vm1226 = vcmp.eq.s32.totalorder %v1224, %v685
        %s1227 = sadd.s32 %s670, 96
        %v1228 = vstv %s1227
        %vm1229 = vcmp.gt.s32.totalorder %v668, %v1228
        %vm1230 = vcmp.gt.s32.totalorder %v669, %v1228
        %v1231 = vsub.f32 1.25, %v624
        %v1232 = vsub.f32 1.25, %v626
        %v1233 = vmax.f32 %v1231, 0.0
        %v1234 = vmax.f32 %v1232, 0.0
        %v1235 = vadd.f32 %v624, 0.25
        %v1236 = vadd.f32 %v626, 0.25
        %v1237 = vmax.f32 %v1235, 0.0
        %v1238 = vmax.f32 %v1236, 0.0
        %v1239 = vmul.f32 %v1233, -64.0
        %v1240 = vmul.f32 %v1234, -64.0
        %v1241 = vsub.f32 %v624, 0.75
        %v1242 = vsub.f32 %v626, 0.75
        %v1243 = vmul.f32 %v1239, %v1241
        %v1244 = vmul.f32 %v1240, %v1242
        %v1245 = vmul.f32 %v1237, 64.0
        %v1246 = vmul.f32 %v1238, 64.0
        %v1247 = vsub.f32 %v624, 0.25
        %v1248 = vsub.f32 %v626, 0.25
        %v1249 = vmul.f32 %v1245, %v1247
        %v1250 = vmul.f32 %v1246, %v1248
        %v1251 = vsel %vm1225, %v1243, %v1249
        %v1252 = vsel %vm1226, %v1244, %v1250
        %vm1253 = vmand %vm1229, %vm1225
        %vm1254 = vmand %vm1230, %vm1226
        %v1255 = vsel %vm1253, %v1251, -inf
        %v1256 = vsel %vm1254, %v1252, -inf
        %v1257 = vmax.f32 %v1212, %v1255
        %v1258 = vmax.f32 %v1213, %v1256
        %vm1259 = vmxor %vm1225, 1
        %vm1260 = vmxor %vm1226, 1
        %vm1261 = vmand %vm1229, %vm1259
        %vm1262 = vmand %vm1230, %vm1260
        %v1263 = vsel %vm1261, %v1251, -inf
        %v1264 = vsel %vm1262, %v1252, -inf
        %v1265 = vmax.f32 %v1220, %v1263
        %v1266 = vmax.f32 %v1221, %v1264
        %1267 = vset.pattern.permute.xlu0 0
        %1268 = vperm.xlu0 %1267, %v659
        %v1269 = vpop.permute.xlu0 %1268
        %vm1270 = vcmp.eq.s32.totalorder %v1269, %v681
        %vm1271 = vcmp.eq.s32.totalorder %v1269, %v685
        %s1272 = sadd.s32 %s670, 104
        %v1273 = vstv %s1272
        %vm1274 = vcmp.gt.s32.totalorder %v668, %v1273
        %vm1275 = vcmp.gt.s32.totalorder %v669, %v1273
        %v1276 = vsub.f32 1.25, %v630
        %v1277 = vsub.f32 1.25, %v632
        %v1278 = vmax.f32 %v1276, 0.0
        %v1279 = vmax.f32 %v1277, 0.0
        %v1280 = vadd.f32 %v630, 0.25
        %v1281 = vadd.f32 %v632, 0.25
        %v1282 = vmax.f32 %v1280, 0.0
        %v1283 = vmax.f32 %v1281, 0.0
        %v1284 = vmul.f32 %v1278, -64.0
        %v1285 = vmul.f32 %v1279, -64.0
        %v1286 = vsub.f32 %v630, 0.75
        %v1287 = vsub.f32 %v632, 0.75
        %v1288 = vmul.f32 %v1284, %v1286
        %v1289 = vmul.f32 %v1285, %v1287
        %v1290 = vmul.f32 %v1282, 64.0
        %v1291 = vmul.f32 %v1283, 64.0
        %v1292 = vsub.f32 %v630, 0.25
        %v1293 = vsub.f32 %v632, 0.25
        %v1294 = vmul.f32 %v1290, %v1292
        %v1295 = vmul.f32 %v1291, %v1293
        %v1296 = vsel %vm1270, %v1288, %v1294
        %v1297 = vsel %vm1271, %v1289, %v1295
        %vm1298 = vmand %vm1274, %vm1270
        %vm1299 = vmand %vm1275, %vm1271
        %v1300 = vsel %vm1298, %v1296, -inf
        %v1301 = vsel %vm1299, %v1297, -inf
        %v1302 = vmax.f32 %v1257, %v1300
        %v1303 = vmax.f32 %v1258, %v1301
        %vm1304 = vmxor %vm1270, 1
        %vm1305 = vmxor %vm1271, 1
        %vm1306 = vmand %vm1274, %vm1304
        %vm1307 = vmand %vm1275, %vm1305
        %v1308 = vsel %vm1306, %v1296, -inf
        %v1309 = vsel %vm1307, %v1297, -inf
        %v1310 = vmax.f32 %v1265, %v1308
        %v1311 = vmax.f32 %v1266, %v1309
        %1312 = vset.pattern.permute.xlu0 0
        %1313 = vperm.xlu0 %1312, %v660
        %v1314 = vpop.permute.xlu0 %1313
        %vm1315 = vcmp.eq.s32.totalorder %v1314, %v681
        %vm1316 = vcmp.eq.s32.totalorder %v1314, %v685
        %s1317 = sadd.s32 %s670, 112
        %v1318 = vstv %s1317
        %vm1319 = vcmp.gt.s32.totalorder %v668, %v1318
        %vm1320 = vcmp.gt.s32.totalorder %v669, %v1318
        %v1321 = vsub.f32 1.25, %v636
        %v1322 = vsub.f32 1.25, %v638
        %v1323 = vmax.f32 %v1321, 0.0
        %v1324 = vmax.f32 %v1322, 0.0
        %v1325 = vadd.f32 %v636, 0.25
        %v1326 = vadd.f32 %v638, 0.25
        %v1327 = vmax.f32 %v1325, 0.0
        %v1328 = vmax.f32 %v1326, 0.0
        %v1329 = vmul.f32 %v1323, -64.0
        %v1330 = vmul.f32 %v1324, -64.0
        %v1331 = vsub.f32 %v636, 0.75
        %v1332 = vsub.f32 %v638, 0.75
        %v1333 = vmul.f32 %v1329, %v1331
        %v1334 = vmul.f32 %v1330, %v1332
        %v1335 = vmul.f32 %v1327, 64.0
        %v1336 = vmul.f32 %v1328, 64.0
        %v1337 = vsub.f32 %v636, 0.25
        %v1338 = vsub.f32 %v638, 0.25
        %v1339 = vmul.f32 %v1335, %v1337
        %v1340 = vmul.f32 %v1336, %v1338
        %v1341 = vsel %vm1315, %v1333, %v1339
        %v1342 = vsel %vm1316, %v1334, %v1340
        %vm1343 = vmand %vm1319, %vm1315
        %vm1344 = vmand %vm1320, %vm1316
        %v1345 = vsel %vm1343, %v1341, -inf
        %v1346 = vsel %vm1344, %v1342, -inf
        %v1347 = vmax.f32 %v1302, %v1345
        %v1348 = vmax.f32 %v1303, %v1346
        %vm1349 = vmxor %vm1315, 1
        %vm1350 = vmxor %vm1316, 1
        %vm1351 = vmand %vm1319, %vm1349
        %vm1352 = vmand %vm1320, %vm1350
        %v1353 = vsel %vm1351, %v1341, -inf
        %v1354 = vsel %vm1352, %v1342, -inf
        %v1355 = vmax.f32 %v1310, %v1353
        %v1356 = vmax.f32 %v1311, %v1354
        %1357 = vset.pattern.permute.xlu0 0
        %1358 = vperm.xlu0 %1357, %v661
        %v1359 = vpop.permute.xlu0 %1358
        %vm1360 = vcmp.eq.s32.totalorder %v1359, %v681
        %vm1361 = vcmp.eq.s32.totalorder %v1359, %v685
        %s1362 = sadd.s32 %s670, 120
        %v1363 = vstv %s1362
        %vm1364 = vcmp.gt.s32.totalorder %v668, %v1363
        %vm1365 = vcmp.gt.s32.totalorder %v669, %v1363
        %v1366 = vsub.f32 1.25, %v642
        %v1367 = vsub.f32 1.25, %v644
        %v1368 = vmax.f32 %v1366, 0.0
        %v1369 = vmax.f32 %v1367, 0.0
        %v1370 = vadd.f32 %v642, 0.25
        %v1371 = vadd.f32 %v644, 0.25
        %v1372 = vmax.f32 %v1370, 0.0
        %v1373 = vmax.f32 %v1371, 0.0
        %v1374 = vmul.f32 %v1368, -64.0
        %v1375 = vmul.f32 %v1369, -64.0
        %v1376 = vsub.f32 %v642, 0.75
        %v1377 = vsub.f32 %v644, 0.75
        %v1378 = vmul.f32 %v1374, %v1376
        %v1379 = vmul.f32 %v1375, %v1377
        %v1380 = vmul.f32 %v1372, 64.0
        %v1381 = vmul.f32 %v1373, 64.0
        %v1382 = vsub.f32 %v642, 0.25
        %v1383 = vsub.f32 %v644, 0.25
        %v1384 = vmul.f32 %v1380, %v1382
        %v1385 = vmul.f32 %v1381, %v1383
        %v1386 = vsel %vm1360, %v1378, %v1384
        %v1387 = vsel %vm1361, %v1379, %v1385
        %vm1388 = vmand %vm1364, %vm1360
        %vm1389 = vmand %vm1365, %vm1361
        %v1390 = vsel %vm1388, %v1386, -inf
        %v1391 = vsel %vm1389, %v1387, -inf
        %v1392 = vmax.f32 %v1347, %v1390
        %v1393 = vmax.f32 %v1348, %v1391
        %vm1394 = vmxor %vm1360, 1
        %vm1395 = vmxor %vm1361, 1
        %vm1396 = vmand %vm1364, %vm1394
        %vm1397 = vmand %vm1365, %vm1395
        %v1398 = vsel %vm1396, %v1386, -inf
        %v1399 = vsel %vm1397, %v1387, -inf
        %v1400 = vmax.f32 %v1355, %v1398
        %v1401 = vmax.f32 %v1356, %v1399
        %vm1402 = vcmp.gt.f32.partialorder %v1392, -inf
        %vm1403 = vcmp.gt.f32.partialorder %v1393, -inf
        %v1404 = vsel %vm1402, %v1392, 0.0
        %v1405 = vsel %vm1403, %v1393, 0.0
        %vm1406 = vcmp.gt.f32.partialorder %v1400, -inf
        %vm1407 = vcmp.gt.f32.partialorder %v1401, -inf
        %v1408 = vsel %vm1406, %v1400, 0.0
        %v1409 = vsel %vm1407, %v1401, 0.0
        %v1410 = vld [vmem:[#allocation3] sm:$0xff]
        %v1411 = vld [vmem:[#allocation3 + $0x8] sm:$0xff]
        %v1412 = vsub.f32 %v671, %v1404
        %v1413 = vsub.f32 %v672, %v1405
        %v1414 = vmul.f32 %v1412, 1.442695
        %v1415 = vpow.pop %v1414
        %v1416 = vmul.f32 %v1413, 1.442695
        %v1417 = vpow.pop %v1416
        %v1418 = vmul.f32 %v1410, %v1415
        %v1419 = vmul.f32 %v1411, %v1417
        %v1420 = vld [vmem:[#allocation5] sm:$0xff]
        %v1421 = vld [vmem:[#allocation5 + $0x8] sm:$0xff]
        %v1422 = vsub.f32 %v673, %v1408
        %v1423 = vsub.f32 %v674, %v1409
        %v1424 = vmul.f32 %v1422, 1.442695
        %v1425 = vpow.pop %v1424
        %v1426 = vmul.f32 %v1423, 1.442695
        %v1427 = vpow.pop %v1426
        %v1428 = vmul.f32 %v1420, %v1425
        %v1429 = vmul.f32 %v1421, %v1427
        %v1430 = vsel %vm686, %v1404, %v1408
        %v1431 = vsel %vm687, %v1405, %v1409
        %v1432 = vsub.f32 %v711, %v1430
        %v1433 = vsub.f32 %v712, %v1431
        %v1434 = vmul.f32 %v1432, 1.442695
        %v1435 = vpow.pop %v1434
        %v1436 = vmul.f32 %v1433, 1.442695
        %v1437 = vpow.pop %v1436
        %v1438 = vsel %vm689, %v1435, 0.0
        %v1439 = vsel %vm690, %v1437, 0.0
        %v1440 = vsel %vm686, %v1438, 0.0
        %v1441 = vsel %vm687, %v1439, 0.0
        %v1442 = vadd.f32 %v1418, %v1440
        %v1443 = vadd.f32 %v1419, %v1441
        %v1444 = vsub.f32 %v1438, %v1440
        %v1445 = vsub.f32 %v1439, %v1441
        %v1446 = vadd.f32 %v1428, %v1444
        %v1447 = vadd.f32 %v1429, %v1445
        %v1448 = vsel %vm730, %v1404, %v1408
        %v1449 = vsel %vm731, %v1405, %v1409
        %v1450 = vsub.f32 %v756, %v1448
        %v1451 = vsub.f32 %v757, %v1449
        %v1452 = vmul.f32 %v1450, 1.442695
        %v1453 = vpow.pop %v1452
        %v1454 = vmul.f32 %v1451, 1.442695
        %v1455 = vpow.pop %v1454
        %v1456 = vsel %vm734, %v1453, 0.0
        %v1457 = vsel %vm735, %v1455, 0.0
        %v1458 = vsel %vm730, %v1456, 0.0
        %v1459 = vsel %vm731, %v1457, 0.0
        %v1460 = vadd.f32 %v1442, %v1458
        %v1461 = vadd.f32 %v1443, %v1459
        %v1462 = vsub.f32 %v1456, %v1458
        %v1463 = vsub.f32 %v1457, %v1459
        %v1464 = vadd.f32 %v1446, %v1462
        %v1465 = vadd.f32 %v1447, %v1463
        %v1466 = vsel %vm775, %v1404, %v1408
        %v1467 = vsel %vm776, %v1405, %v1409
        %v1468 = vsub.f32 %v801, %v1466
        %v1469 = vsub.f32 %v802, %v1467
        %v1470 = vmul.f32 %v1468, 1.442695
        %v1471 = vpow.pop %v1470
        %v1472 = vmul.f32 %v1469, 1.442695
        %v1473 = vpow.pop %v1472
        %v1474 = vsel %vm779, %v1471, 0.0
        %v1475 = vsel %vm780, %v1473, 0.0
        %v1476 = vsel %vm775, %v1474, 0.0
        %v1477 = vsel %vm776, %v1475, 0.0
        %v1478 = vadd.f32 %v1460, %v1476
        %v1479 = vadd.f32 %v1461, %v1477
        %v1480 = vsub.f32 %v1474, %v1476
        %v1481 = vsub.f32 %v1475, %v1477
        %v1482 = vadd.f32 %v1464, %v1480
        %v1483 = vadd.f32 %v1465, %v1481
        %v1484 = vsel %vm820, %v1404, %v1408
        %v1485 = vsel %vm821, %v1405, %v1409
        %v1486 = vsub.f32 %v846, %v1484
        %v1487 = vsub.f32 %v847, %v1485
        %v1488 = vmul.f32 %v1486, 1.442695
        %v1489 = vpow.pop %v1488
        %v1490 = vmul.f32 %v1487, 1.442695
        %v1491 = vpow.pop %v1490
        %v1492 = vsel %vm824, %v1489, 0.0
        %v1493 = vsel %vm825, %v1491, 0.0
        %v1494 = vsel %vm820, %v1492, 0.0
        %v1495 = vsel %vm821, %v1493, 0.0
        %v1496 = vadd.f32 %v1478, %v1494
        %v1497 = vadd.f32 %v1479, %v1495
        %v1498 = vsub.f32 %v1492, %v1494
        %v1499 = vsub.f32 %v1493, %v1495
        %v1500 = vadd.f32 %v1482, %v1498
        %v1501 = vadd.f32 %v1483, %v1499
        %v1502 = vsel %vm865, %v1404, %v1408
        %v1503 = vsel %vm866, %v1405, %v1409
        %v1504 = vsub.f32 %v891, %v1502
        %v1505 = vsub.f32 %v892, %v1503
        %v1506 = vmul.f32 %v1504, 1.442695
        %v1507 = vpow.pop %v1506
        %v1508 = vmul.f32 %v1505, 1.442695
        %v1509 = vpow.pop %v1508
        %v1510 = vsel %vm869, %v1507, 0.0
        %v1511 = vsel %vm870, %v1509, 0.0
        %v1512 = vsel %vm865, %v1510, 0.0
        %v1513 = vsel %vm866, %v1511, 0.0
        %v1514 = vadd.f32 %v1496, %v1512
        %v1515 = vadd.f32 %v1497, %v1513
        %v1516 = vsub.f32 %v1510, %v1512
        %v1517 = vsub.f32 %v1511, %v1513
        %v1518 = vadd.f32 %v1500, %v1516
        %v1519 = vadd.f32 %v1501, %v1517
        %v1520 = vsel %vm910, %v1404, %v1408
        %v1521 = vsel %vm911, %v1405, %v1409
        %v1522 = vsub.f32 %v936, %v1520
        %v1523 = vsub.f32 %v937, %v1521
        %v1524 = vmul.f32 %v1522, 1.442695
        %v1525 = vpow.pop %v1524
        %v1526 = vmul.f32 %v1523, 1.442695
        %v1527 = vpow.pop %v1526
        %v1528 = vsel %vm914, %v1525, 0.0
        %v1529 = vsel %vm915, %v1527, 0.0
        %v1530 = vsel %vm910, %v1528, 0.0
        %v1531 = vsel %vm911, %v1529, 0.0
        %v1532 = vadd.f32 %v1514, %v1530
        %v1533 = vadd.f32 %v1515, %v1531
        %v1534 = vsub.f32 %v1528, %v1530
        %v1535 = vsub.f32 %v1529, %v1531
        %v1536 = vadd.f32 %v1518, %v1534
        %v1537 = vadd.f32 %v1519, %v1535
        %v1538 = vsel %vm955, %v1404, %v1408
        %v1539 = vsel %vm956, %v1405, %v1409
        %v1540 = vsub.f32 %v981, %v1538
        %v1541 = vsub.f32 %v982, %v1539
        %v1542 = vmul.f32 %v1540, 1.442695
        %v1543 = vpow.pop %v1542
        %v1544 = vmul.f32 %v1541, 1.442695
        %v1545 = vpow.pop %v1544
        %v1546 = vsel %vm959, %v1543, 0.0
        %v1547 = vsel %vm960, %v1545, 0.0
        %v1548 = vsel %vm955, %v1546, 0.0
        %v1549 = vsel %vm956, %v1547, 0.0
        %v1550 = vadd.f32 %v1532, %v1548
        %v1551 = vadd.f32 %v1533, %v1549
        %v1552 = vsub.f32 %v1546, %v1548
        %v1553 = vsub.f32 %v1547, %v1549
        %v1554 = vadd.f32 %v1536, %v1552
        %v1555 = vadd.f32 %v1537, %v1553
        %v1556 = vsel %vm1000, %v1404, %v1408
        %v1557 = vsel %vm1001, %v1405, %v1409
        %v1558 = vsub.f32 %v1026, %v1556
        %v1559 = vsub.f32 %v1027, %v1557
        %v1560 = vmul.f32 %v1558, 1.442695
        %v1561 = vpow.pop %v1560
        %v1562 = vmul.f32 %v1559, 1.442695
        %v1563 = vpow.pop %v1562
        %v1564 = vsel %vm1004, %v1561, 0.0
        %v1565 = vsel %vm1005, %v1563, 0.0
        %v1566 = vsel %vm1000, %v1564, 0.0
        %v1567 = vsel %vm1001, %v1565, 0.0
        %v1568 = vadd.f32 %v1550, %v1566
        %v1569 = vadd.f32 %v1551, %v1567
        %v1570 = vsub.f32 %v1564, %v1566
        %v1571 = vsub.f32 %v1565, %v1567
        %v1572 = vadd.f32 %v1554, %v1570
        %v1573 = vadd.f32 %v1555, %v1571
        %v1574 = vsel %vm1045, %v1404, %v1408
        %v1575 = vsel %vm1046, %v1405, %v1409
        %v1576 = vsub.f32 %v1071, %v1574
        %v1577 = vsub.f32 %v1072, %v1575
        %v1578 = vmul.f32 %v1576, 1.442695
        %v1579 = vpow.pop %v1578
        %v1580 = vmul.f32 %v1577, 1.442695
        %v1581 = vpow.pop %v1580
        %v1582 = vsel %vm1049, %v1579, 0.0
        %v1583 = vsel %vm1050, %v1581, 0.0
        %v1584 = vsel %vm1045, %v1582, 0.0
        %v1585 = vsel %vm1046, %v1583, 0.0
        %v1586 = vadd.f32 %v1568, %v1584
        %v1587 = vadd.f32 %v1569, %v1585
        %v1588 = vsub.f32 %v1582, %v1584
        %v1589 = vsub.f32 %v1583, %v1585
        %v1590 = vadd.f32 %v1572, %v1588
        %v1591 = vadd.f32 %v1573, %v1589
        %v1592 = vsel %vm1090, %v1404, %v1408
        %v1593 = vsel %vm1091, %v1405, %v1409
        %v1594 = vsub.f32 %v1116, %v1592
        %v1595 = vsub.f32 %v1117, %v1593
        %v1596 = vmul.f32 %v1594, 1.442695
        %v1597 = vpow.pop %v1596
        %v1598 = vmul.f32 %v1595, 1.442695
        %v1599 = vpow.pop %v1598
        %v1600 = vsel %vm1094, %v1597, 0.0
        %v1601 = vsel %vm1095, %v1599, 0.0
        %v1602 = vsel %vm1090, %v1600, 0.0
        %v1603 = vsel %vm1091, %v1601, 0.0
        %v1604 = vadd.f32 %v1586, %v1602
        %v1605 = vadd.f32 %v1587, %v1603
        %v1606 = vsub.f32 %v1600, %v1602
        %v1607 = vsub.f32 %v1601, %v1603
        %v1608 = vadd.f32 %v1590, %v1606
        %v1609 = vadd.f32 %v1591, %v1607
        %v1610 = vsel %vm1135, %v1404, %v1408
        %v1611 = vsel %vm1136, %v1405, %v1409
        %v1612 = vsub.f32 %v1161, %v1610
        %v1613 = vsub.f32 %v1162, %v1611
        %v1614 = vmul.f32 %v1612, 1.442695
        %v1615 = vpow.pop %v1614
        %v1616 = vmul.f32 %v1613, 1.442695
        %v1617 = vpow.pop %v1616
        %v1618 = vsel %vm1139, %v1615, 0.0
        %v1619 = vsel %vm1140, %v1617, 0.0
        %v1620 = vsel %vm1135, %v1618, 0.0
        %v1621 = vsel %vm1136, %v1619, 0.0
        %v1622 = vadd.f32 %v1604, %v1620
        %v1623 = vadd.f32 %v1605, %v1621
        %v1624 = vsub.f32 %v1618, %v1620
        %v1625 = vsub.f32 %v1619, %v1621
        %v1626 = vadd.f32 %v1608, %v1624
        %v1627 = vadd.f32 %v1609, %v1625
        %v1628 = vsel %vm1180, %v1404, %v1408
        %v1629 = vsel %vm1181, %v1405, %v1409
        %v1630 = vsub.f32 %v1206, %v1628
        %v1631 = vsub.f32 %v1207, %v1629
        %v1632 = vmul.f32 %v1630, 1.442695
        %v1633 = vpow.pop %v1632
        %v1634 = vmul.f32 %v1631, 1.442695
        %v1635 = vpow.pop %v1634
        %v1636 = vsel %vm1184, %v1633, 0.0
        %v1637 = vsel %vm1185, %v1635, 0.0
        %v1638 = vsel %vm1180, %v1636, 0.0
        %v1639 = vsel %vm1181, %v1637, 0.0
        %v1640 = vadd.f32 %v1622, %v1638
        %v1641 = vadd.f32 %v1623, %v1639
        %v1642 = vsub.f32 %v1636, %v1638
        %v1643 = vsub.f32 %v1637, %v1639
        %v1644 = vadd.f32 %v1626, %v1642
        %v1645 = vadd.f32 %v1627, %v1643
        %v1646 = vsel %vm1225, %v1404, %v1408
        %v1647 = vsel %vm1226, %v1405, %v1409
        %v1648 = vsub.f32 %v1251, %v1646
        %v1649 = vsub.f32 %v1252, %v1647
        %v1650 = vmul.f32 %v1648, 1.442695
        %v1651 = vpow.pop %v1650
        %v1652 = vmul.f32 %v1649, 1.442695
        %v1653 = vpow.pop %v1652
        %v1654 = vsel %vm1229, %v1651, 0.0
        %v1655 = vsel %vm1230, %v1653, 0.0
        %v1656 = vsel %vm1225, %v1654, 0.0
        %v1657 = vsel %vm1226, %v1655, 0.0
        %v1658 = vadd.f32 %v1640, %v1656
        %v1659 = vadd.f32 %v1641, %v1657
        %v1660 = vsub.f32 %v1654, %v1656
        %v1661 = vsub.f32 %v1655, %v1657
        %v1662 = vadd.f32 %v1644, %v1660
        %v1663 = vadd.f32 %v1645, %v1661
        %v1664 = vsel %vm1270, %v1404, %v1408
        %v1665 = vsel %vm1271, %v1405, %v1409
        %v1666 = vsub.f32 %v1296, %v1664
        %v1667 = vsub.f32 %v1297, %v1665
        %v1668 = vmul.f32 %v1666, 1.442695
        %v1669 = vpow.pop %v1668
        %v1670 = vmul.f32 %v1667, 1.442695
        %v1671 = vpow.pop %v1670
        %v1672 = vsel %vm1274, %v1669, 0.0
        %v1673 = vsel %vm1275, %v1671, 0.0
        %v1674 = vsel %vm1270, %v1672, 0.0
        %v1675 = vsel %vm1271, %v1673, 0.0
        %v1676 = vadd.f32 %v1658, %v1674
        %v1677 = vadd.f32 %v1659, %v1675
        %v1678 = vsub.f32 %v1672, %v1674
        %v1679 = vsub.f32 %v1673, %v1675
        %v1680 = vadd.f32 %v1662, %v1678
        %v1681 = vadd.f32 %v1663, %v1679
        %v1682 = vsel %vm1315, %v1404, %v1408
        %v1683 = vsel %vm1316, %v1405, %v1409
        %v1684 = vsub.f32 %v1341, %v1682
        %v1685 = vsub.f32 %v1342, %v1683
        %v1686 = vmul.f32 %v1684, 1.442695
        %v1687 = vpow.pop %v1686
        %v1688 = vmul.f32 %v1685, 1.442695
        %v1689 = vpow.pop %v1688
        %v1690 = vsel %vm1319, %v1687, 0.0
        %v1691 = vsel %vm1320, %v1689, 0.0
        %v1692 = vsel %vm1315, %v1690, 0.0
        %v1693 = vsel %vm1316, %v1691, 0.0
        %v1694 = vadd.f32 %v1676, %v1692
        %v1695 = vadd.f32 %v1677, %v1693
        %v1696 = vsub.f32 %v1690, %v1692
        %v1697 = vsub.f32 %v1691, %v1693
        %v1698 = vadd.f32 %v1680, %v1696
        %v1699 = vadd.f32 %v1681, %v1697
        %v1700 = vsel %vm1360, %v1404, %v1408
        %v1701 = vsel %vm1361, %v1405, %v1409
        %v1702 = vsub.f32 %v1386, %v1700
        %v1703 = vsub.f32 %v1387, %v1701
        %v1704 = vmul.f32 %v1702, 1.442695
        %v1705 = vpow.pop %v1704
        %v1706 = vmul.f32 %v1703, 1.442695
        %v1707 = vpow.pop %v1706
        %v1708 = vsel %vm1364, %v1705, 0.0
        %v1709 = vsel %vm1365, %v1707, 0.0
        %v1710 = vsel %vm1360, %v1708, 0.0
        %v1711 = vsel %vm1361, %v1709, 0.0
        %v1712 = vadd.f32 %v1694, %v1710
        %v1713 = vadd.f32 %v1695, %v1711
        %v1714 = vsub.f32 %v1708, %v1710
        %v1715 = vsub.f32 %v1709, %v1711
        %v1716 = vadd.f32 %v1698, %v1714
        %v1717 = vadd.f32 %v1699, %v1715
        %1718 = vst [vmem:[#allocation3] sm:$0xff] %v1712
        %1719 = vst [vmem:[#allocation3 + $0x8] sm:$0xff] %v1713
        %1720 = vst [vmem:[#allocation5] sm:$0xff] %v1716
        %1721 = vst [vmem:[#allocation5 + $0x8] sm:$0xff] %v1717
        %1722 = vst [vmem:[#allocation2] sm:$0xff] %v1392
        %1723 = vst [vmem:[#allocation2 + $0x8] sm:$0xff] %v1393
        %1724 = vst [vmem:[#allocation4] sm:$0xff] %v1400
        %1725 = vst [vmem:[#allocation4 + $0x8] sm:$0xff] %v1401
      $region44: #{circle_loss_pallas.1} parent=35 // pred_fallthru
        _
      // Predicated region
      $region45: #{circle_loss_pallas.1} parent=35 // pred_check
        %p1726 = pneg %p393
      $region46: #{circle_loss_pallas.1} parent=35 // pred_check_branch
        %1728 = sbr.rel (%p1726) target = $region48
      $region47: #{circle_loss_pallas.1} parent=35 // pred_region
        %v1729 = vld [vmem:[#allocation2] sm:$0xff]
        %v1730 = vld [vmem:[#allocation2 + $0x8] sm:$0xff]
        %1731 = vst [vmem:[%s377] sm:$0xff] %v1729
        %1732 = vst [vmem:[%s377 + $0x8] sm:$0xff] %v1730
        %v1733 = vld [vmem:[#allocation3] sm:$0xff]
        %v1734 = vld [vmem:[#allocation3 + $0x8] sm:$0xff]
        %1735 = vst [vmem:[%s382] sm:$0xff] %v1733
        %1736 = vst [vmem:[%s382 + $0x8] sm:$0xff] %v1734
        %v1737 = vld [vmem:[#allocation4] sm:$0xff]
        %v1738 = vld [vmem:[#allocation4 + $0x8] sm:$0xff]
        %1739 = vst [vmem:[%s387] sm:$0xff] %v1737
        %1740 = vst [vmem:[%s387 + $0x8] sm:$0xff] %v1738
        %v1741 = vld [vmem:[#allocation5] sm:$0xff]
        %v1742 = vld [vmem:[#allocation5 + $0x8] sm:$0xff]
        %1743 = vst [vmem:[%s392] sm:$0xff] %v1741
        %1744 = vst [vmem:[%s392 + $0x8] sm:$0xff] %v1742
      $region48: #{circle_loss_pallas.1} parent=35 // pred_fallthru
        _
      %p1745 = scmp.lt.s32.totalorder %s23, 1
      %s1746 = scalar_select %p1745, %s23, 1
      %s1747 = smul.addr %s1746, 2
      %s1748 = smul.addr %s1747, 8
      %s1749 = scalar_lea.vmem %s4, %s1748
      %p1750 = scmp.lt.s32.totalorder %s23, 1
      %s1751 = scalar_select %p1750, %s23, 1
      %s1752 = smul.addr %s1751, 2
      %s1753 = smul.addr %s1752, 8
      %s1754 = scalar_lea.vmem %s5, %s1753
      %p1755 = scmp.lt.s32.totalorder %s23, 1
      %s1756 = scalar_select %p1755, %s23, 1
      %s1757 = smul.addr %s1756, 2
      %s1758 = smul.addr %s1757, 8
      %s1759 = scalar_lea.vmem %s6, %s1758
      %p1760 = scmp.lt.s32.totalorder %s23, 1
      %s1761 = scalar_select %p1760, %s23, 1
      %s1762 = smul.addr %s1761, 2
      %s1763 = smul.addr %s1762, 8
      %s1764 = scalar_lea.vmem %s7, %s1763
      // Predicated region
      $region49: #{circle_loss_pallas.1} parent=35 // pred_check
        %p1765 = pneg %p153
      $region50: #{circle_loss_pallas.1} parent=35 // pred_check_branch
        %1767 = sbr.rel (%p1765) target = $region52
      $region51: #{circle_loss_pallas.1} parent=35 // pred_region
        _
      $region52: #{circle_loss_pallas.1} parent=35 // pred_fallthru
        _
      // Predicated region
      $region53: #{circle_loss_pallas.1} parent=35 // pred_check
        %p1768 = pneg %p179
      $region54: #{circle_loss_pallas.1} parent=35 // pred_check_branch
        %1770 = sbr.rel (%p1768) target = $region56
      $region55: #{circle_loss_pallas.1} parent=35 // pred_region
        _
      $region56: #{circle_loss_pallas.1} parent=35 // pred_fallthru
        _
      // Predicated region
      $region57: #{circle_loss_pallas.1} parent=35 // pred_check
        %p1771 = pneg %p205
      $region58: #{circle_loss_pallas.1} parent=35 // pred_check_branch
        %1773 = sbr.rel (%p1771) target = $region60
      $region59: #{circle_loss_pallas.1} parent=35 // pred_region
        _
      $region60: #{circle_loss_pallas.1} parent=35 // pred_fallthru
        _
      // Predicated region
      $region61: #{circle_loss_pallas.1} parent=35 // pred_check
        %p1774 = pneg %p231
      $region62: #{circle_loss_pallas.1} parent=35 // pred_check_branch
        %1776 = sbr.rel (%p1774) target = $region64
      $region63: #{circle_loss_pallas.1} parent=35 // pred_region
        _
      $region64: #{circle_loss_pallas.1} parent=35 // pred_fallthru
        _
    $region36: #{circle_loss_pallas.1} parent=5 // pred_fallthru
      _
    %p1777 = scmp.le.s32.totalorder 2, %s14
    // Predicated region
    $region65: #{circle_loss_pallas.1} parent=5 // pred_check
      %p1778 = pneg %p1777
    $region66: #{circle_loss_pallas.1} parent=5 // pred_check_branch
      %1780 = sbr.rel (%p1778) target = $region68
    $region67: #{circle_loss_pallas.1} parent=5 // pred_region
      %s1781 = ssub.s32 %s14, 2
      // Predicated region
      $region69: #{circle_loss_pallas.1} parent=67 // pred_check
        %p1782 = pneg %p159
      $region70: #{circle_loss_pallas.1} parent=67 // pred_check_branch
        %1784 = sbr.rel (%p1782) target = $region72
      $region71: #{circle_loss_pallas.1} parent=67 // pred_region
        %p1785 = scmp.lt.s32.totalorder %s25, 1
        %s1786 = scalar_select %p1785, %s25, 1
        %s1787 = smul.addr %s1786, 2
        %s1788 = smul.addr %s1787, 8
        %s1789 = scalar_lea.vmem %s4, %s1788
      $region72: #{circle_loss_pallas.1} parent=67 // pred_fallthru
        _
      // Predicated region
      $region73: #{circle_loss_pallas.1} parent=67 // pred_check
        %p1790 = pneg %p185
      $region74: #{circle_loss_pallas.1} parent=67 // pred_check_branch
        %1792 = sbr.rel (%p1790) target = $region76
      $region75: #{circle_loss_pallas.1} parent=67 // pred_region
        %p1793 = scmp.lt.s32.totalorder %s25, 1
        %s1794 = scalar_select %p1793, %s25, 1
        %s1795 = smul.addr %s1794, 2
        %s1796 = smul.addr %s1795, 8
        %s1797 = scalar_lea.vmem %s5, %s1796
      $region76: #{circle_loss_pallas.1} parent=67 // pred_fallthru
        _
      // Predicated region
      $region77: #{circle_loss_pallas.1} parent=67 // pred_check
        %p1798 = pneg %p211
      $region78: #{circle_loss_pallas.1} parent=67 // pred_check_branch
        %1800 = sbr.rel (%p1798) target = $region80
      $region79: #{circle_loss_pallas.1} parent=67 // pred_region
        %p1801 = scmp.lt.s32.totalorder %s25, 1
        %s1802 = scalar_select %p1801, %s25, 1
        %s1803 = smul.addr %s1802, 2
        %s1804 = smul.addr %s1803, 8
        %s1805 = scalar_lea.vmem %s6, %s1804
      $region80: #{circle_loss_pallas.1} parent=67 // pred_fallthru
        _
      // Predicated region
      $region81: #{circle_loss_pallas.1} parent=67 // pred_check
        %p1806 = pneg %p237
      $region82: #{circle_loss_pallas.1} parent=67 // pred_check_branch
        %1808 = sbr.rel (%p1806) target = $region84
      $region83: #{circle_loss_pallas.1} parent=67 // pred_region
        %p1809 = scmp.lt.s32.totalorder %s25, 1
        %s1810 = scalar_select %p1809, %s25, 1
        %s1811 = smul.addr %s1810, 2
        %s1812 = smul.addr %s1811, 8
        %s1813 = scalar_lea.vmem %s7, %s1812
      $region84: #{circle_loss_pallas.1} parent=67 // pred_fallthru
        _
    $region68: #{circle_loss_pallas.1} parent=5 // pred_fallthru
      _
  $region6: #{circle_loss_pallas.1} parent=0 // loop_footer
    %s18 = sadd.s32 1, %s14
  $region7: #{circle_loss_pallas.1} parent=0 // loop_footer_branch
    %13 = sbr.rel target = $region3
  $region8: #{circle_loss_pallas.1} parent=0 // loop_exit
    _

</llo_original>
